<compile_context>
chip_gen: v5e
topology: v5e:2x2
jax: 0.10.0
libtpu: 0.0.40
codegen_flags: <defaults>
</compile_context>

<pallas_src>
import math

import jax
import jax.numpy as jnp
from jax.experimental import pallas as pl
from jax.experimental.pallas import tpu as pltpu

# ------------------- model config (small, consistent with the module) -------------------
B = 2                     # batch
C = 128                   # c1 == c2 (embed dim) -> TransformerBlock.conv is None
H = 8
W = 8
S = H * W                 # 64 tokens per image
NUM_HEADS = 4
HEAD_DIM = C // NUM_HEADS  # 32
NUM_LAYERS = 2
M = B * S                 # all tokens folded into one MXU M dimension (128)

# TODO(synk): the optional Conv(c1, c2) pre-projection only exists when c1 != c2;
#             this example uses c1 == c2 so the PyTorch branch is also a no-op.


# ------------------------------- Pallas kernel ------------------------------------------
def transformer_block_kernel(x_ref, wl_ref, bl_ref, wqkv_ref, bqkv_ref,
                             wo_ref, bo_ref, w1_ref, w2_ref, o_ref):
    bf16 = jnp.bfloat16
    x = x_ref[...]                                        # (M, C) f32 tokens

    # p = x + Linear(x)   (learnable position embedding, bias=True)
    p = x + (jnp.dot(x.astype(bf16), wl_ref[...],
                     preferred_element_type=jnp.float32) + bl_ref[...])

    for layer in range(NUM_LAYERS):
        wqkv = wqkv_ref[layer]        # (C, 3C) bf16   (q/k/v Linear + in_proj fused,
        bqkv = bqkv_ref[layer]        # (1, 3C) f32     1/sqrt(dh) folded into Q part)
        wo = wo_ref[layer]            # (C, C)  bf16   (out_proj, pre-transposed)
        bo = bo_ref[layer]            # (1, C)  f32
        w1 = w1_ref[layer]            # (C, C)  bf16   (fc1, no bias)
        w2 = w2_ref[layer]            # (C, C)  bf16   (fc2, no bias)

        # ---- fused QKV projection: one lane-dense (M, C) x (C, 3C) matmul ----
        qkv = jnp.dot(p.astype(bf16), wqkv,
                      preferred_element_type=jnp.float32) + bqkv     # (M, 3C) f32
        q = qkv[:, 0 * C:1 * C].astype(bf16)     # aligned 128-lane slices
        k = qkv[:, 1 * C:2 * C].astype(bf16)
        v = qkv[:, 2 * C:3 * C].astype(bf16)

        # ---- attention scores for every (batch, head), stacked along sublanes ----
        dn = (((1,), (1,)), ((), ()))            # contract last dims: q @ k^T
        score_blocks = []
        for b in range(B):
            r0 = b * S
            for h in range(NUM_HEADS):
                c0 = h * HEAD_DIM
                score_blocks.append(jax.lax.dot_general(
                    q[r0:r0 + S, c0:c0 + HEAD_DIM],
                    k[r0:r0 + S, c0:c0 + HEAD_DIM],
                    dn, preferred_element_type=jnp.float32))          # (S, S)
        scores = jnp.concatenate(score_blocks, axis=0)                # (B*NH*S, S)

        # ---- single softmax pass over all stacked tiles ----
        scores = scores - jnp.max(scores, axis=-1, keepdims=True)
        e = jnp.exp(scores)
        probs = (e * pl.reciprocal(jnp.sum(e, axis=-1, keepdims=True),
                                   approx=True)).astype(bf16)         # (B*NH*S, S)

        # ---- context + output projection (W_o folded per head, no lane concat) ----
        attn_rows = []
        for b in range(B):
            r0 = b * S
            acc = None
            for h in range(NUM_HEADS):
                c0 = h * HEAD_DIM
                pr0 = (b * NUM_HEADS + h) * S
                ctx = jnp.dot(probs[pr0:pr0 + S, :],
                              v[r0:r0 + S, c0:c0 + HEAD_DIM],
                              preferred_element_type=jnp.float32)      # (S, dh)
                contrib = jnp.dot(ctx.astype(bf16), wo[c0:c0 + HEAD_DIM, :],
                                  preferred_element_type=jnp.float32)  # (S, C)
                acc = contrib if acc is None else acc + contrib
            attn_rows.append(acc)
        attn = jnp.concatenate(attn_rows, axis=0) + bo                 # (M, C)

        p = p + attn                                                   # residual 1

        # ---- FFN: fc2(fc1(p)) + p  (no bias, no activation in this module) ----
        f1 = jnp.dot(p.astype(bf16), w1, preferred_element_type=jnp.float32)
        f2 = jnp.dot(f1.astype(bf16), w2, preferred_element_type=jnp.float32)
        p = p + f2                                                     # residual 2

    o_ref[...] = p


# ------------------------------- wrapper -------------------------------------------------
def transformer_block_forward(x, kparams):
    """x: (B, C, H, W) float32 -> (B, C, H, W) float32."""
    b, c, hh, ww = x.shape
    s = hh * ww
    # flatten(2).permute(2,0,1) token order, regrouped as (B*S, C) with batches contiguous
    p2d = x.reshape(b, c, s).transpose(0, 2, 1).reshape(b * s, c).astype(jnp.float32)
    (wl_t, bl, wqkv, bqkv, wo, bo, w1, w2) = kparams

    out2d = pl.pallas_call(
        transformer_block_kernel,
        out_shape=jax.ShapeDtypeStruct((b * s, c), jnp.float32),
        in_specs=[pl.BlockSpec(memory_space=pltpu.MemorySpace.VMEM) for _ in range(9)],
        out_specs=pl.BlockSpec(memory_space=pltpu.MemorySpace.VMEM),
    )(p2d, wl_t, bl, wqkv, bqkv, wo, bo, w1, w2)

    return out2d.reshape(b, s, c).transpose(0, 2, 1).reshape(b, c, hh, ww)


# ------------------- parameter construction (PyTorch-layout) + fusion --------------------
def make_raw_params(key, std=0.03):
    n_per_layer = 9
    keys = jax.random.split(key, 2 + NUM_LAYERS * n_per_layer)
    wl = jax.random.normal(keys[0], (C, C), jnp.float32) * std      # self.linear weight
    bl = jax.random.normal(keys[1], (C,), jnp.float32) * std        # self.linear bias
    layers = []
    idx = 2
    for _ in range(NUM_LAYERS):
        k = keys[idx:idx + n_per_layer]
        idx += n_per_layer
        layers.append(dict(
            wq=jax.random.normal(k[0], (C, C), jnp.float32) * std,          # q (no bias)
            wk=jax.random.normal(k[1], (C, C), jnp.float32) * std,          # k (no bias)
            wv=jax.random.normal(k[2], (C, C), jnp.float32) * std,          # v (no bias)
            w_in=jax.random.normal(k[3], (3 * C, C), jnp.float32) * std,    # MHA in_proj_weight
            b_in=jax.random.normal(k[4], (3 * C,), jnp.float32) * std,      # MHA in_proj_bias
            wo=jax.random.normal(k[5], (C, C), jnp.float32) * std,          # MHA out_proj.weight
            bo=jax.random.normal(k[6], (C,), jnp.float32) * std,            # MHA out_proj.bias
            w1=jax.random.normal(k[7], (C, C), jnp.float32) * std,          # fc1 (no bias)
            w2=jax.random.normal(k[8], (C, C), jnp.float32) * std,          # fc2 (no bias)
        ))
    return dict(wl=wl, bl=bl, layers=layers)


def fuse_params(raw):
    """Fold q/k/v Linear into the MHA in_proj, fold 1/sqrt(dh) into Q, pre-transpose,
    cast weights to bf16 (biases stay f32), and stack per-layer tensors."""
    hp = jax.lax.Precision.HIGHEST
    scale = 1.0 / math.sqrt(HEAD_DIM)
    wl_t = raw["wl"].T.astype(jnp.bfloat16)
    bl = raw["bl"][None, :].astype(jnp.float32)
    wqkv_l, bqkv_l, wo_l, bo_l, w1_l, w2_l = [], [], [], [], [], []
    for lyr in raw["layers"]:
        w_in, b_in = lyr["w_in"], lyr["b_in"]
        wq_c = jnp.matmul(w_in[0 * C:1 * C], lyr["wq"], precision=hp) * scale
        wk_c = jnp.matmul(w_in[1 * C:2 * C], lyr["wk"], precision=hp)
        wv_c = jnp.matmul(w_in[2 * C:3 * C], lyr["wv"], precision=hp)
        bq = b_in[0 * C:1 * C] * scale
        bk = b_in[1 * C:2 * C]
        bv = b_in[2 * C:3 * C]
        wqkv_l.append(jnp.concatenate([wq_c.T, wk_c.T, wv_c.T], axis=1).astype(jnp.bfloat16))
        bqkv_l.append(jnp.concatenate([bq, bk, bv])[None, :].astype(jnp.float32))
        wo_l.append(lyr["wo"].T.astype(jnp.bfloat16))
        bo_l.append(lyr["bo"][None, :].astype(jnp.float32))
        w1_l.append(lyr["w1"].T.astype(jnp.bfloat16))
        w2_l.append(lyr["w2"].T.astype(jnp.bfloat16))
    return (wl_t, bl,
            jnp.stack(wqkv_l), jnp.stack(bqkv_l),
            jnp.stack(wo_l), jnp.stack(bo_l),
            jnp.stack(w1_l), jnp.stack(w2_l))


# ------------------------- pure-JAX f32 reference (PyTorch semantics) ---------------------
def transformer_block_reference(x, raw):
    hp = jax.lax.Precision.HIGHEST
    b, c, hh, ww = x.shape
    s = hh * ww
    p = x.reshape(b, c, s).transpose(0, 2, 1)                        # (B, S, C)
    p = p + (jnp.einsum("bsc,dc->bsd", p, raw["wl"], precision=hp) + raw["bl"])
    for lyr in raw["layers"]:
        q = jnp.einsum("bsc,dc->bsd", p, lyr["wq"], precision=hp)
        k = jnp.einsum("bsc,dc->bsd", p, lyr["wk"], precision=hp)
        v = jnp.einsum("bsc,dc->bsd", p, lyr["wv"], precision=hp)
        w_in, b_in = lyr["w_in"], lyr["b_in"]
        q = jnp.einsum("bsc,dc->bsd", q, w_in[0 * c:1 * c], precision=hp) + b_in[0 * c:1 * c]
        k = jnp.einsum("bsc,dc->bsd", k, w_in[1 * c:2 * c], precision=hp) + b_in[1 * c:2 * c]
        v = jnp.einsum("bsc,dc->bsd", v, w_in[2 * c:3 * c], precision=hp) + b_in[2 * c:3 * c]
        qh = q.reshape(b, s, NUM_HEADS, HEAD_DIM).transpose(0, 2, 1, 3) / math.sqrt(HEAD_DIM)
        kh = k.reshape(b, s, NUM_HEADS, HEAD_DIM).transpose(0, 2, 1, 3)
        vh = v.reshape(b, s, NUM_HEADS, HEAD_DIM).transpose(0, 2, 1, 3)
        sc = jnp.einsum("bhqd,bhkd->bhqk", qh, kh, precision=hp)
        pr = jax.nn.softmax(sc, axis=-1)
        ctx = jnp.einsum("bhqk,bhkd->bhqd", pr, vh, precision=hp)
        ctx = ctx.transpose(0, 2, 1, 3).reshape(b, s, c)
        attn = jnp.einsum("bsc,dc->bsd", ctx, lyr["wo"], precision=hp) + lyr["bo"]
        p = p + attn
        f = jnp.einsum("bsc,dc->bsd", p, lyr["w1"], precision=hp)
        f = jnp.einsum("bsc,dc->bsd", f, lyr["w2"], precision=hp)
        p = p + f
    return p.transpose(0, 2, 1).reshape(b, c, hh, ww)


# ----------------------------------------- main ------------------------------------------
if __name__ == "__main__":
    key = jax.random.PRNGKey(0)
    kx, kp = jax.random.split(key)
    x = jax.random.normal(kx, (B, C, H, W), jnp.float32)

    raw_params = make_raw_params(kp)
    kernel_params = fuse_params(raw_params)

    fwd = jax.jit(transformer_block_forward)
    out = jax.block_until_ready(fwd(x, kernel_params))
    assert out.shape == (B, C, H, W) and out.dtype == jnp.float32

    ref = jax.block_until_ready(transformer_block_reference(x, raw_params))
    max_err = float(jnp.max(jnp.abs(out - ref)))
    assert max_err < 2e-2, f"mismatch vs reference: {max_err}"

    print("KERNEL_OK")
</pallas_src>

<mosaic_0001>
module attributes {stable_mosaic.version = 11 : i64} {
  func.func @transformer_block_kernel(%arg0: memref<128x128xf32, #tpu.memory_space<vmem>>, %arg1: memref<128x128xbf16, #tpu.memory_space<vmem>>, %arg2: memref<1x128xf32, #tpu.memory_space<vmem>>, %arg3: memref<2x128x384xbf16, #tpu.memory_space<vmem>>, %arg4: memref<2x1x384xf32, #tpu.memory_space<vmem>>, %arg5: memref<2x128x128xbf16, #tpu.memory_space<vmem>>, %arg6: memref<2x1x128xf32, #tpu.memory_space<vmem>>, %arg7: memref<2x128x128xbf16, #tpu.memory_space<vmem>>, %arg8: memref<2x128x128xbf16, #tpu.memory_space<vmem>>, %arg9: memref<128x128xf32, #tpu.memory_space<vmem>>) attributes {dimension_semantics = [], scalar_prefetch = 0 : i64, scratch_operands = 0 : i64, tpu.core_type = #tpu.core_type<tc>} {
    %c0 = arith.constant 0 : index
    %c0_0 = arith.constant 0 : index
    %0 = vector.load %arg0[%c0, %c0_0] : memref<128x128xf32, #tpu.memory_space<vmem>>, vector<128x128xf32>
    %1 = arith.truncf %0 : vector<128x128xf32> to vector<128x128xbf16>
    %c0_1 = arith.constant 0 : index
    %c0_2 = arith.constant 0 : index
    %2 = vector.load %arg1[%c0_1, %c0_2] : memref<128x128xbf16, #tpu.memory_space<vmem>>, vector<128x128xbf16>
    %cst = arith.constant dense<0.000000e+00> : vector<128x128xf32>
    %3 = tpu.matmul %1, %2, %cst {dimension_numbers = #tpu.dot_dimension_numbers<[1], [0], [0], [1], [0, 0, 1, 1], [], []>} : vector<128x128xbf16>, vector<128x128xbf16>, vector<128x128xf32> -> vector<128x128xf32>
    %c0_3 = arith.constant 0 : index
    %c0_4 = arith.constant 0 : index
    %4 = vector.load %arg2[%c0_3, %c0_4] : memref<1x128xf32, #tpu.memory_space<vmem>>, vector<1x128xf32>
    %5 = vector.broadcast %4 : vector<1x128xf32> to vector<128x128xf32>
    %6 = arith.addf %3, %5 : vector<128x128xf32>
    %7 = arith.addf %0, %6 : vector<128x128xf32>
    %c0_5 = arith.constant 0 : index
    %c0_6 = arith.constant 0 : index
    %c0_7 = arith.constant 0 : index
    %8 = vector.load %arg3[%c0_5, %c0_6, %c0_7] : memref<2x128x384xbf16, #tpu.memory_space<vmem>>, vector<1x128x384xbf16>
    %9 = vector.shape_cast %8 : vector<1x128x384xbf16> to vector<128x384xbf16>
    %c0_8 = arith.constant 0 : index
    %c0_9 = arith.constant 0 : index
    %c0_10 = arith.constant 0 : index
    %10 = vector.load %arg4[%c0_8, %c0_9, %c0_10] : memref<2x1x384xf32, #tpu.memory_space<vmem>>, vector<1x1x384xf32>
    %11 = vector.shape_cast %10 : vector<1x1x384xf32> to vector<1x384xf32>
    %c0_11 = arith.constant 0 : index
    %c0_12 = arith.constant 0 : index
    %c0_13 = arith.constant 0 : index
    %12 = vector.load %arg5[%c0_11, %c0_12, %c0_13] : memref<2x128x128xbf16, #tpu.memory_space<vmem>>, vector<1x128x128xbf16>
    %13 = vector.shape_cast %12 : vector<1x128x128xbf16> to vector<128x128xbf16>
    %c0_14 = arith.constant 0 : index
    %c0_15 = arith.constant 0 : index
    %c0_16 = arith.constant 0 : index
    %14 = vector.load %arg6[%c0_14, %c0_15, %c0_16] : memref<2x1x128xf32, #tpu.memory_space<vmem>>, vector<1x1x128xf32>
    %15 = vector.shape_cast %14 : vector<1x1x128xf32> to vector<1x128xf32>
    %c0_17 = arith.constant 0 : index
    %c0_18 = arith.constant 0 : index
    %c0_19 = arith.constant 0 : index
    %16 = vector.load %arg7[%c0_17, %c0_18, %c0_19] : memref<2x128x128xbf16, #tpu.memory_space<vmem>>, vector<1x128x128xbf16>
    %17 = vector.shape_cast %16 : vector<1x128x128xbf16> to vector<128x128xbf16>
    %c0_20 = arith.constant 0 : index
    %c0_21 = arith.constant 0 : index
    %c0_22 = arith.constant 0 : index
    %18 = vector.load %arg8[%c0_20, %c0_21, %c0_22] : memref<2x128x128xbf16, #tpu.memory_space<vmem>>, vector<1x128x128xbf16>
    %19 = vector.shape_cast %18 : vector<1x128x128xbf16> to vector<128x128xbf16>
    %20 = arith.truncf %7 : vector<128x128xf32> to vector<128x128xbf16>
    %cst_23 = arith.constant dense<0.000000e+00> : vector<128x384xf32>
    %21 = tpu.matmul %20, %9, %cst_23 {dimension_numbers = #tpu.dot_dimension_numbers<[1], [0], [0], [1], [0, 0, 1, 1], [], []>} : vector<128x128xbf16>, vector<128x384xbf16>, vector<128x384xf32> -> vector<128x384xf32>
    %22 = vector.broadcast %11 : vector<1x384xf32> to vector<128x384xf32>
    %23 = arith.addf %21, %22 : vector<128x384xf32>
    %24 = vector.extract_strided_slice %23 {offsets = [0, 0], sizes = [128, 128], strides = [1, 1]} : vector<128x384xf32> to vector<128x128xf32>
    %25 = arith.truncf %24 : vector<128x128xf32> to vector<128x128xbf16>
    %26 = vector.extract_strided_slice %23 {offsets = [0, 128], sizes = [128, 128], strides = [1, 1]} : vector<128x384xf32> to vector<128x128xf32>
    %27 = arith.truncf %26 : vector<128x128xf32> to vector<128x128xbf16>
    %28 = vector.extract_strided_slice %23 {offsets = [0, 256], sizes = [128, 128], strides = [1, 1]} : vector<128x384xf32> to vector<128x128xf32>
    %29 = arith.truncf %28 : vector<128x128xf32> to vector<128x128xbf16>
    %30 = vector.extract_strided_slice %25 {offsets = [0, 0], sizes = [64, 32], strides = [1, 1]} : vector<128x128xbf16> to vector<64x32xbf16>
    %31 = vector.extract_strided_slice %27 {offsets = [0, 0], sizes = [64, 32], strides = [1, 1]} : vector<128x128xbf16> to vector<64x32xbf16>
    %cst_24 = arith.constant dense<0.000000e+00> : vector<64x64xf32>
    %32 = tpu.matmul %30, %31, %cst_24 {dimension_numbers = #tpu.dot_dimension_numbers<[1], [1], [0], [0], [0, 0, 1, 0], [], []>} : vector<64x32xbf16>, vector<64x32xbf16>, vector<64x64xf32> -> vector<64x64xf32>
    %33 = vector.extract_strided_slice %25 {offsets = [0, 32], sizes = [64, 32], strides = [1, 1]} : vector<128x128xbf16> to vector<64x32xbf16>
    %34 = vector.extract_strided_slice %27 {offsets = [0, 32], sizes = [64, 32], strides = [1, 1]} : vector<128x128xbf16> to vector<64x32xbf16>
    %cst_25 = arith.constant dense<0.000000e+00> : vector<64x64xf32>
    %35 = tpu.matmul %33, %34, %cst_25 {dimension_numbers = #tpu.dot_dimension_numbers<[1], [1], [0], [0], [0, 0, 1, 0], [], []>} : vector<64x32xbf16>, vector<64x32xbf16>, vector<64x64xf32> -> vector<64x64xf32>
    %36 = vector.extract_strided_slice %25 {offsets = [0, 64], sizes = [64, 32], strides = [1, 1]} : vector<128x128xbf16> to vector<64x32xbf16>
    %37 = vector.extract_strided_slice %27 {offsets = [0, 64], sizes = [64, 32], strides = [1, 1]} : vector<128x128xbf16> to vector<64x32xbf16>
    %cst_26 = arith.constant dense<0.000000e+00> : vector<64x64xf32>
    %38 = tpu.matmul %36, %37, %cst_26 {dimension_numbers = #tpu.dot_dimension_numbers<[1], [1], [0], [0], [0, 0, 1, 0], [], []>} : vector<64x32xbf16>, vector<64x32xbf16>, vector<64x64xf32> -> vector<64x64xf32>
    %39 = vector.extract_strided_slice %25 {offsets = [0, 96], sizes = [64, 32], strides = [1, 1]} : vector<128x128xbf16> to vector<64x32xbf16>
    %40 = vector.extract_strided_slice %27 {offsets = [0, 96], sizes = [64, 32], strides = [1, 1]} : vector<128x128xbf16> to vector<64x32xbf16>
    %cst_27 = arith.constant dense<0.000000e+00> : vector<64x64xf32>
    %41 = tpu.matmul %39, %40, %cst_27 {dimension_numbers = #tpu.dot_dimension_numbers<[1], [1], [0], [0], [0, 0, 1, 0], [], []>} : vector<64x32xbf16>, vector<64x32xbf16>, vector<64x64xf32> -> vector<64x64xf32>
    %42 = vector.extract_strided_slice %25 {offsets = [64, 0], sizes = [64, 32], strides = [1, 1]} : vector<128x128xbf16> to vector<64x32xbf16>
    %43 = vector.extract_strided_slice %27 {offsets = [64, 0], sizes = [64, 32], strides = [1, 1]} : vector<128x128xbf16> to vector<64x32xbf16>
    %cst_28 = arith.constant dense<0.000000e+00> : vector<64x64xf32>
    %44 = tpu.matmul %42, %43, %cst_28 {dimension_numbers = #tpu.dot_dimension_numbers<[1], [1], [0], [0], [0, 0, 1, 0], [], []>} : vector<64x32xbf16>, vector<64x32xbf16>, vector<64x64xf32> -> vector<64x64xf32>
    %45 = vector.extract_strided_slice %25 {offsets = [64, 32], sizes = [64, 32], strides = [1, 1]} : vector<128x128xbf16> to vector<64x32xbf16>
    %46 = vector.extract_strided_slice %27 {offsets = [64, 32], sizes = [64, 32], strides = [1, 1]} : vector<128x128xbf16> to vector<64x32xbf16>
    %cst_29 = arith.constant dense<0.000000e+00> : vector<64x64xf32>
    %47 = tpu.matmul %45, %46, %cst_29 {dimension_numbers = #tpu.dot_dimension_numbers<[1], [1], [0], [0], [0, 0, 1, 0], [], []>} : vector<64x32xbf16>, vector<64x32xbf16>, vector<64x64xf32> -> vector<64x64xf32>
    %48 = vector.extract_strided_slice %25 {offsets = [64, 64], sizes = [64, 32], strides = [1, 1]} : vector<128x128xbf16> to vector<64x32xbf16>
    %49 = vector.extract_strided_slice %27 {offsets = [64, 64], sizes = [64, 32], strides = [1, 1]} : vector<128x128xbf16> to vector<64x32xbf16>
    %cst_30 = arith.constant dense<0.000000e+00> : vector<64x64xf32>
    %50 = tpu.matmul %48, %49, %cst_30 {dimension_numbers = #tpu.dot_dimension_numbers<[1], [1], [0], [0], [0, 0, 1, 0], [], []>} : vector<64x32xbf16>, vector<64x32xbf16>, vector<64x64xf32> -> vector<64x64xf32>
    %51 = vector.extract_strided_slice %25 {offsets = [64, 96], sizes = [64, 32], strides = [1, 1]} : vector<128x128xbf16> to vector<64x32xbf16>
    %52 = vector.extract_strided_slice %27 {offsets = [64, 96], sizes = [64, 32], strides = [1, 1]} : vector<128x128xbf16> to vector<64x32xbf16>
    %cst_31 = arith.constant dense<0.000000e+00> : vector<64x64xf32>
    %53 = tpu.matmul %51, %52, %cst_31 {dimension_numbers = #tpu.dot_dimension_numbers<[1], [1], [0], [0], [0, 0, 1, 0], [], []>} : vector<64x32xbf16>, vector<64x32xbf16>, vector<64x64xf32> -> vector<64x64xf32>
    %54 = tpu.concatenate %32, %35, %38, %41, %44, %47, %50, %53 in 0 : vector<64x64xf32>, vector<64x64xf32>, vector<64x64xf32>, vector<64x64xf32>, vector<64x64xf32>, vector<64x64xf32>, vector<64x64xf32>, vector<64x64xf32> -> vector<512x64xf32>
    %cst_32 = arith.constant dense<0xFF800000> : vector<512xf32>
    %55 = vector.multi_reduction <maximumf>, %54, %cst_32 [1] : vector<512x64xf32> to vector<512xf32>
    %56 = vector.shape_cast %55 : vector<512xf32> to vector<512x1xf32>
    %57 = vector.broadcast %56 : vector<512x1xf32> to vector<512x64xf32>
    %58 = arith.subf %54, %57 : vector<512x64xf32>
    %59 = math.exp %58 : vector<512x64xf32>
    %cst_33 = arith.constant dense<0.000000e+00> : vector<512xf32>
    %60 = vector.multi_reduction <add>, %59, %cst_33 [1] : vector<512x64xf32> to vector<512xf32>
    %61 = vector.shape_cast %60 : vector<512xf32> to vector<512x1xf32>
    %62 = tpu.reciprocal %61 {approx = true} : vector<512x1xf32> -> vector<512x1xf32>
    %63 = vector.broadcast %62 : vector<512x1xf32> to vector<512x64xf32>
    %64 = arith.mulf %59, %63 : vector<512x64xf32>
    %65 = arith.truncf %64 : vector<512x64xf32> to vector<512x64xbf16>
    %66 = vector.extract_strided_slice %65 {offsets = [0, 0], sizes = [64, 64], strides = [1, 1]} : vector<512x64xbf16> to vector<64x64xbf16>
    %67 = vector.extract_strided_slice %29 {offsets = [0, 0], sizes = [64, 32], strides = [1, 1]} : vector<128x128xbf16> to vector<64x32xbf16>
    %cst_34 = arith.constant dense<0.000000e+00> : vector<64x32xf32>
    %68 = tpu.matmul %66, %67, %cst_34 {dimension_numbers = #tpu.dot_dimension_numbers<[1], [0], [0], [1], [0, 0, 1, 1], [], []>} : vector<64x64xbf16>, vector<64x32xbf16>, vector<64x32xf32> -> vector<64x32xf32>
    %69 = arith.truncf %68 : vector<64x32xf32> to vector<64x32xbf16>
    %70 = vector.extract_strided_slice %13 {offsets = [0, 0], sizes = [32, 128], strides = [1, 1]} : vector<128x128xbf16> to vector<32x128xbf16>
    %cst_35 = arith.constant dense<0.000000e+00> : vector<64x128xf32>
    %71 = tpu.matmul %69, %70, %cst_35 {dimension_numbers = #tpu.dot_dimension_numbers<[1], [0], [0], [1], [0, 0, 1, 1], [], []>} : vector<64x32xbf16>, vector<32x128xbf16>, vector<64x128xf32> -> vector<64x128xf32>
    %72 = vector.extract_strided_slice %65 {offsets = [64, 0], sizes = [64, 64], strides = [1, 1]} : vector<512x64xbf16> to vector<64x64xbf16>
    %73 = vector.extract_strided_slice %29 {offsets = [0, 32], sizes = [64, 32], strides = [1, 1]} : vector<128x128xbf16> to vector<64x32xbf16>
    %cst_36 = arith.constant dense<0.000000e+00> : vector<64x32xf32>
    %74 = tpu.matmul %72, %73, %cst_36 {dimension_numbers = #tpu.dot_dimension_numbers<[1], [0], [0], [1], [0, 0, 1, 1], [], []>} : vector<64x64xbf16>, vector<64x32xbf16>, vector<64x32xf32> -> vector<64x32xf32>
    %75 = arith.truncf %74 : vector<64x32xf32> to vector<64x32xbf16>
    %76 = vector.extract_strided_slice %13 {offsets = [32, 0], sizes = [32, 128], strides = [1, 1]} : vector<128x128xbf16> to vector<32x128xbf16>
    %cst_37 = arith.constant dense<0.000000e+00> : vector<64x128xf32>
    %77 = tpu.matmul %75, %76, %cst_37 {dimension_numbers = #tpu.dot_dimension_numbers<[1], [0], [0], [1], [0, 0, 1, 1], [], []>} : vector<64x32xbf16>, vector<32x128xbf16>, vector<64x128xf32> -> vector<64x128xf32>
    %78 = arith.addf %71, %77 : vector<64x128xf32>
    %79 = vector.extract_strided_slice %65 {offsets = [128, 0], sizes = [64, 64], strides = [1, 1]} : vector<512x64xbf16> to vector<64x64xbf16>
    %80 = vector.extract_strided_slice %29 {offsets = [0, 64], sizes = [64, 32], strides = [1, 1]} : vector<128x128xbf16> to vector<64x32xbf16>
    %cst_38 = arith.constant dense<0.000000e+00> : vector<64x32xf32>
    %81 = tpu.matmul %79, %80, %cst_38 {dimension_numbers = #tpu.dot_dimension_numbers<[1], [0], [0], [1], [0, 0, 1, 1], [], []>} : vector<64x64xbf16>, vector<64x32xbf16>, vector<64x32xf32> -> vector<64x32xf32>
    %82 = arith.truncf %81 : vector<64x32xf32> to vector<64x32xbf16>
    %83 = vector.extract_strided_slice %13 {offsets = [64, 0], sizes = [32, 128], strides = [1, 1]} : vector<128x128xbf16> to vector<32x128xbf16>
    %cst_39 = arith.constant dense<0.000000e+00> : vector<64x128xf32>
    %84 = tpu.matmul %82, %83, %cst_39 {dimension_numbers = #tpu.dot_dimension_numbers<[1], [0], [0], [1], [0, 0, 1, 1], [], []>} : vector<64x32xbf16>, vector<32x128xbf16>, vector<64x128xf32> -> vector<64x128xf32>
    %85 = arith.addf %78, %84 : vector<64x128xf32>
    %86 = vector.extract_strided_slice %65 {offsets = [192, 0], sizes = [64, 64], strides = [1, 1]} : vector<512x64xbf16> to vector<64x64xbf16>
    %87 = vector.extract_strided_slice %29 {offsets = [0, 96], sizes = [64, 32], strides = [1, 1]} : vector<128x128xbf16> to vector<64x32xbf16>
    %cst_40 = arith.constant dense<0.000000e+00> : vector<64x32xf32>
    %88 = tpu.matmul %86, %87, %cst_40 {dimension_numbers = #tpu.dot_dimension_numbers<[1], [0], [0], [1], [0, 0, 1, 1], [], []>} : vector<64x64xbf16>, vector<64x32xbf16>, vector<64x32xf32> -> vector<64x32xf32>
    %89 = arith.truncf %88 : vector<64x32xf32> to vector<64x32xbf16>
    %90 = vector.extract_strided_slice %13 {offsets = [96, 0], sizes = [32, 128], strides = [1, 1]} : vector<128x128xbf16> to vector<32x128xbf16>
    %cst_41 = arith.constant dense<0.000000e+00> : vector<64x128xf32>
    %91 = tpu.matmul %89, %90, %cst_41 {dimension_numbers = #tpu.dot_dimension_numbers<[1], [0], [0], [1], [0, 0, 1, 1], [], []>} : vector<64x32xbf16>, vector<32x128xbf16>, vector<64x128xf32> -> vector<64x128xf32>
    %92 = arith.addf %85, %91 : vector<64x128xf32>
    %93 = vector.extract_strided_slice %65 {offsets = [256, 0], sizes = [64, 64], strides = [1, 1]} : vector<512x64xbf16> to vector<64x64xbf16>
    %94 = vector.extract_strided_slice %29 {offsets = [64, 0], sizes = [64, 32], strides = [1, 1]} : vector<128x128xbf16> to vector<64x32xbf16>
    %cst_42 = arith.constant dense<0.000000e+00> : vector<64x32xf32>
    %95 = tpu.matmul %93, %94, %cst_42 {dimension_numbers = #tpu.dot_dimension_numbers<[1], [0], [0], [1], [0, 0, 1, 1], [], []>} : vector<64x64xbf16>, vector<64x32xbf16>, vector<64x32xf32> -> vector<64x32xf32>
    %96 = arith.truncf %95 : vector<64x32xf32> to vector<64x32xbf16>
    %97 = vector.extract_strided_slice %13 {offsets = [0, 0], sizes = [32, 128], strides = [1, 1]} : vector<128x128xbf16> to vector<32x128xbf16>
    %cst_43 = arith.constant dense<0.000000e+00> : vector<64x128xf32>
    %98 = tpu.matmul %96, %97, %cst_43 {dimension_numbers = #tpu.dot_dimension_numbers<[1], [0], [0], [1], [0, 0, 1, 1], [], []>} : vector<64x32xbf16>, vector<32x128xbf16>, vector<64x128xf32> -> vector<64x128xf32>
    %99 = vector.extract_strided_slice %65 {offsets = [320, 0], sizes = [64, 64], strides = [1, 1]} : vector<512x64xbf16> to vector<64x64xbf16>
    %100 = vector.extract_strided_slice %29 {offsets = [64, 32], sizes = [64, 32], strides = [1, 1]} : vector<128x128xbf16> to vector<64x32xbf16>
    %cst_44 = arith.constant dense<0.000000e+00> : vector<64x32xf32>
    %101 = tpu.matmul %99, %100, %cst_44 {dimension_numbers = #tpu.dot_dimension_numbers<[1], [0], [0], [1], [0, 0, 1, 1], [], []>} : vector<64x64xbf16>, vector<64x32xbf16>, vector<64x32xf32> -> vector<64x32xf32>
    %102 = arith.truncf %101 : vector<64x32xf32> to vector<64x32xbf16>
    %103 = vector.extract_strided_slice %13 {offsets = [32, 0], sizes = [32, 128], strides = [1, 1]} : vector<128x128xbf16> to vector<32x128xbf16>
    %cst_45 = arith.constant dense<0.000000e+00> : vector<64x128xf32>
    %104 = tpu.matmul %102, %103, %cst_45 {dimension_numbers = #tpu.dot_dimension_numbers<[1], [0], [0], [1], [0, 0, 1, 1], [], []>} : vector<64x32xbf16>, vector<32x128xbf16>, vector<64x128xf32> -> vector<64x128xf32>
    %105 = arith.addf %98, %104 : vector<64x128xf32>
    %106 = vector.extract_strided_slice %65 {offsets = [384, 0], sizes = [64, 64], strides = [1, 1]} : vector<512x64xbf16> to vector<64x64xbf16>
    %107 = vector.extract_strided_slice %29 {offsets = [64, 64], sizes = [64, 32], strides = [1, 1]} : vector<128x128xbf16> to vector<64x32xbf16>
    %cst_46 = arith.constant dense<0.000000e+00> : vector<64x32xf32>
    %108 = tpu.matmul %106, %107, %cst_46 {dimension_numbers = #tpu.dot_dimension_numbers<[1], [0], [0], [1], [0, 0, 1, 1], [], []>} : vector<64x64xbf16>, vector<64x32xbf16>, vector<64x32xf32> -> vector<64x32xf32>
    %109 = arith.truncf %108 : vector<64x32xf32> to vector<64x32xbf16>
    %110 = vector.extract_strided_slice %13 {offsets = [64, 0], sizes = [32, 128], strides = [1, 1]} : vector<128x128xbf16> to vector<32x128xbf16>
    %cst_47 = arith.constant dense<0.000000e+00> : vector<64x128xf32>
    %111 = tpu.matmul %109, %110, %cst_47 {dimension_numbers = #tpu.dot_dimension_numbers<[1], [0], [0], [1], [0, 0, 1, 1], [], []>} : vector<64x32xbf16>, vector<32x128xbf16>, vector<64x128xf32> -> vector<64x128xf32>
    %112 = arith.addf %105, %111 : vector<64x128xf32>
    %113 = vector.extract_strided_slice %65 {offsets = [448, 0], sizes = [64, 64], strides = [1, 1]} : vector<512x64xbf16> to vector<64x64xbf16>
    %114 = vector.extract_strided_slice %29 {offsets = [64, 96], sizes = [64, 32], strides = [1, 1]} : vector<128x128xbf16> to vector<64x32xbf16>
    %cst_48 = arith.constant dense<0.000000e+00> : vector<64x32xf32>
    %115 = tpu.matmul %113, %114, %cst_48 {dimension_numbers = #tpu.dot_dimension_numbers<[1], [0], [0], [1], [0, 0, 1, 1], [], []>} : vector<64x64xbf16>, vector<64x32xbf16>, vector<64x32xf32> -> vector<64x32xf32>
    %116 = arith.truncf %115 : vector<64x32xf32> to vector<64x32xbf16>
    %117 = vector.extract_strided_slice %13 {offsets = [96, 0], sizes = [32, 128], strides = [1, 1]} : vector<128x128xbf16> to vector<32x128xbf16>
    %cst_49 = arith.constant dense<0.000000e+00> : vector<64x128xf32>
    %118 = tpu.matmul %116, %117, %cst_49 {dimension_numbers = #tpu.dot_dimension_numbers<[1], [0], [0], [1], [0, 0, 1, 1], [], []>} : vector<64x32xbf16>, vector<32x128xbf16>, vector<64x128xf32> -> vector<64x128xf32>
    %119 = arith.addf %112, %118 : vector<64x128xf32>
    %120 = tpu.concatenate %92, %119 in 0 : vector<64x128xf32>, vector<64x128xf32> -> vector<128x128xf32>
    %121 = vector.broadcast %15 : vector<1x128xf32> to vector<128x128xf32>
    %122 = arith.addf %120, %121 : vector<128x128xf32>
    %123 = arith.addf %7, %122 : vector<128x128xf32>
    %124 = arith.truncf %123 : vector<128x128xf32> to vector<128x128xbf16>
    %cst_50 = arith.constant dense<0.000000e+00> : vector<128x128xf32>
    %125 = tpu.matmul %124, %17, %cst_50 {dimension_numbers = #tpu.dot_dimension_numbers<[1], [0], [0], [1], [0, 0, 1, 1], [], []>} : vector<128x128xbf16>, vector<128x128xbf16>, vector<128x128xf32> -> vector<128x128xf32>
    %126 = arith.truncf %125 : vector<128x128xf32> to vector<128x128xbf16>
    %cst_51 = arith.constant dense<0.000000e+00> : vector<128x128xf32>
    %127 = tpu.matmul %126, %19, %cst_51 {dimension_numbers = #tpu.dot_dimension_numbers<[1], [0], [0], [1], [0, 0, 1, 1], [], []>} : vector<128x128xbf16>, vector<128x128xbf16>, vector<128x128xf32> -> vector<128x128xf32>
    %128 = arith.addf %123, %127 : vector<128x128xf32>
    %c1 = arith.constant 1 : index
    %c0_52 = arith.constant 0 : index
    %c0_53 = arith.constant 0 : index
    %129 = vector.load %arg3[%c1, %c0_52, %c0_53] : memref<2x128x384xbf16, #tpu.memory_space<vmem>>, vector<1x128x384xbf16>
    %130 = vector.shape_cast %129 : vector<1x128x384xbf16> to vector<128x384xbf16>
    %c1_54 = arith.constant 1 : index
    %c0_55 = arith.constant 0 : index
    %c0_56 = arith.constant 0 : index
    %131 = vector.load %arg4[%c1_54, %c0_55, %c0_56] : memref<2x1x384xf32, #tpu.memory_space<vmem>>, vector<1x1x384xf32>
    %132 = vector.shape_cast %131 : vector<1x1x384xf32> to vector<1x384xf32>
    %c1_57 = arith.constant 1 : index
    %c0_58 = arith.constant 0 : index
    %c0_59 = arith.constant 0 : index
    %133 = vector.load %arg5[%c1_57, %c0_58, %c0_59] : memref<2x128x128xbf16, #tpu.memory_space<vmem>>, vector<1x128x128xbf16>
    %134 = vector.shape_cast %133 : vector<1x128x128xbf16> to vector<128x128xbf16>
    %c1_60 = arith.constant 1 : index
    %c0_61 = arith.constant 0 : index
    %c0_62 = arith.constant 0 : index
    %135 = vector.load %arg6[%c1_60, %c0_61, %c0_62] : memref<2x1x128xf32, #tpu.memory_space<vmem>>, vector<1x1x128xf32>
    %136 = vector.shape_cast %135 : vector<1x1x128xf32> to vector<1x128xf32>
    %c1_63 = arith.constant 1 : index
    %c0_64 = arith.constant 0 : index
    %c0_65 = arith.constant 0 : index
    %137 = vector.load %arg7[%c1_63, %c0_64, %c0_65] : memref<2x128x128xbf16, #tpu.memory_space<vmem>>, vector<1x128x128xbf16>
    %138 = vector.shape_cast %137 : vector<1x128x128xbf16> to vector<128x128xbf16>
    %c1_66 = arith.constant 1 : index
    %c0_67 = arith.constant 0 : index
    %c0_68 = arith.constant 0 : index
    %139 = vector.load %arg8[%c1_66, %c0_67, %c0_68] : memref<2x128x128xbf16, #tpu.memory_space<vmem>>, vector<1x128x128xbf16>
    %140 = vector.shape_cast %139 : vector<1x128x128xbf16> to vector<128x128xbf16>
    %141 = arith.truncf %128 : vector<128x128xf32> to vector<128x128xbf16>
    %cst_69 = arith.constant dense<0.000000e+00> : vector<128x384xf32>
    %142 = tpu.matmul %141, %130, %cst_69 {dimension_numbers = #tpu.dot_dimension_numbers<[1], [0], [0], [1], [0, 0, 1, 1], [], []>} : vector<128x128xbf16>, vector<128x384xbf16>, vector<128x384xf32> -> vector<128x384xf32>
    %143 = vector.broadcast %132 : vector<1x384xf32> to vector<128x384xf32>
    %144 = arith.addf %142, %143 : vector<128x384xf32>
    %145 = vector.extract_strided_slice %144 {offsets = [0, 0], sizes = [128, 128], strides = [1, 1]} : vector<128x384xf32> to vector<128x128xf32>
    %146 = arith.truncf %145 : vector<128x128xf32> to vector<128x128xbf16>
    %147 = vector.extract_strided_slice %144 {offsets = [0, 128], sizes = [128, 128], strides = [1, 1]} : vector<128x384xf32> to vector<128x128xf32>
    %148 = arith.truncf %147 : vector<128x128xf32> to vector<128x128xbf16>
    %149 = vector.extract_strided_slice %144 {offsets = [0, 256], sizes = [128, 128], strides = [1, 1]} : vector<128x384xf32> to vector<128x128xf32>
    %150 = arith.truncf %149 : vector<128x128xf32> to vector<128x128xbf16>
    %151 = vector.extract_strided_slice %146 {offsets = [0, 0], sizes = [64, 32], strides = [1, 1]} : vector<128x128xbf16> to vector<64x32xbf16>
    %152 = vector.extract_strided_slice %148 {offsets = [0, 0], sizes = [64, 32], strides = [1, 1]} : vector<128x128xbf16> to vector<64x32xbf16>
    %cst_70 = arith.constant dense<0.000000e+00> : vector<64x64xf32>
    %153 = tpu.matmul %151, %152, %cst_70 {dimension_numbers = #tpu.dot_dimension_numbers<[1], [1], [0], [0], [0, 0, 1, 0], [], []>} : vector<64x32xbf16>, vector<64x32xbf16>, vector<64x64xf32> -> vector<64x64xf32>
    %154 = vector.extract_strided_slice %146 {offsets = [0, 32], sizes = [64, 32], strides = [1, 1]} : vector<128x128xbf16> to vector<64x32xbf16>
    %155 = vector.extract_strided_slice %148 {offsets = [0, 32], sizes = [64, 32], strides = [1, 1]} : vector<128x128xbf16> to vector<64x32xbf16>
    %cst_71 = arith.constant dense<0.000000e+00> : vector<64x64xf32>
    %156 = tpu.matmul %154, %155, %cst_71 {dimension_numbers = #tpu.dot_dimension_numbers<[1], [1], [0], [0], [0, 0, 1, 0], [], []>} : vector<64x32xbf16>, vector<64x32xbf16>, vector<64x64xf32> -> vector<64x64xf32>
    %157 = vector.extract_strided_slice %146 {offsets = [0, 64], sizes = [64, 32], strides = [1, 1]} : vector<128x128xbf16> to vector<64x32xbf16>
    %158 = vector.extract_strided_slice %148 {offsets = [0, 64], sizes = [64, 32], strides = [1, 1]} : vector<128x128xbf16> to vector<64x32xbf16>
    %cst_72 = arith.constant dense<0.000000e+00> : vector<64x64xf32>
    %159 = tpu.matmul %157, %158, %cst_72 {dimension_numbers = #tpu.dot_dimension_numbers<[1], [1], [0], [0], [0, 0, 1, 0], [], []>} : vector<64x32xbf16>, vector<64x32xbf16>, vector<64x64xf32> -> vector<64x64xf32>
    %160 = vector.extract_strided_slice %146 {offsets = [0, 96], sizes = [64, 32], strides = [1, 1]} : vector<128x128xbf16> to vector<64x32xbf16>
    %161 = vector.extract_strided_slice %148 {offsets = [0, 96], sizes = [64, 32], strides = [1, 1]} : vector<128x128xbf16> to vector<64x32xbf16>
    %cst_73 = arith.constant dense<0.000000e+00> : vector<64x64xf32>
    %162 = tpu.matmul %160, %161, %cst_73 {dimension_numbers = #tpu.dot_dimension_numbers<[1], [1], [0], [0], [0, 0, 1, 0], [], []>} : vector<64x32xbf16>, vector<64x32xbf16>, vector<64x64xf32> -> vector<64x64xf32>
    %163 = vector.extract_strided_slice %146 {offsets = [64, 0], sizes = [64, 32], strides = [1, 1]} : vector<128x128xbf16> to vector<64x32xbf16>
    %164 = vector.extract_strided_slice %148 {offsets = [64, 0], sizes = [64, 32], strides = [1, 1]} : vector<128x128xbf16> to vector<64x32xbf16>
    %cst_74 = arith.constant dense<0.000000e+00> : vector<64x64xf32>
    %165 = tpu.matmul %163, %164, %cst_74 {dimension_numbers = #tpu.dot_dimension_numbers<[1], [1], [0], [0], [0, 0, 1, 0], [], []>} : vector<64x32xbf16>, vector<64x32xbf16>, vector<64x64xf32> -> vector<64x64xf32>
    %166 = vector.extract_strided_slice %146 {offsets = [64, 32], sizes = [64, 32], strides = [1, 1]} : vector<128x128xbf16> to vector<64x32xbf16>
    %167 = vector.extract_strided_slice %148 {offsets = [64, 32], sizes = [64, 32], strides = [1, 1]} : vector<128x128xbf16> to vector<64x32xbf16>
    %cst_75 = arith.constant dense<0.000000e+00> : vector<64x64xf32>
    %168 = tpu.matmul %166, %167, %cst_75 {dimension_numbers = #tpu.dot_dimension_numbers<[1], [1], [0], [0], [0, 0, 1, 0], [], []>} : vector<64x32xbf16>, vector<64x32xbf16>, vector<64x64xf32> -> vector<64x64xf32>
    %169 = vector.extract_strided_slice %146 {offsets = [64, 64], sizes = [64, 32], strides = [1, 1]} : vector<128x128xbf16> to vector<64x32xbf16>
    %170 = vector.extract_strided_slice %148 {offsets = [64, 64], sizes = [64, 32], strides = [1, 1]} : vector<128x128xbf16> to vector<64x32xbf16>
    %cst_76 = arith.constant dense<0.000000e+00> : vector<64x64xf32>
    %171 = tpu.matmul %169, %170, %cst_76 {dimension_numbers = #tpu.dot_dimension_numbers<[1], [1], [0], [0], [0, 0, 1, 0], [], []>} : vector<64x32xbf16>, vector<64x32xbf16>, vector<64x64xf32> -> vector<64x64xf32>
    %172 = vector.extract_strided_slice %146 {offsets = [64, 96], sizes = [64, 32], strides = [1, 1]} : vector<128x128xbf16> to vector<64x32xbf16>
    %173 = vector.extract_strided_slice %148 {offsets = [64, 96], sizes = [64, 32], strides = [1, 1]} : vector<128x128xbf16> to vector<64x32xbf16>
    %cst_77 = arith.constant dense<0.000000e+00> : vector<64x64xf32>
    %174 = tpu.matmul %172, %173, %cst_77 {dimension_numbers = #tpu.dot_dimension_numbers<[1], [1], [0], [0], [0, 0, 1, 0], [], []>} : vector<64x32xbf16>, vector<64x32xbf16>, vector<64x64xf32> -> vector<64x64xf32>
    %175 = tpu.concatenate %153, %156, %159, %162, %165, %168, %171, %174 in 0 : vector<64x64xf32>, vector<64x64xf32>, vector<64x64xf32>, vector<64x64xf32>, vector<64x64xf32>, vector<64x64xf32>, vector<64x64xf32>, vector<64x64xf32> -> vector<512x64xf32>
    %cst_78 = arith.constant dense<0xFF800000> : vector<512xf32>
    %176 = vector.multi_reduction <maximumf>, %175, %cst_78 [1] : vector<512x64xf32> to vector<512xf32>
    %177 = vector.shape_cast %176 : vector<512xf32> to vector<512x1xf32>
    %178 = vector.broadcast %177 : vector<512x1xf32> to vector<512x64xf32>
    %179 = arith.subf %175, %178 : vector<512x64xf32>
    %180 = math.exp %179 : vector<512x64xf32>
    %cst_79 = arith.constant dense<0.000000e+00> : vector<512xf32>
    %181 = vector.multi_reduction <add>, %180, %cst_79 [1] : vector<512x64xf32> to vector<512xf32>
    %182 = vector.shape_cast %181 : vector<512xf32> to vector<512x1xf32>
    %183 = tpu.reciprocal %182 {approx = true} : vector<512x1xf32> -> vector<512x1xf32>
    %184 = vector.broadcast %183 : vector<512x1xf32> to vector<512x64xf32>
    %185 = arith.mulf %180, %184 : vector<512x64xf32>
    %186 = arith.truncf %185 : vector<512x64xf32> to vector<512x64xbf16>
    %187 = vector.extract_strided_slice %186 {offsets = [0, 0], sizes = [64, 64], strides = [1, 1]} : vector<512x64xbf16> to vector<64x64xbf16>
    %188 = vector.extract_strided_slice %150 {offsets = [0, 0], sizes = [64, 32], strides = [1, 1]} : vector<128x128xbf16> to vector<64x32xbf16>
    %cst_80 = arith.constant dense<0.000000e+00> : vector<64x32xf32>
    %189 = tpu.matmul %187, %188, %cst_80 {dimension_numbers = #tpu.dot_dimension_numbers<[1], [0], [0], [1], [0, 0, 1, 1], [], []>} : vector<64x64xbf16>, vector<64x32xbf16>, vector<64x32xf32> -> vector<64x32xf32>
    %190 = arith.truncf %189 : vector<64x32xf32> to vector<64x32xbf16>
    %191 = vector.extract_strided_slice %134 {offsets = [0, 0], sizes = [32, 128], strides = [1, 1]} : vector<128x128xbf16> to vector<32x128xbf16>
    %cst_81 = arith.constant dense<0.000000e+00> : vector<64x128xf32>
    %192 = tpu.matmul %190, %191, %cst_81 {dimension_numbers = #tpu.dot_dimension_numbers<[1], [0], [0], [1], [0, 0, 1, 1], [], []>} : vector<64x32xbf16>, vector<32x128xbf16>, vector<64x128xf32> -> vector<64x128xf32>
    %193 = vector.extract_strided_slice %186 {offsets = [64, 0], sizes = [64, 64], strides = [1, 1]} : vector<512x64xbf16> to vector<64x64xbf16>
    %194 = vector.extract_strided_slice %150 {offsets = [0, 32], sizes = [64, 32], strides = [1, 1]} : vector<128x128xbf16> to vector<64x32xbf16>
    %cst_82 = arith.constant dense<0.000000e+00> : vector<64x32xf32>
    %195 = tpu.matmul %193, %194, %cst_82 {dimension_numbers = #tpu.dot_dimension_numbers<[1], [0], [0], [1], [0, 0, 1, 1], [], []>} : vector<64x64xbf16>, vector<64x32xbf16>, vector<64x32xf32> -> vector<64x32xf32>
    %196 = arith.truncf %195 : vector<64x32xf32> to vector<64x32xbf16>
    %197 = vector.extract_strided_slice %134 {offsets = [32, 0], sizes = [32, 128], strides = [1, 1]} : vector<128x128xbf16> to vector<32x128xbf16>
    %cst_83 = arith.constant dense<0.000000e+00> : vector<64x128xf32>
    %198 = tpu.matmul %196, %197, %cst_83 {dimension_numbers = #tpu.dot_dimension_numbers<[1], [0], [0], [1], [0, 0, 1, 1], [], []>} : vector<64x32xbf16>, vector<32x128xbf16>, vector<64x128xf32> -> vector<64x128xf32>
    %199 = arith.addf %192, %198 : vector<64x128xf32>
    %200 = vector.extract_strided_slice %186 {offsets = [128, 0], sizes = [64, 64], strides = [1, 1]} : vector<512x64xbf16> to vector<64x64xbf16>
    %201 = vector.extract_strided_slice %150 {offsets = [0, 64], sizes = [64, 32], strides = [1, 1]} : vector<128x128xbf16> to vector<64x32xbf16>
    %cst_84 = arith.constant dense<0.000000e+00> : vector<64x32xf32>
    %202 = tpu.matmul %200, %201, %cst_84 {dimension_numbers = #tpu.dot_dimension_numbers<[1], [0], [0], [1], [0, 0, 1, 1], [], []>} : vector<64x64xbf16>, vector<64x32xbf16>, vector<64x32xf32> -> vector<64x32xf32>
    %203 = arith.truncf %202 : vector<64x32xf32> to vector<64x32xbf16>
    %204 = vector.extract_strided_slice %134 {offsets = [64, 0], sizes = [32, 128], strides = [1, 1]} : vector<128x128xbf16> to vector<32x128xbf16>
    %cst_85 = arith.constant dense<0.000000e+00> : vector<64x128xf32>
    %205 = tpu.matmul %203, %204, %cst_85 {dimension_numbers = #tpu.dot_dimension_numbers<[1], [0], [0], [1], [0, 0, 1, 1], [], []>} : vector<64x32xbf16>, vector<32x128xbf16>, vector<64x128xf32> -> vector<64x128xf32>
    %206 = arith.addf %199, %205 : vector<64x128xf32>
    %207 = vector.extract_strided_slice %186 {offsets = [192, 0], sizes = [64, 64], strides = [1, 1]} : vector<512x64xbf16> to vector<64x64xbf16>
    %208 = vector.extract_strided_slice %150 {offsets = [0, 96], sizes = [64, 32], strides = [1, 1]} : vector<128x128xbf16> to vector<64x32xbf16>
    %cst_86 = arith.constant dense<0.000000e+00> : vector<64x32xf32>
    %209 = tpu.matmul %207, %208, %cst_86 {dimension_numbers = #tpu.dot_dimension_numbers<[1], [0], [0], [1], [0, 0, 1, 1], [], []>} : vector<64x64xbf16>, vector<64x32xbf16>, vector<64x32xf32> -> vector<64x32xf32>
    %210 = arith.truncf %209 : vector<64x32xf32> to vector<64x32xbf16>
    %211 = vector.extract_strided_slice %134 {offsets = [96, 0], sizes = [32, 128], strides = [1, 1]} : vector<128x128xbf16> to vector<32x128xbf16>
    %cst_87 = arith.constant dense<0.000000e+00> : vector<64x128xf32>
    %212 = tpu.matmul %210, %211, %cst_87 {dimension_numbers = #tpu.dot_dimension_numbers<[1], [0], [0], [1], [0, 0, 1, 1], [], []>} : vector<64x32xbf16>, vector<32x128xbf16>, vector<64x128xf32> -> vector<64x128xf32>
    %213 = arith.addf %206, %212 : vector<64x128xf32>
    %214 = vector.extract_strided_slice %186 {offsets = [256, 0], sizes = [64, 64], strides = [1, 1]} : vector<512x64xbf16> to vector<64x64xbf16>
    %215 = vector.extract_strided_slice %150 {offsets = [64, 0], sizes = [64, 32], strides = [1, 1]} : vector<128x128xbf16> to vector<64x32xbf16>
    %cst_88 = arith.constant dense<0.000000e+00> : vector<64x32xf32>
    %216 = tpu.matmul %214, %215, %cst_88 {dimension_numbers = #tpu.dot_dimension_numbers<[1], [0], [0], [1], [0, 0, 1, 1], [], []>} : vector<64x64xbf16>, vector<64x32xbf16>, vector<64x32xf32> -> vector<64x32xf32>
    %217 = arith.truncf %216 : vector<64x32xf32> to vector<64x32xbf16>
    %218 = vector.extract_strided_slice %134 {offsets = [0, 0], sizes = [32, 128], strides = [1, 1]} : vector<128x128xbf16> to vector<32x128xbf16>
    %cst_89 = arith.constant dense<0.000000e+00> : vector<64x128xf32>
    %219 = tpu.matmul %217, %218, %cst_89 {dimension_numbers = #tpu.dot_dimension_numbers<[1], [0], [0], [1], [0, 0, 1, 1], [], []>} : vector<64x32xbf16>, vector<32x128xbf16>, vector<64x128xf32> -> vector<64x128xf32>
    %220 = vector.extract_strided_slice %186 {offsets = [320, 0], sizes = [64, 64], strides = [1, 1]} : vector<512x64xbf16> to vector<64x64xbf16>
    %221 = vector.extract_strided_slice %150 {offsets = [64, 32], sizes = [64, 32], strides = [1, 1]} : vector<128x128xbf16> to vector<64x32xbf16>
    %cst_90 = arith.constant dense<0.000000e+00> : vector<64x32xf32>
    %222 = tpu.matmul %220, %221, %cst_90 {dimension_numbers = #tpu.dot_dimension_numbers<[1], [0], [0], [1], [0, 0, 1, 1], [], []>} : vector<64x64xbf16>, vector<64x32xbf16>, vector<64x32xf32> -> vector<64x32xf32>
    %223 = arith.truncf %222 : vector<64x32xf32> to vector<64x32xbf16>
    %224 = vector.extract_strided_slice %134 {offsets = [32, 0], sizes = [32, 128], strides = [1, 1]} : vector<128x128xbf16> to vector<32x128xbf16>
    %cst_91 = arith.constant dense<0.000000e+00> : vector<64x128xf32>
    %225 = tpu.matmul %223, %224, %cst_91 {dimension_numbers = #tpu.dot_dimension_numbers<[1], [0], [0], [1], [0, 0, 1, 1], [], []>} : vector<64x32xbf16>, vector<32x128xbf16>, vector<64x128xf32> -> vector<64x128xf32>
    %226 = arith.addf %219, %225 : vector<64x128xf32>
    %227 = vector.extract_strided_slice %186 {offsets = [384, 0], sizes = [64, 64], strides = [1, 1]} : vector<512x64xbf16> to vector<64x64xbf16>
    %228 = vector.extract_strided_slice %150 {offsets = [64, 64], sizes = [64, 32], strides = [1, 1]} : vector<128x128xbf16> to vector<64x32xbf16>
    %cst_92 = arith.constant dense<0.000000e+00> : vector<64x32xf32>
    %229 = tpu.matmul %227, %228, %cst_92 {dimension_numbers = #tpu.dot_dimension_numbers<[1], [0], [0], [1], [0, 0, 1, 1], [], []>} : vector<64x64xbf16>, vector<64x32xbf16>, vector<64x32xf32> -> vector<64x32xf32>
    %230 = arith.truncf %229 : vector<64x32xf32> to vector<64x32xbf16>
    %231 = vector.extract_strided_slice %134 {offsets = [64, 0], sizes = [32, 128], strides = [1, 1]} : vector<128x128xbf16> to vector<32x128xbf16>
    %cst_93 = arith.constant dense<0.000000e+00> : vector<64x128xf32>
    %232 = tpu.matmul %230, %231, %cst_93 {dimension_numbers = #tpu.dot_dimension_numbers<[1], [0], [0], [1], [0, 0, 1, 1], [], []>} : vector<64x32xbf16>, vector<32x128xbf16>, vector<64x128xf32> -> vector<64x128xf32>
    %233 = arith.addf %226, %232 : vector<64x128xf32>
    %234 = vector.extract_strided_slice %186 {offsets = [448, 0], sizes = [64, 64], strides = [1, 1]} : vector<512x64xbf16> to vector<64x64xbf16>
    %235 = vector.extract_strided_slice %150 {offsets = [64, 96], sizes = [64, 32], strides = [1, 1]} : vector<128x128xbf16> to vector<64x32xbf16>
    %cst_94 = arith.constant dense<0.000000e+00> : vector<64x32xf32>
    %236 = tpu.matmul %234, %235, %cst_94 {dimension_numbers = #tpu.dot_dimension_numbers<[1], [0], [0], [1], [0, 0, 1, 1], [], []>} : vector<64x64xbf16>, vector<64x32xbf16>, vector<64x32xf32> -> vector<64x32xf32>
    %237 = arith.truncf %236 : vector<64x32xf32> to vector<64x32xbf16>
    %238 = vector.extract_strided_slice %134 {offsets = [96, 0], sizes = [32, 128], strides = [1, 1]} : vector<128x128xbf16> to vector<32x128xbf16>
    %cst_95 = arith.constant dense<0.000000e+00> : vector<64x128xf32>
    %239 = tpu.matmul %237, %238, %cst_95 {dimension_numbers = #tpu.dot_dimension_numbers<[1], [0], [0], [1], [0, 0, 1, 1], [], []>} : vector<64x32xbf16>, vector<32x128xbf16>, vector<64x128xf32> -> vector<64x128xf32>
    %240 = arith.addf %233, %239 : vector<64x128xf32>
    %241 = tpu.concatenate %213, %240 in 0 : vector<64x128xf32>, vector<64x128xf32> -> vector<128x128xf32>
    %242 = vector.broadcast %136 : vector<1x128xf32> to vector<128x128xf32>
    %243 = arith.addf %241, %242 : vector<128x128xf32>
    %244 = arith.addf %128, %243 : vector<128x128xf32>
    %245 = arith.truncf %244 : vector<128x128xf32> to vector<128x128xbf16>
    %cst_96 = arith.constant dense<0.000000e+00> : vector<128x128xf32>
    %246 = tpu.matmul %245, %138, %cst_96 {dimension_numbers = #tpu.dot_dimension_numbers<[1], [0], [0], [1], [0, 0, 1, 1], [], []>} : vector<128x128xbf16>, vector<128x128xbf16>, vector<128x128xf32> -> vector<128x128xf32>
    %247 = arith.truncf %246 : vector<128x128xf32> to vector<128x128xbf16>
    %cst_97 = arith.constant dense<0.000000e+00> : vector<128x128xf32>
    %248 = tpu.matmul %247, %140, %cst_97 {dimension_numbers = #tpu.dot_dimension_numbers<[1], [0], [0], [1], [0, 0, 1, 1], [], []>} : vector<128x128xbf16>, vector<128x128xbf16>, vector<128x128xf32> -> vector<128x128xf32>
    %249 = arith.addf %244, %248 : vector<128x128xf32>
    %c0_98 = arith.constant 0 : index
    %c0_99 = arith.constant 0 : index
    %250 = vector.load %arg9[%c0_98, %c0_99] : memref<128x128xf32, #tpu.memory_space<vmem>>, vector<128x128xf32>
    tpu.vector_store %arg9[%c0_98, %c0_99], %249 {strides = array<i32>} : memref<128x128xf32, #tpu.memory_space<vmem>>, vector<128x128xf32>,
    return
  }
}

</mosaic_0001>

<llo_original>
// kernel: transformer_block_forward.1
$region0: #{transformer_block_forward.1}
  #allocation0 [shape = 'u32[]', space=smem, size = 0x4, offset = 0x4, fixed_abs, tag = 'smem constant byte address 0x4 - core index']
  #allocation1 [shape = 'u32[72,128]{1,0:T(1,128)}', space=vmem, size = 0x9000, scoped, tag = 'internal scratch']
  %s0 = inlined_call_operand.hbm [shape: f32[128,128], index: 0, kind: input, shape index: {}]
  %s1 = inlined_call_operand.hbm [shape: bf16[128,128], index: 1, kind: input, shape index: {}]
  %s2 = inlined_call_operand.vmem [shape: f32[1,128], index: 2, kind: input, shape index: {}]
  %s3 = inlined_call_operand.hbm [shape: bf16[2,128,384], index: 3, kind: input, shape index: {}]
  %s4 = inlined_call_operand.hbm [shape: f32[2,1,384], index: 4, kind: input, shape index: {}]
  %s5 = inlined_call_operand.hbm [shape: bf16[2,128,128], index: 5, kind: input, shape index: {}]
  %s6 = inlined_call_operand.vmem [shape: f32[2,1,128], index: 6, kind: input, shape index: {}]
  %s7 = inlined_call_operand.hbm [shape: bf16[2,128,128], index: 7, kind: input, shape index: {}]
  %s8 = inlined_call_operand.hbm [shape: bf16[2,128,128], index: 8, kind: input, shape index: {}]
  %s9 = inlined_call_operand.hbm [shape: f32[128,128], index: 9, kind: output, shape index: {}]
  %s10 = sld [smem:[#allocation0]]
  $region74: #{transformer_block_forward.1} parent=0
    _
  %s12 = ssub.s32 1, %s10
  %s13 = scalar_select 0, %s12, %s10
  $region1: #{transformer_block_forward.1} parent=0
    #allocation2 [shape = 'u8[65536]{0}', space=vmem, size = 0x10000, scoped, tag = 'input window, operand 0, single buffered']
    #allocation3 [shape = 's32[1]{0}', space=sflag, size = 0x4, scoped, tag = 'scoped memory for transformer_block_forward.1']
    #allocation4 [shape = 's32[1]{0}', space=sflag, size = 0x4, scoped, tag = 'scoped memory for transformer_block_forward.1']
    #allocation5 [shape = 'u8[32768]{0}', space=vmem, size = 0x8000, scoped, tag = 'input window, operand 1, single buffered']
    #allocation6 [shape = 's32[1]{0}', space=sflag, size = 0x4, scoped, tag = 'scoped memory for transformer_block_forward.1']
    #allocation7 [shape = 'u8[196608]{0}', space=vmem, size = 0x30000, scoped, tag = 'input window, operand 3, single buffered']
    #allocation8 [shape = 'u8[3072]{0}', space=vmem, size = 0xc00, scoped, tag = 'input window, operand 4, single buffered']
    #allocation9 [shape = 's32[1]{0}', space=sflag, size = 0x4, scoped, tag = 'scoped memory for transformer_block_forward.1']
    #allocation10 [shape = 'u8[65536]{0}', space=vmem, size = 0x10000, scoped, tag = 'input window, operand 5, single buffered']
    #allocation11 [shape = 'u8[65536]{0}', space=vmem, size = 0x10000, scoped, tag = 'input window, operand 7, single buffered']
    #allocation12 [shape = 's32[1]{0}', space=sflag, size = 0x4, scoped, tag = 'scoped memory for transformer_block_forward.1']
    #allocation13 [shape = 'u8[65536]{0}', space=vmem, size = 0x10000, scoped, tag = 'input window, operand 8, single buffered']
    #allocation14 [shape = 'u8[65536]{0}', space=vmem, size = 0x10000, scoped, tag = 'output window, operand 0, single buffered']
    %14 = vsyncpa [#allocation3], 0
    %15 = vsyncpa [#allocation6], 0
    %16 = vsyncpa [#allocation9], 0
    %17 = vsyncpa [#allocation12], 0
    %18 = vsyncpa [#allocation4], 0
    // Predicated region
    $region2: #{transformer_block_forward.1} parent=1 // pred_check
      _
    $region3: #{transformer_block_forward.1} parent=1 // pred_check_branch
      %20 = sbr.rel (0) target = $region5
    $region4: #{transformer_block_forward.1} parent=1 // pred_region
      %22 = vsyncadd [#allocation3], 0
      %s23 = sshll.u32 %s0, 4
      %s24 = int_to_ptr.hbm [resolvable:$true] %s23
      %s25 = sshll.u32 [#allocation2], 4
      %s26 = int_to_ptr.vmem [resolvable:$true] %s25
      %31 = dma.hbm_to_vmem [thread:$0]  %s24, 2048, %s26, [#allocation3], 128, 128, 8
    $region5: #{transformer_block_forward.1} parent=1 // pred_fallthru
      _
    // Predicated region
    $region6: #{transformer_block_forward.1} parent=1 // pred_check
      _
    $region7: #{transformer_block_forward.1} parent=1 // pred_check_branch
      %33 = sbr.rel (0) target = $region9
    $region8: #{transformer_block_forward.1} parent=1 // pred_region
      %35 = vsyncadd [#allocation6], 0
      %s36 = sshll.u32 %s1, 4
      %s37 = int_to_ptr.hbm [resolvable:$true] %s36
      %s38 = sshll.u32 [#allocation5], 4
      %s39 = int_to_ptr.vmem [resolvable:$true] %s38
      %44 = dma.hbm_to_vmem [thread:$0]  %s37, 1024, %s39, [#allocation6], 64, 64, 4
    $region9: #{transformer_block_forward.1} parent=1 // pred_fallthru
      _
    // Predicated region
    $region10: #{transformer_block_forward.1} parent=1 // pred_check
      _
    $region11: #{transformer_block_forward.1} parent=1 // pred_check_branch
      %46 = sbr.rel (0) target = $region13
    $region12: #{transformer_block_forward.1} parent=1 // pred_region
      _
    $region13: #{transformer_block_forward.1} parent=1 // pred_fallthru
      _
    // Predicated region
    $region14: #{transformer_block_forward.1} parent=1 // pred_check
      _
    $region15: #{transformer_block_forward.1} parent=1 // pred_check_branch
      %48 = sbr.rel (0) target = $region17
    $region16: #{transformer_block_forward.1} parent=1 // pred_region
      %50 = vsyncadd [#allocation6], 0
      %s51 = sshll.u32 %s3, 4
      %s52 = int_to_ptr.hbm [resolvable:$true] %s51
      %s53 = sshll.u32 [#allocation7], 4
      %s54 = int_to_ptr.vmem [resolvable:$true] %s53
      %59 = dma.hbm_to_vmem [thread:$0]  %s52, 6144, %s54, [#allocation6], 192, 192, 12
    $region17: #{transformer_block_forward.1} parent=1 // pred_fallthru
      _
    // Predicated region
    $region18: #{transformer_block_forward.1} parent=1 // pred_check
      _
    $region19: #{transformer_block_forward.1} parent=1 // pred_check_branch
      %61 = sbr.rel (0) target = $region21
    $region20: #{transformer_block_forward.1} parent=1 // pred_region
      %63 = vsyncadd [#allocation9], 0
      %s64 = sshll.u32 %s4, 4
      %s65 = int_to_ptr.hbm [resolvable:$true] %s64
      %s66 = sshll.u32 [#allocation8], 4
      %s67 = int_to_ptr.vmem [resolvable:$true] %s66
      %72 = dma.hbm_to_vmem [thread:$0]  %s65, 96, %s67, [#allocation9], 48, 48, 3
    $region21: #{transformer_block_forward.1} parent=1 // pred_fallthru
      _
    // Predicated region
    $region22: #{transformer_block_forward.1} parent=1 // pred_check
      _
    $region23: #{transformer_block_forward.1} parent=1 // pred_check_branch
      %74 = sbr.rel (0) target = $region25
    $region24: #{transformer_block_forward.1} parent=1 // pred_region
      %76 = vsyncadd [#allocation9], 0
      %s77 = sshll.u32 %s5, 4
      %s78 = int_to_ptr.hbm [resolvable:$true] %s77
      %s79 = sshll.u32 [#allocation10], 4
      %s80 = int_to_ptr.vmem [resolvable:$true] %s79
      %85 = dma.hbm_to_vmem [thread:$0]  %s78, 2048, %s80, [#allocation9], 64, 64, 4
    $region25: #{transformer_block_forward.1} parent=1 // pred_fallthru
      _
    // Predicated region
    $region26: #{transformer_block_forward.1} parent=1 // pred_check
      _
    $region27: #{transformer_block_forward.1} parent=1 // pred_check_branch
      %87 = sbr.rel (0) target = $region29
    $region28: #{transformer_block_forward.1} parent=1 // pred_region
      _
    $region29: #{transformer_block_forward.1} parent=1 // pred_fallthru
      _
    // Predicated region
    $region30: #{transformer_block_forward.1} parent=1 // pred_check
      _
    $region31: #{transformer_block_forward.1} parent=1 // pred_check_branch
      %89 = sbr.rel (0) target = $region33
    $region32: #{transformer_block_forward.1} parent=1 // pred_region
      %91 = vsyncadd [#allocation12], 0
      %s92 = sshll.u32 %s7, 4
      %s93 = int_to_ptr.hbm [resolvable:$true] %s92
      %s94 = sshll.u32 [#allocation11], 4
      %s95 = int_to_ptr.vmem [resolvable:$true] %s94
      %100 = dma.hbm_to_vmem [thread:$0]  %s93, 2048, %s95, [#allocation12], 64, 64, 4
    $region33: #{transformer_block_forward.1} parent=1 // pred_fallthru
      _
    // Predicated region
    $region34: #{transformer_block_forward.1} parent=1 // pred_check
      _
    $region35: #{transformer_block_forward.1} parent=1 // pred_check_branch
      %102 = sbr.rel (0) target = $region37
    $region36: #{transformer_block_forward.1} parent=1 // pred_region
      %104 = vsyncadd [#allocation12], 0
      %s105 = sshll.u32 %s8, 4
      %s106 = int_to_ptr.hbm [resolvable:$true] %s105
      %s107 = sshll.u32 [#allocation13], 4
      %s108 = int_to_ptr.vmem [resolvable:$true] %s107
      %113 = dma.hbm_to_vmem [thread:$0]  %s106, 2048, %s108, [#allocation12], 64, 64, 4
    $region37: #{transformer_block_forward.1} parent=1 // pred_fallthru
      _
    // Predicated region
    $region38: #{transformer_block_forward.1} parent=1 // pred_check
      _
    $region39: #{transformer_block_forward.1} parent=1 // pred_check_branch
      %115 = sbr.rel (0) target = $region41
    $region40: #{transformer_block_forward.1} parent=1 // pred_region
      %117 = dma.done [#allocation3], 2048
    $region41: #{transformer_block_forward.1} parent=1 // pred_fallthru
      _
    // Predicated region
    $region42: #{transformer_block_forward.1} parent=1 // pred_check
      _
    $region43: #{transformer_block_forward.1} parent=1 // pred_check_branch
      %119 = sbr.rel (0) target = $region45
    $region44: #{transformer_block_forward.1} parent=1 // pred_region
      %121 = dma.done [#allocation6], 1024
    $region45: #{transformer_block_forward.1} parent=1 // pred_fallthru
      _
    // Predicated region
    $region46: #{transformer_block_forward.1} parent=1 // pred_check
      _
    $region47: #{transformer_block_forward.1} parent=1 // pred_check_branch
      %123 = sbr.rel (0) target = $region49
    $region48: #{transformer_block_forward.1} parent=1 // pred_region
      %125 = dma.done [#allocation6], 6144
    $region49: #{transformer_block_forward.1} parent=1 // pred_fallthru
      _
    // Predicated region
    $region50: #{transformer_block_forward.1} parent=1 // pred_check
      _
    $region51: #{transformer_block_forward.1} parent=1 // pred_check_branch
      %127 = sbr.rel (0) target = $region53
    $region52: #{transformer_block_forward.1} parent=1 // pred_region
      %129 = dma.done [#allocation9], 96
    $region53: #{transformer_block_forward.1} parent=1 // pred_fallthru
      _
    // Predicated region
    $region54: #{transformer_block_forward.1} parent=1 // pred_check
      _
    $region55: #{transformer_block_forward.1} parent=1 // pred_check_branch
      %131 = sbr.rel (0) target = $region57
    $region56: #{transformer_block_forward.1} parent=1 // pred_region
      %133 = dma.done [#allocation9], 2048
    $region57: #{transformer_block_forward.1} parent=1 // pred_fallthru
      _
    // Predicated region
    $region58: #{transformer_block_forward.1} parent=1 // pred_check
      _
    $region59: #{transformer_block_forward.1} parent=1 // pred_check_branch
      %135 = sbr.rel (0) target = $region61
    $region60: #{transformer_block_forward.1} parent=1 // pred_region
      %137 = dma.done [#allocation12], 2048
    $region61: #{transformer_block_forward.1} parent=1 // pred_fallthru
      _
    // Predicated region
    $region62: #{transformer_block_forward.1} parent=1 // pred_check
      _
    $region63: #{transformer_block_forward.1} parent=1 // pred_check_branch
      %139 = sbr.rel (0) target = $region65
    $region64: #{transformer_block_forward.1} parent=1 // pred_region
      %141 = dma.done [#allocation12], 2048
    $region65: #{transformer_block_forward.1} parent=1 // pred_fallthru
      _
    %v143 = vld [vmem:[#allocation2] sm:$0xff]
    %v144 = vld [vmem:[#allocation2 + $0x8] sm:$0xff]
    %v145 = vld [vmem:[#allocation2 + $0x10] sm:$0xff]
    %v146 = vld [vmem:[#allocation2 + $0x18] sm:$0xff]
    %v147 = vld [vmem:[#allocation2 + $0x20] sm:$0xff]
    %v148 = vld [vmem:[#allocation2 + $0x28] sm:$0xff]
    %v149 = vld [vmem:[#allocation2 + $0x30] sm:$0xff]
    %v150 = vld [vmem:[#allocation2 + $0x38] sm:$0xff]
    %v151 = vld [vmem:[#allocation2 + $0x40] sm:$0xff]
    %v152 = vld [vmem:[#allocation2 + $0x48] sm:$0xff]
    %v153 = vld [vmem:[#allocation2 + $0x50] sm:$0xff]
    %v154 = vld [vmem:[#allocation2 + $0x58] sm:$0xff]
    %v155 = vld [vmem:[#allocation2 + $0x60] sm:$0xff]
    %v156 = vld [vmem:[#allocation2 + $0x68] sm:$0xff]
    %v157 = vld [vmem:[#allocation2 + $0x70] sm:$0xff]
    %v158 = vld [vmem:[#allocation2 + $0x78] sm:$0xff]
    %v159 = vpack.c.bf16 %v144, %v143
    %v160 = vpack.c.bf16 %v146, %v145
    %v161 = vpack.c.bf16 %v148, %v147
    %v162 = vpack.c.bf16 %v150, %v149
    %v163 = vpack.c.bf16 %v152, %v151
    %v164 = vpack.c.bf16 %v154, %v153
    %v165 = vpack.c.bf16 %v156, %v155
    %v166 = vpack.c.bf16 %v158, %v157
    %v167 = vld [vmem:[#allocation5] sm:$0xf]
    %v168 = vld [vmem:[#allocation5 + $0x4] sm:$0xf]
    %v169 = vld [vmem:[#allocation5 + $0x8] sm:$0xf]
    %v170 = vld [vmem:[#allocation5 + $0xc] sm:$0xf]
    %v171 = vld [vmem:[#allocation5 + $0x10] sm:$0xf]
    %v172 = vld [vmem:[#allocation5 + $0x14] sm:$0xf]
    %v173 = vld [vmem:[#allocation5 + $0x18] sm:$0xf]
    %v174 = vld [vmem:[#allocation5 + $0x1c] sm:$0xf]
    %v175 = vld [vmem:[#allocation5 + $0x20] sm:$0xf]
    %v176 = vld [vmem:[#allocation5 + $0x24] sm:$0xf]
    %v177 = vld [vmem:[#allocation5 + $0x28] sm:$0xf]
    %v178 = vld [vmem:[#allocation5 + $0x2c] sm:$0xf]
    %v179 = vld [vmem:[#allocation5 + $0x30] sm:$0xf]
    %v180 = vld [vmem:[#allocation5 + $0x34] sm:$0xf]
    %v181 = vld [vmem:[#allocation5 + $0x38] sm:$0xf]
    %v182 = vld [vmem:[#allocation5 + $0x3c] sm:$0xf]
    %v183 = vld [vmem:[%s2] sm:$0x1]
    %v185 = vperm.slane %v183, 0
    %v203 = vunpack.c.l.b16 %v167
    %v204 = vunpack.c.l.b16 %v168
    %v205 = vunpack.c.l.b16 %v169
    %v206 = vunpack.c.l.b16 %v170
    %v207 = vunpack.c.l.b16 %v171
    %v208 = vunpack.c.l.b16 %v172
    %v209 = vunpack.c.l.b16 %v173
    %v210 = vunpack.c.l.b16 %v174
    %v211 = vunpack.c.l.b16 %v175
    %v212 = vunpack.c.l.b16 %v176
    %v213 = vunpack.c.l.b16 %v177
    %v214 = vunpack.c.l.b16 %v178
    %v215 = vunpack.c.l.b16 %v179
    %v216 = vunpack.c.l.b16 %v180
    %v217 = vunpack.c.l.b16 %v181
    %v218 = vunpack.c.l.b16 %v182
    %v219 = vpack.c.b16 %v204, %v203
    %v220 = vpack.c.b16 %v206, %v205
    %v221 = vpack.c.b16 %v208, %v207
    %v222 = vpack.c.b16 %v210, %v209
    %v223 = vpack.c.b16 %v212, %v211
    %v224 = vpack.c.b16 %v214, %v213
    %v225 = vpack.c.b16 %v216, %v215
    %v226 = vpack.c.b16 %v218, %v217
    %235 = vmatpush.bf16.msra.mxu0 %v226
    %236 = vmatpush.bf16.msra.mxu0 %v225
    %237 = vmatpush.bf16.msra.mxu0 %v224
    %238 = vmatpush.bf16.msra.mxu0 %v223
    %239 = vmatpush.bf16.msra.mxu0 %v222
    %240 = vmatpush.bf16.msra.mxu0 %v221
    %241 = vmatpush.bf16.msra.mxu0 %v220
    %242 = vmatpush.bf16.msra.mxu0 %v219
    %243 = vmatmul.bf16.gmra.mxu0 %v159
    %v244 = vpop.f32.mrf.mxu0
    %v245 = vadd.f32 %v185, %v244
    %v246 = vpop.f32.mrf.mxu0
    %v247 = vadd.f32 %v185, %v246
    %248 = vmatmul.bf16.gmra.mxu0 %v160
    %v249 = vpop.f32.mrf.mxu0
    %v250 = vadd.f32 %v185, %v249
    %v251 = vpop.f32.mrf.mxu0
    %v252 = vadd.f32 %v185, %v251
    %253 = vmatmul.bf16.gmra.mxu0 %v161
    %v254 = vpop.f32.mrf.mxu0
    %v255 = vadd.f32 %v185, %v254
    %v256 = vpop.f32.mrf.mxu0
    %v257 = vadd.f32 %v185, %v256
    %258 = vmatmul.bf16.gmra.mxu0 %v162
    %v259 = vpop.f32.mrf.mxu0
    %v260 = vadd.f32 %v185, %v259
    %v261 = vpop.f32.mrf.mxu0
    %v262 = vadd.f32 %v185, %v261
    %263 = vmatmul.bf16.gmra.mxu0 %v163
    %v264 = vpop.f32.mrf.mxu0
    %v265 = vadd.f32 %v185, %v264
    %v266 = vpop.f32.mrf.mxu0
    %v267 = vadd.f32 %v185, %v266
    %268 = vmatmul.bf16.gmra.mxu0 %v164
    %v269 = vpop.f32.mrf.mxu0
    %v270 = vadd.f32 %v185, %v269
    %v271 = vpop.f32.mrf.mxu0
    %v272 = vadd.f32 %v185, %v271
    %273 = vmatmul.bf16.gmra.mxu0 %v165
    %v274 = vpop.f32.mrf.mxu0
    %v275 = vadd.f32 %v185, %v274
    %v276 = vpop.f32.mrf.mxu0
    %v277 = vadd.f32 %v185, %v276
    %278 = vmatmul.bf16.gmra.mxu0 %v166
    %v279 = vpop.f32.mrf.mxu0
    %v280 = vadd.f32 %v185, %v279
    %v281 = vpop.f32.mrf.mxu0
    %v282 = vadd.f32 %v185, %v281
    %283 = vdwg.mxu0
    %v284 = vadd.f32 %v143, %v245
    %v285 = vadd.f32 %v144, %v247
    %v286 = vadd.f32 %v145, %v250
    %v287 = vadd.f32 %v146, %v252
    %v288 = vadd.f32 %v147, %v255
    %v289 = vadd.f32 %v148, %v257
    %v290 = vadd.f32 %v149, %v260
    %v291 = vadd.f32 %v150, %v262
    %v292 = vadd.f32 %v151, %v265
    %v293 = vadd.f32 %v152, %v267
    %v294 = vadd.f32 %v153, %v270
    %v295 = vadd.f32 %v154, %v272
    %v296 = vadd.f32 %v155, %v275
    %v297 = vadd.f32 %v156, %v277
    %v298 = vadd.f32 %v157, %v280
    %v299 = vadd.f32 %v158, %v282
    %v300 = vld [vmem:[#allocation7] sm:$0xff]
    %v301 = vld [vmem:[#allocation7 + $0x8] sm:$0xf]
    %v302 = vld [vmem:[#allocation7 + $0xc] sm:$0xff]
    %v303 = vld [vmem:[#allocation7 + $0x14] sm:$0xf]
    %v304 = vld [vmem:[#allocation7 + $0x18] sm:$0xff]
    %v305 = vld [vmem:[#allocation7 + $0x20] sm:$0xf]
    %v306 = vld [vmem:[#allocation7 + $0x24] sm:$0xff]
    %v307 = vld [vmem:[#allocation7 + $0x2c] sm:$0xf]
    %v308 = vld [vmem:[#allocation7 + $0x30] sm:$0xff]
    %v309 = vld [vmem:[#allocation7 + $0x38] sm:$0xf]
    %v310 = vld [vmem:[#allocation7 + $0x3c] sm:$0xff]
    %v311 = vld [vmem:[#allocation7 + $0x44] sm:$0xf]
    %v312 = vld [vmem:[#allocation7 + $0x48] sm:$0xff]
    %v313 = vld [vmem:[#allocation7 + $0x50] sm:$0xf]
    %v314 = vld [vmem:[#allocation7 + $0x54] sm:$0xff]
    %v315 = vld [vmem:[#allocation7 + $0x5c] sm:$0xf]
    %v316 = vld [vmem:[#allocation7 + $0x60] sm:$0xff]
    %v317 = vld [vmem:[#allocation7 + $0x68] sm:$0xf]
    %v318 = vld [vmem:[#allocation7 + $0x6c] sm:$0xff]
    %v319 = vld [vmem:[#allocation7 + $0x74] sm:$0xf]
    %v320 = vld [vmem:[#allocation7 + $0x78] sm:$0xff]
    %v321 = vld [vmem:[#allocation7 + $0x80] sm:$0xf]
    %v322 = vld [vmem:[#allocation7 + $0x84] sm:$0xff]
    %v323 = vld [vmem:[#allocation7 + $0x8c] sm:$0xf]
    %v324 = vld [vmem:[#allocation7 + $0x90] sm:$0xff]
    %v325 = vld [vmem:[#allocation7 + $0x98] sm:$0xf]
    %v326 = vld [vmem:[#allocation7 + $0x9c] sm:$0xff]
    %v327 = vld [vmem:[#allocation7 + $0xa4] sm:$0xf]
    %v328 = vld [vmem:[#allocation7 + $0xa8] sm:$0xff]
    %v329 = vld [vmem:[#allocation7 + $0xb0] sm:$0xf]
    %v330 = vld [vmem:[#allocation7 + $0xb4] sm:$0xff]
    %v331 = vld [vmem:[#allocation7 + $0xbc] sm:$0xf]
    %v332 = vld [vmem:[#allocation8] sm:$0x7]
    %v333 = vld [vmem:[#allocation10] sm:$0xf]
    %v334 = vld [vmem:[#allocation10 + $0x4] sm:$0xf]
    %v335 = vld [vmem:[#allocation10 + $0x8] sm:$0xf]
    %v336 = vld [vmem:[#allocation10 + $0xc] sm:$0xf]
    %v337 = vld [vmem:[#allocation10 + $0x10] sm:$0xf]
    %v338 = vld [vmem:[#allocation10 + $0x14] sm:$0xf]
    %v339 = vld [vmem:[#allocation10 + $0x18] sm:$0xf]
    %v340 = vld [vmem:[#allocation10 + $0x1c] sm:$0xf]
    %v341 = vld [vmem:[#allocation10 + $0x20] sm:$0xf]
    %v342 = vld [vmem:[#allocation10 + $0x24] sm:$0xf]
    %v343 = vld [vmem:[#allocation10 + $0x28] sm:$0xf]
    %v344 = vld [vmem:[#allocation10 + $0x2c] sm:$0xf]
    %v345 = vld [vmem:[#allocation10 + $0x30] sm:$0xf]
    %v346 = vld [vmem:[#allocation10 + $0x34] sm:$0xf]
    %v347 = vld [vmem:[#allocation10 + $0x38] sm:$0xf]
    %v348 = vld [vmem:[#allocation10 + $0x3c] sm:$0xf]
    %v349 = vld [vmem:[%s6] sm:$0x1]
    %v350 = vld [vmem:[#allocation11] sm:$0xf]
    %v351 = vld [vmem:[#allocation11 + $0x4] sm:$0xf]
    %v352 = vld [vmem:[#allocation11 + $0x8] sm:$0xf]
    %v353 = vld [vmem:[#allocation11 + $0xc] sm:$0xf]
    %v354 = vld [vmem:[#allocation11 + $0x10] sm:$0xf]
    %v355 = vld [vmem:[#allocation11 + $0x14] sm:$0xf]
    %v356 = vld [vmem:[#allocation11 + $0x18] sm:$0xf]
    %v357 = vld [vmem:[#allocation11 + $0x1c] sm:$0xf]
    %v358 = vld [vmem:[#allocation11 + $0x20] sm:$0xf]
    %v359 = vld [vmem:[#allocation11 + $0x24] sm:$0xf]
    %v360 = vld [vmem:[#allocation11 + $0x28] sm:$0xf]
    %v361 = vld [vmem:[#allocation11 + $0x2c] sm:$0xf]
    %v362 = vld [vmem:[#allocation11 + $0x30] sm:$0xf]
    %v363 = vld [vmem:[#allocation11 + $0x34] sm:$0xf]
    %v364 = vld [vmem:[#allocation11 + $0x38] sm:$0xf]
    %v365 = vld [vmem:[#allocation11 + $0x3c] sm:$0xf]
    %v366 = vld [vmem:[#allocation13] sm:$0xf]
    %v367 = vld [vmem:[#allocation13 + $0x4] sm:$0xf]
    %v368 = vld [vmem:[#allocation13 + $0x8] sm:$0xf]
    %v369 = vld [vmem:[#allocation13 + $0xc] sm:$0xf]
    %v370 = vld [vmem:[#allocation13 + $0x10] sm:$0xf]
    %v371 = vld [vmem:[#allocation13 + $0x14] sm:$0xf]
    %v372 = vld [vmem:[#allocation13 + $0x18] sm:$0xf]
    %v373 = vld [vmem:[#allocation13 + $0x1c] sm:$0xf]
    %v374 = vld [vmem:[#allocation13 + $0x20] sm:$0xf]
    %v375 = vld [vmem:[#allocation13 + $0x24] sm:$0xf]
    %v376 = vld [vmem:[#allocation13 + $0x28] sm:$0xf]
    %v377 = vld [vmem:[#allocation13 + $0x2c] sm:$0xf]
    %v378 = vld [vmem:[#allocation13 + $0x30] sm:$0xf]
    %v379 = vld [vmem:[#allocation13 + $0x34] sm:$0xf]
    %v380 = vld [vmem:[#allocation13 + $0x38] sm:$0xf]
    %v381 = vld [vmem:[#allocation13 + $0x3c] sm:$0xf]
    %v382 = vpack.c.bf16 %v285, %v284
    %v383 = vpack.c.bf16 %v287, %v286
    %v384 = vpack.c.bf16 %v289, %v288
    %v385 = vpack.c.bf16 %v291, %v290
    %v386 = vpack.c.bf16 %v293, %v292
    %v387 = vpack.c.bf16 %v295, %v294
    %v388 = vpack.c.bf16 %v297, %v296
    %v389 = vpack.c.bf16 %v299, %v298
    %v391 = vperm.slane %v332, 0
    %v392 = vperm.slane %v332, 1
    %v393 = vperm.slane %v332, 2
    %v429 = vunpack.c.l.b16 %v300
    %v430 = vunpack.c.h.b16 %v300
    %v431 = vunpack.c.l.b16 %v301
    %v432 = vunpack.c.l.b16 %v302
    %v433 = vunpack.c.h.b16 %v302
    %v434 = vunpack.c.l.b16 %v303
    %v435 = vunpack.c.l.b16 %v304
    %v436 = vunpack.c.h.b16 %v304
    %v437 = vunpack.c.l.b16 %v305
    %v438 = vunpack.c.l.b16 %v306
    %v439 = vunpack.c.h.b16 %v306
    %v440 = vunpack.c.l.b16 %v307
    %v441 = vunpack.c.l.b16 %v308
    %v442 = vunpack.c.h.b16 %v308
    %v443 = vunpack.c.l.b16 %v309
    %v444 = vunpack.c.l.b16 %v310
    %v445 = vunpack.c.h.b16 %v310
    %v446 = vunpack.c.l.b16 %v311
    %v447 = vunpack.c.l.b16 %v312
    %v448 = vunpack.c.h.b16 %v312
    %v449 = vunpack.c.l.b16 %v313
    %v450 = vunpack.c.l.b16 %v314
    %v451 = vunpack.c.h.b16 %v314
    %v452 = vunpack.c.l.b16 %v315
    %v453 = vunpack.c.l.b16 %v316
    %v454 = vunpack.c.h.b16 %v316
    %v455 = vunpack.c.l.b16 %v317
    %v456 = vunpack.c.l.b16 %v318
    %v457 = vunpack.c.h.b16 %v318
    %v458 = vunpack.c.l.b16 %v319
    %v459 = vunpack.c.l.b16 %v320
    %v460 = vunpack.c.h.b16 %v320
    %v461 = vunpack.c.l.b16 %v321
    %v462 = vunpack.c.l.b16 %v322
    %v463 = vunpack.c.h.b16 %v322
    %v464 = vunpack.c.l.b16 %v323
    %v465 = vunpack.c.l.b16 %v324
    %v466 = vunpack.c.h.b16 %v324
    %v467 = vunpack.c.l.b16 %v325
    %v468 = vunpack.c.l.b16 %v326
    %v469 = vunpack.c.h.b16 %v326
    %v470 = vunpack.c.l.b16 %v327
    %v471 = vunpack.c.l.b16 %v328
    %v472 = vunpack.c.h.b16 %v328
    %v473 = vunpack.c.l.b16 %v329
    %v474 = vunpack.c.l.b16 %v330
    %v475 = vunpack.c.h.b16 %v330
    %v476 = vunpack.c.l.b16 %v331
    %v477 = vpack.c.b16 %v432, %v429
    %v478 = vpack.c.b16 %v433, %v430
    %v479 = vpack.c.b16 %v434, %v431
    %v480 = vpack.c.b16 %v438, %v435
    %v481 = vpack.c.b16 %v439, %v436
    %v482 = vpack.c.b16 %v440, %v437
    %v483 = vpack.c.b16 %v444, %v441
    %v484 = vpack.c.b16 %v445, %v442
    %v485 = vpack.c.b16 %v446, %v443
    %v486 = vpack.c.b16 %v450, %v447
    %v487 = vpack.c.b16 %v451, %v448
    %v488 = vpack.c.b16 %v452, %v449
    %v489 = vpack.c.b16 %v456, %v453
    %v490 = vpack.c.b16 %v457, %v454
    %v491 = vpack.c.b16 %v458, %v455
    %v492 = vpack.c.b16 %v462, %v459
    %v493 = vpack.c.b16 %v463, %v460
    %v494 = vpack.c.b16 %v464, %v461
    %v495 = vpack.c.b16 %v468, %v465
    %v496 = vpack.c.b16 %v469, %v466
    %v497 = vpack.c.b16 %v470, %v467
    %v498 = vpack.c.b16 %v474, %v471
    %v499 = vpack.c.b16 %v475, %v472
    %v500 = vpack.c.b16 %v476, %v473
    %525 = vmatpush.bf16.msra.mxu0 %v498
    %526 = vmatpush.bf16.msra.mxu0 %v495
    %527 = vmatpush.bf16.msra.mxu0 %v492
    %528 = vmatpush.bf16.msra.mxu0 %v489
    %529 = vmatpush.bf16.msra.mxu0 %v486
    %530 = vmatpush.bf16.msra.mxu0 %v483
    %531 = vmatpush.bf16.msra.mxu0 %v480
    %532 = vmatpush.bf16.msra.mxu0 %v477
    %533 = vmatmul.bf16.gmra.mxu0 %v382
    %v534 = vpop.f32.mrf.mxu0
    %v535 = vadd.f32 %v391, %v534
    %v536 = vpop.f32.mrf.mxu0
    %v537 = vadd.f32 %v391, %v536
    %538 = vmatmul.bf16.gmra.mxu0 %v383
    %v539 = vpop.f32.mrf.mxu0
    %v540 = vadd.f32 %v391, %v539
    %v541 = vpop.f32.mrf.mxu0
    %v542 = vadd.f32 %v391, %v541
    %543 = vmatmul.bf16.gmra.mxu0 %v384
    %v544 = vpop.f32.mrf.mxu0
    %v545 = vadd.f32 %v391, %v544
    %v546 = vpop.f32.mrf.mxu0
    %v547 = vadd.f32 %v391, %v546
    %548 = vmatmul.bf16.gmra.mxu0 %v385
    %v549 = vpop.f32.mrf.mxu0
    %v550 = vadd.f32 %v391, %v549
    %v551 = vpop.f32.mrf.mxu0
    %v552 = vadd.f32 %v391, %v551
    %553 = vmatmul.bf16.gmra.mxu0 %v386
    %v554 = vpop.f32.mrf.mxu0
    %v555 = vadd.f32 %v391, %v554
    %v556 = vpop.f32.mrf.mxu0
    %v557 = vadd.f32 %v391, %v556
    %558 = vmatmul.bf16.gmra.mxu0 %v387
    %v559 = vpop.f32.mrf.mxu0
    %v560 = vadd.f32 %v391, %v559
    %v561 = vpop.f32.mrf.mxu0
    %v562 = vadd.f32 %v391, %v561
    %563 = vmatmul.bf16.gmra.mxu0 %v388
    %v564 = vpop.f32.mrf.mxu0
    %v565 = vadd.f32 %v391, %v564
    %v566 = vpop.f32.mrf.mxu0
    %v567 = vadd.f32 %v391, %v566
    %568 = vmatmul.bf16.gmra.mxu0 %v389
    %v569 = vpop.f32.mrf.mxu0
    %v570 = vadd.f32 %v391, %v569
    %v571 = vpop.f32.mrf.mxu0
    %v572 = vadd.f32 %v391, %v571
    %573 = vdwg.mxu0
    %574 = vmatpush.bf16.msra.mxu0 %v499
    %575 = vmatpush.bf16.msra.mxu0 %v496
    %576 = vmatpush.bf16.msra.mxu0 %v493
    %577 = vmatpush.bf16.msra.mxu0 %v490
    %578 = vmatpush.bf16.msra.mxu0 %v487
    %579 = vmatpush.bf16.msra.mxu0 %v484
    %580 = vmatpush.bf16.msra.mxu0 %v481
    %581 = vmatpush.bf16.msra.mxu0 %v478
    %582 = vmatmul.bf16.gmra.mxu0 %v382
    %v583 = vpop.f32.mrf.mxu0
    %v584 = vadd.f32 %v392, %v583
    %v585 = vpop.f32.mrf.mxu0
    %v586 = vadd.f32 %v392, %v585
    %587 = vmatmul.bf16.gmra.mxu0 %v383
    %v588 = vpop.f32.mrf.mxu0
    %v589 = vadd.f32 %v392, %v588
    %v590 = vpop.f32.mrf.mxu0
    %v591 = vadd.f32 %v392, %v590
    %592 = vmatmul.bf16.gmra.mxu0 %v384
    %v593 = vpop.f32.mrf.mxu0
    %v594 = vadd.f32 %v392, %v593
    %v595 = vpop.f32.mrf.mxu0
    %v596 = vadd.f32 %v392, %v595
    %597 = vmatmul.bf16.gmra.mxu0 %v385
    %v598 = vpop.f32.mrf.mxu0
    %v599 = vadd.f32 %v392, %v598
    %v600 = vpop.f32.mrf.mxu0
    %v601 = vadd.f32 %v392, %v600
    %602 = vmatmul.bf16.gmra.mxu0 %v386
    %v603 = vpop.f32.mrf.mxu0
    %v604 = vadd.f32 %v392, %v603
    %v605 = vpop.f32.mrf.mxu0
    %v606 = vadd.f32 %v392, %v605
    %607 = vmatmul.bf16.gmra.mxu0 %v387
    %v608 = vpop.f32.mrf.mxu0
    %v609 = vadd.f32 %v392, %v608
    %v610 = vpop.f32.mrf.mxu0
    %v611 = vadd.f32 %v392, %v610
    %612 = vmatmul.bf16.gmra.mxu0 %v388
    %v613 = vpop.f32.mrf.mxu0
    %v614 = vadd.f32 %v392, %v613
    %v615 = vpop.f32.mrf.mxu0
    %v616 = vadd.f32 %v392, %v615
    %617 = vmatmul.bf16.gmra.mxu0 %v389
    %v618 = vpop.f32.mrf.mxu0
    %v619 = vadd.f32 %v392, %v618
    %v620 = vpop.f32.mrf.mxu0
    %v621 = vadd.f32 %v392, %v620
    %622 = vdwg.mxu0
    %623 = vmatpush.bf16.msra.mxu0 %v500
    %624 = vmatpush.bf16.msra.mxu0 %v497
    %625 = vmatpush.bf16.msra.mxu0 %v494
    %626 = vmatpush.bf16.msra.mxu0 %v491
    %627 = vmatpush.bf16.msra.mxu0 %v488
    %628 = vmatpush.bf16.msra.mxu0 %v485
    %629 = vmatpush.bf16.msra.mxu0 %v482
    %630 = vmatpush.bf16.msra.mxu0 %v479
    %631 = vmatmul.bf16.gmra.mxu0 %v382
    %v632 = vpop.f32.mrf.mxu0
    %v633 = vadd.f32 %v393, %v632
    %v634 = vpop.f32.mrf.mxu0
    %v635 = vadd.f32 %v393, %v634
    %636 = vmatmul.bf16.gmra.mxu0 %v383
    %v637 = vpop.f32.mrf.mxu0
    %v638 = vadd.f32 %v393, %v637
    %v639 = vpop.f32.mrf.mxu0
    %v640 = vadd.f32 %v393, %v639
    %641 = vmatmul.bf16.gmra.mxu0 %v384
    %v642 = vpop.f32.mrf.mxu0
    %v643 = vadd.f32 %v393, %v642
    %v644 = vpop.f32.mrf.mxu0
    %v645 = vadd.f32 %v393, %v644
    %646 = vmatmul.bf16.gmra.mxu0 %v385
    %v647 = vpop.f32.mrf.mxu0
    %v648 = vadd.f32 %v393, %v647
    %v649 = vpop.f32.mrf.mxu0
    %v650 = vadd.f32 %v393, %v649
    %651 = vmatmul.bf16.gmra.mxu0 %v386
    %v652 = vpop.f32.mrf.mxu0
    %v653 = vadd.f32 %v393, %v652
    %v654 = vpop.f32.mrf.mxu0
    %v655 = vadd.f32 %v393, %v654
    %656 = vmatmul.bf16.gmra.mxu0 %v387
    %v657 = vpop.f32.mrf.mxu0
    %v658 = vadd.f32 %v393, %v657
    %v659 = vpop.f32.mrf.mxu0
    %v660 = vadd.f32 %v393, %v659
    %661 = vmatmul.bf16.gmra.mxu0 %v388
    %v662 = vpop.f32.mrf.mxu0
    %v663 = vadd.f32 %v393, %v662
    %v664 = vpop.f32.mrf.mxu0
    %v665 = vadd.f32 %v393, %v664
    %666 = vmatmul.bf16.gmra.mxu0 %v389
    %v667 = vpop.f32.mrf.mxu0
    %v668 = vadd.f32 %v393, %v667
    %v669 = vpop.f32.mrf.mxu0
    %v670 = vadd.f32 %v393, %v669
    %671 = vdwg.mxu0
    %v672 = vpack.c.bf16 %v535, %v535
    %v673 = vpack.c.bf16 %v537, %v537
    %v674 = vpack.c.bf16 %v540, %v540
    %v675 = vpack.c.bf16 %v542, %v542
    %v676 = vpack.c.bf16 %v545, %v545
    %v677 = vpack.c.bf16 %v547, %v547
    %v678 = vpack.c.bf16 %v550, %v550
    %v679 = vpack.c.bf16 %v552, %v552
    %v680 = vpack.c.bf16 %v555, %v555
    %v681 = vpack.c.bf16 %v557, %v557
    %v682 = vpack.c.bf16 %v560, %v560
    %v683 = vpack.c.bf16 %v562, %v562
    %v684 = vpack.c.bf16 %v565, %v565
    %v685 = vpack.c.bf16 %v567, %v567
    %v686 = vpack.c.bf16 %v570, %v570
    %v687 = vpack.c.bf16 %v572, %v572
    %v688 = vpack.c.bf16 %v584, %v584
    %v689 = vpack.c.bf16 %v586, %v586
    %v690 = vpack.c.bf16 %v589, %v589
    %v691 = vpack.c.bf16 %v591, %v591
    %v692 = vpack.c.bf16 %v594, %v594
    %v693 = vpack.c.bf16 %v596, %v596
    %v694 = vpack.c.bf16 %v599, %v599
    %v695 = vpack.c.bf16 %v601, %v601
    %v696 = vpack.c.bf16 %v604, %v604
    %v697 = vpack.c.bf16 %v606, %v606
    %v698 = vpack.c.bf16 %v609, %v609
    %v699 = vpack.c.bf16 %v611, %v611
    %v700 = vpack.c.bf16 %v614, %v614
    %v701 = vpack.c.bf16 %v616, %v616
    %v702 = vpack.c.bf16 %v619, %v619
    %v703 = vpack.c.bf16 %v621, %v621
    %v704 = vpack.c.bf16 %v633, %v633
    %v705 = vpack.c.bf16 %v635, %v635
    %v706 = vpack.c.bf16 %v638, %v638
    %v707 = vpack.c.bf16 %v640, %v640
    %v708 = vpack.c.bf16 %v643, %v643
    %v709 = vpack.c.bf16 %v645, %v645
    %v710 = vpack.c.bf16 %v648, %v648
    %v711 = vpack.c.bf16 %v650, %v650
    %v712 = vpack.c.bf16 %v653, %v653
    %v713 = vpack.c.bf16 %v655, %v655
    %v714 = vpack.c.bf16 %v658, %v658
    %v715 = vpack.c.bf16 %v660, %v660
    %v716 = vpack.c.bf16 %v663, %v663
    %v717 = vpack.c.bf16 %v665, %v665
    %v718 = vpack.c.bf16 %v668, %v668
    %v719 = vpack.c.bf16 %v670, %v670
    %v728 = vunpack.c.l.b16 %v672
    %v729 = vunpack.c.l.b16 %v673
    %v730 = vunpack.c.l.b16 %v674
    %v731 = vunpack.c.l.b16 %v675
    %v732 = vunpack.c.l.b16 %v676
    %v733 = vunpack.c.l.b16 %v677
    %v734 = vunpack.c.l.b16 %v678
    %v735 = vunpack.c.l.b16 %v679
    %v736 = vpack.c.b16 %v729, %v728
    %v737 = vpack.c.b16 %v731, %v730
    %v738 = vpack.c.b16 %v733, %v732
    %v739 = vpack.c.b16 %v735, %v734
    %v748 = vunpack.c.l.b16 %v688
    %v749 = vunpack.c.l.b16 %v689
    %v750 = vunpack.c.l.b16 %v690
    %v751 = vunpack.c.l.b16 %v691
    %v752 = vunpack.c.l.b16 %v692
    %v753 = vunpack.c.l.b16 %v693
    %v754 = vunpack.c.l.b16 %v694
    %v755 = vunpack.c.l.b16 %v695
    %v756 = vpack.c.b16 %v749, %v748
    %v757 = vpack.c.b16 %v751, %v750
    %v758 = vpack.c.b16 %v753, %v752
    %v759 = vpack.c.b16 %v755, %v754
    %vm760 = vcmask 261120
    %v762 = vsel %vm760, %v736, 0
    %v765 = vsel %vm760, %v737, 0
    %v768 = vsel %vm760, %v738, 0
    %v771 = vsel %vm760, %v739, 0
    %v774 = vsel %vm760, %v756, 0
    %v777 = vsel %vm760, %v757, 0
    %v780 = vsel %vm760, %v758, 0
    %v783 = vsel %vm760, %v759, 0
    %785 = vmatpush.bf16.xpose.msra.mxu0 0
    %786 = vmatpush.bf16.xpose.msra.mxu0 0
    %787 = vmatpush.bf16.xpose.msra.mxu0 0
    %788 = vmatpush.bf16.xpose.msra.mxu0 0
    %789 = vmatpush.bf16.xpose.msra.mxu0 %v783
    %790 = vmatpush.bf16.xpose.msra.mxu0 %v780
    %791 = vmatpush.bf16.xpose.msra.mxu0 %v777
    %792 = vmatpush.bf16.xpose.msra.mxu0 %v774
    %793 = vmatmul.bf16.gmra.mxu0 %v762
    %v794 = vpop.f32.mrf.mxu0
    %v795 = vadd.f32 0.0, %v794
    %v796 = vpop.f32.mrf.mxu0
    %v797 = vadd.f32 0.0, %v796
    %798 = vmatmul.bf16.gmra.mxu0 %v765
    %v799 = vpop.f32.mrf.mxu0
    %v800 = vadd.f32 0.0, %v799
    %v801 = vpop.f32.mrf.mxu0
    %v802 = vadd.f32 0.0, %v801
    %803 = vmatmul.bf16.gmra.mxu0 %v768
    %v804 = vpop.f32.mrf.mxu0
    %v805 = vadd.f32 0.0, %v804
    %v806 = vpop.f32.mrf.mxu0
    %v807 = vadd.f32 0.0, %v806
    %808 = vmatmul.bf16.gmra.mxu0 %v771
    %v809 = vpop.f32.mrf.mxu0
    %v810 = vadd.f32 0.0, %v809
    %v811 = vpop.f32.mrf.mxu0
    %v812 = vadd.f32 0.0, %v811
    %813 = vdwg.mxu0
    %814 = vrot.lane.b32.xlu0 %v736, 96
    %v815 = vpop.permute.xlu0 %814
    %816 = vrot.lane.b32.xlu0 %v737, 96
    %v817 = vpop.permute.xlu0 %816
    %818 = vrot.lane.b32.xlu0 %v738, 96
    %v819 = vpop.permute.xlu0 %818
    %820 = vrot.lane.b32.xlu0 %v739, 96
    %v821 = vpop.permute.xlu0 %820
    %822 = vrot.lane.b32.xlu0 %v756, 96
    %v823 = vpop.permute.xlu0 %822
    %824 = vrot.lane.b32.xlu0 %v757, 96
    %v825 = vpop.permute.xlu0 %824
    %826 = vrot.lane.b32.xlu0 %v758, 96
    %v827 = vpop.permute.xlu0 %826
    %828 = vrot.lane.b32.xlu0 %v759, 96
    %v829 = vpop.permute.xlu0 %828
    %v831 = vsel %vm760, %v815, 0
    %v834 = vsel %vm760, %v817, 0
    %v837 = vsel %vm760, %v819, 0
    %v840 = vsel %vm760, %v821, 0
    %v843 = vsel %vm760, %v823, 0
    %v846 = vsel %vm760, %v825, 0
    %v849 = vsel %vm760, %v827, 0
    %v852 = vsel %vm760, %v829, 0
    %854 = vmatpush.bf16.xpose.msra.mxu0 0
    %855 = vmatpush.bf16.xpose.msra.mxu0 0
    %856 = vmatpush.bf16.xpose.msra.mxu0 0
    %857 = vmatpush.bf16.xpose.msra.mxu0 0
    %858 = vmatpush.bf16.xpose.msra.mxu0 %v852
    %859 = vmatpush.bf16.xpose.msra.mxu0 %v849
    %860 = vmatpush.bf16.xpose.msra.mxu0 %v846
    %861 = vmatpush.bf16.xpose.msra.mxu0 %v843
    %862 = vmatmul.bf16.gmra.mxu0 %v831
    %v863 = vpop.f32.mrf.mxu0
    %v864 = vadd.f32 0.0, %v863
    %v865 = vpop.f32.mrf.mxu0
    %v866 = vadd.f32 0.0, %v865
    %867 = vmatmul.bf16.gmra.mxu0 %v834
    %v868 = vpop.f32.mrf.mxu0
    %v869 = vadd.f32 0.0, %v868
    %v870 = vpop.f32.mrf.mxu0
    %v871 = vadd.f32 0.0, %v870
    %872 = vmatmul.bf16.gmra.mxu0 %v837
    %v873 = vpop.f32.mrf.mxu0
    %v874 = vadd.f32 0.0, %v873
    %v875 = vpop.f32.mrf.mxu0
    %v876 = vadd.f32 0.0, %v875
    %877 = vmatmul.bf16.gmra.mxu0 %v840
    %v878 = vpop.f32.mrf.mxu0
    %v879 = vadd.f32 0.0, %v878
    %v880 = vpop.f32.mrf.mxu0
    %v881 = vadd.f32 0.0, %v880
    %882 = vdwg.mxu0
    %883 = vrot.lane.b32.xlu0 %v736, 64
    %v884 = vpop.permute.xlu0 %883
    %885 = vrot.lane.b32.xlu0 %v737, 64
    %v886 = vpop.permute.xlu0 %885
    %887 = vrot.lane.b32.xlu0 %v738, 64
    %v888 = vpop.permute.xlu0 %887
    %889 = vrot.lane.b32.xlu0 %v739, 64
    %v890 = vpop.permute.xlu0 %889
    %891 = vrot.lane.b32.xlu0 %v756, 64
    %v892 = vpop.permute.xlu0 %891
    %893 = vrot.lane.b32.xlu0 %v757, 64
    %v894 = vpop.permute.xlu0 %893
    %895 = vrot.lane.b32.xlu0 %v758, 64
    %v896 = vpop.permute.xlu0 %895
    %897 = vrot.lane.b32.xlu0 %v759, 64
    %v898 = vpop.permute.xlu0 %897
    %v900 = vsel %vm760, %v884, 0
    %v903 = vsel %vm760, %v886, 0
    %v906 = vsel %vm760, %v888, 0
    %v909 = vsel %vm760, %v890, 0
    %v912 = vsel %vm760, %v892, 0
    %v915 = vsel %vm760, %v894, 0
    %v918 = vsel %vm760, %v896, 0
    %v921 = vsel %vm760, %v898, 0
    %923 = vmatpush.bf16.xpose.msra.mxu0 0
    %924 = vmatpush.bf16.xpose.msra.mxu0 0
    %925 = vmatpush.bf16.xpose.msra.mxu0 0
    %926 = vmatpush.bf16.xpose.msra.mxu0 0
    %927 = vmatpush.bf16.xpose.msra.mxu0 %v921
    %928 = vmatpush.bf16.xpose.msra.mxu0 %v918
    %929 = vmatpush.bf16.xpose.msra.mxu0 %v915
    %930 = vmatpush.bf16.xpose.msra.mxu0 %v912
    %931 = vmatmul.bf16.gmra.mxu0 %v900
    %v932 = vpop.f32.mrf.mxu0
    %v933 = vadd.f32 0.0, %v932
    %v934 = vpop.f32.mrf.mxu0
    %v935 = vadd.f32 0.0, %v934
    %936 = vmatmul.bf16.gmra.mxu0 %v903
    %v937 = vpop.f32.mrf.mxu0
    %v938 = vadd.f32 0.0, %v937
    %v939 = vpop.f32.mrf.mxu0
    %v940 = vadd.f32 0.0, %v939
    %941 = vmatmul.bf16.gmra.mxu0 %v906
    %v942 = vpop.f32.mrf.mxu0
    %v943 = vadd.f32 0.0, %v942
    %v944 = vpop.f32.mrf.mxu0
    %v945 = vadd.f32 0.0, %v944
    %946 = vmatmul.bf16.gmra.mxu0 %v909
    %v947 = vpop.f32.mrf.mxu0
    %v948 = vadd.f32 0.0, %v947
    %v949 = vpop.f32.mrf.mxu0
    %v950 = vadd.f32 0.0, %v949
    %951 = vdwg.mxu0
    %952 = vrot.lane.b32.xlu0 %v736, 32
    %v953 = vpop.permute.xlu0 %952
    %954 = vrot.lane.b32.xlu0 %v737, 32
    %v955 = vpop.permute.xlu0 %954
    %956 = vrot.lane.b32.xlu0 %v738, 32
    %v957 = vpop.permute.xlu0 %956
    %958 = vrot.lane.b32.xlu0 %v739, 32
    %v959 = vpop.permute.xlu0 %958
    %960 = vrot.lane.b32.xlu0 %v756, 32
    %v961 = vpop.permute.xlu0 %960
    %962 = vrot.lane.b32.xlu0 %v757, 32
    %v963 = vpop.permute.xlu0 %962
    %964 = vrot.lane.b32.xlu0 %v758, 32
    %v965 = vpop.permute.xlu0 %964
    %966 = vrot.lane.b32.xlu0 %v759, 32
    %v967 = vpop.permute.xlu0 %966
    %v969 = vsel %vm760, %v953, 0
    %v972 = vsel %vm760, %v955, 0
    %v975 = vsel %vm760, %v957, 0
    %v978 = vsel %vm760, %v959, 0
    %v981 = vsel %vm760, %v961, 0
    %v984 = vsel %vm760, %v963, 0
    %v987 = vsel %vm760, %v965, 0
    %v990 = vsel %vm760, %v967, 0
    %992 = vmatpush.bf16.xpose.msra.mxu0 0
    %993 = vmatpush.bf16.xpose.msra.mxu0 0
    %994 = vmatpush.bf16.xpose.msra.mxu0 0
    %995 = vmatpush.bf16.xpose.msra.mxu0 0
    %996 = vmatpush.bf16.xpose.msra.mxu0 %v990
    %997 = vmatpush.bf16.xpose.msra.mxu0 %v987
    %998 = vmatpush.bf16.xpose.msra.mxu0 %v984
    %999 = vmatpush.bf16.xpose.msra.mxu0 %v981
    %1000 = vmatmul.bf16.gmra.mxu0 %v969
    %v1001 = vpop.f32.mrf.mxu0
    %v1002 = vadd.f32 0.0, %v1001
    %v1003 = vpop.f32.mrf.mxu0
    %v1004 = vadd.f32 0.0, %v1003
    %1005 = vmatmul.bf16.gmra.mxu0 %v972
    %v1006 = vpop.f32.mrf.mxu0
    %v1007 = vadd.f32 0.0, %v1006
    %v1008 = vpop.f32.mrf.mxu0
    %v1009 = vadd.f32 0.0, %v1008
    %1010 = vmatmul.bf16.gmra.mxu0 %v975
    %v1011 = vpop.f32.mrf.mxu0
    %v1012 = vadd.f32 0.0, %v1011
    %v1013 = vpop.f32.mrf.mxu0
    %v1014 = vadd.f32 0.0, %v1013
    %1015 = vmatmul.bf16.gmra.mxu0 %v978
    %v1016 = vpop.f32.mrf.mxu0
    %v1017 = vadd.f32 0.0, %v1016
    %v1018 = vpop.f32.mrf.mxu0
    %v1019 = vadd.f32 0.0, %v1018
    %1020 = vdwg.mxu0
    %v1029 = vunpack.c.l.b16 %v680
    %v1030 = vunpack.c.l.b16 %v681
    %v1031 = vunpack.c.l.b16 %v682
    %v1032 = vunpack.c.l.b16 %v683
    %v1033 = vunpack.c.l.b16 %v684
    %v1034 = vunpack.c.l.b16 %v685
    %v1035 = vunpack.c.l.b16 %v686
    %v1036 = vunpack.c.l.b16 %v687
    %v1037 = vpack.c.b16 %v1030, %v1029
    %v1038 = vpack.c.b16 %v1032, %v1031
    %v1039 = vpack.c.b16 %v1034, %v1033
    %v1040 = vpack.c.b16 %v1036, %v1035
    %v1049 = vunpack.c.l.b16 %v696
    %v1050 = vunpack.c.l.b16 %v697
    %v1051 = vunpack.c.l.b16 %v698
    %v1052 = vunpack.c.l.b16 %v699
    %v1053 = vunpack.c.l.b16 %v700
    %v1054 = vunpack.c.l.b16 %v701
    %v1055 = vunpack.c.l.b16 %v702
    %v1056 = vunpack.c.l.b16 %v703
    %v1057 = vpack.c.b16 %v1050, %v1049
    %v1058 = vpack.c.b16 %v1052, %v1051
    %v1059 = vpack.c.b16 %v1054, %v1053
    %v1060 = vpack.c.b16 %v1056, %v1055
    %v1062 = vsel %vm760, %v1037, 0
    %v1065 = vsel %vm760, %v1038, 0
    %v1068 = vsel %vm760, %v1039, 0
    %v1071 = vsel %vm760, %v1040, 0
    %v1074 = vsel %vm760, %v1057, 0
    %v1077 = vsel %vm760, %v1058, 0
    %v1080 = vsel %vm760, %v1059, 0
    %v1083 = vsel %vm760, %v1060, 0
    %1085 = vmatpush.bf16.xpose.msra.mxu0 0
    %1086 = vmatpush.bf16.xpose.msra.mxu0 0
    %1087 = vmatpush.bf16.xpose.msra.mxu0 0
    %1088 = vmatpush.bf16.xpose.msra.mxu0 0
    %1089 = vmatpush.bf16.xpose.msra.mxu0 %v1083
    %1090 = vmatpush.bf16.xpose.msra.mxu0 %v1080
    %1091 = vmatpush.bf16.xpose.msra.mxu0 %v1077
    %1092 = vmatpush.bf16.xpose.msra.mxu0 %v1074
    %1093 = vmatmul.bf16.gmra.mxu0 %v1062
    %v1094 = vpop.f32.mrf.mxu0
    %v1095 = vadd.f32 0.0, %v1094
    %v1096 = vpop.f32.mrf.mxu0
    %v1097 = vadd.f32 0.0, %v1096
    %1098 = vmatmul.bf16.gmra.mxu0 %v1065
    %v1099 = vpop.f32.mrf.mxu0
    %v1100 = vadd.f32 0.0, %v1099
    %v1101 = vpop.f32.mrf.mxu0
    %v1102 = vadd.f32 0.0, %v1101
    %1103 = vmatmul.bf16.gmra.mxu0 %v1068
    %v1104 = vpop.f32.mrf.mxu0
    %v1105 = vadd.f32 0.0, %v1104
    %v1106 = vpop.f32.mrf.mxu0
    %v1107 = vadd.f32 0.0, %v1106
    %1108 = vmatmul.bf16.gmra.mxu0 %v1071
    %v1109 = vpop.f32.mrf.mxu0
    %v1110 = vadd.f32 0.0, %v1109
    %v1111 = vpop.f32.mrf.mxu0
    %v1112 = vadd.f32 0.0, %v1111
    %1113 = vdwg.mxu0
    %1114 = vrot.lane.b32.xlu0 %v1037, 96
    %v1115 = vpop.permute.xlu0 %1114
    %1116 = vrot.lane.b32.xlu0 %v1038, 96
    %v1117 = vpop.permute.xlu0 %1116
    %1118 = vrot.lane.b32.xlu0 %v1039, 96
    %v1119 = vpop.permute.xlu0 %1118
    %1120 = vrot.lane.b32.xlu0 %v1040, 96
    %v1121 = vpop.permute.xlu0 %1120
    %1122 = vrot.lane.b32.xlu0 %v1057, 96
    %v1123 = vpop.permute.xlu0 %1122
    %1124 = vrot.lane.b32.xlu0 %v1058, 96
    %v1125 = vpop.permute.xlu0 %1124
    %1126 = vrot.lane.b32.xlu0 %v1059, 96
    %v1127 = vpop.permute.xlu0 %1126
    %1128 = vrot.lane.b32.xlu0 %v1060, 96
    %v1129 = vpop.permute.xlu0 %1128
    %v1131 = vsel %vm760, %v1115, 0
    %v1134 = vsel %vm760, %v1117, 0
    %v1137 = vsel %vm760, %v1119, 0
    %v1140 = vsel %vm760, %v1121, 0
    %v1143 = vsel %vm760, %v1123, 0
    %v1146 = vsel %vm760, %v1125, 0
    %v1149 = vsel %vm760, %v1127, 0
    %v1152 = vsel %vm760, %v1129, 0
    %1154 = vmatpush.bf16.xpose.msra.mxu0 0
    %1155 = vmatpush.bf16.xpose.msra.mxu0 0
    %1156 = vmatpush.bf16.xpose.msra.mxu0 0
    %1157 = vmatpush.bf16.xpose.msra.mxu0 0
    %1158 = vmatpush.bf16.xpose.msra.mxu0 %v1152
    %1159 = vmatpush.bf16.xpose.msra.mxu0 %v1149
    %1160 = vmatpush.bf16.xpose.msra.mxu0 %v1146
    %1161 = vmatpush.bf16.xpose.msra.mxu0 %v1143
    %1162 = vmatmul.bf16.gmra.mxu0 %v1131
    %v1163 = vpop.f32.mrf.mxu0
    %v1164 = vadd.f32 0.0, %v1163
    %v1165 = vpop.f32.mrf.mxu0
    %v1166 = vadd.f32 0.0, %v1165
    %1167 = vmatmul.bf16.gmra.mxu0 %v1134
    %v1168 = vpop.f32.mrf.mxu0
    %v1169 = vadd.f32 0.0, %v1168
    %v1170 = vpop.f32.mrf.mxu0
    %v1171 = vadd.f32 0.0, %v1170
    %1172 = vmatmul.bf16.gmra.mxu0 %v1137
    %v1173 = vpop.f32.mrf.mxu0
    %v1174 = vadd.f32 0.0, %v1173
    %v1175 = vpop.f32.mrf.mxu0
    %v1176 = vadd.f32 0.0, %v1175
    %1177 = vmatmul.bf16.gmra.mxu0 %v1140
    %v1178 = vpop.f32.mrf.mxu0
    %v1179 = vadd.f32 0.0, %v1178
    %v1180 = vpop.f32.mrf.mxu0
    %v1181 = vadd.f32 0.0, %v1180
    %1182 = vdwg.mxu0
    %1183 = vrot.lane.b32.xlu0 %v1037, 64
    %v1184 = vpop.permute.xlu0 %1183
    %1185 = vrot.lane.b32.xlu0 %v1038, 64
    %v1186 = vpop.permute.xlu0 %1185
    %1187 = vrot.lane.b32.xlu0 %v1039, 64
    %v1188 = vpop.permute.xlu0 %1187
    %1189 = vrot.lane.b32.xlu0 %v1040, 64
    %v1190 = vpop.permute.xlu0 %1189
    %1191 = vrot.lane.b32.xlu0 %v1057, 64
    %v1192 = vpop.permute.xlu0 %1191
    %1193 = vrot.lane.b32.xlu0 %v1058, 64
    %v1194 = vpop.permute.xlu0 %1193
    %1195 = vrot.lane.b32.xlu0 %v1059, 64
    %v1196 = vpop.permute.xlu0 %1195
    %1197 = vrot.lane.b32.xlu0 %v1060, 64
    %v1198 = vpop.permute.xlu0 %1197
    %v1200 = vsel %vm760, %v1184, 0
    %v1203 = vsel %vm760, %v1186, 0
    %v1206 = vsel %vm760, %v1188, 0
    %v1209 = vsel %vm760, %v1190, 0
    %v1212 = vsel %vm760, %v1192, 0
    %v1215 = vsel %vm760, %v1194, 0
    %v1218 = vsel %vm760, %v1196, 0
    %v1221 = vsel %vm760, %v1198, 0
    %1223 = vmatpush.bf16.xpose.msra.mxu0 0
    %1224 = vmatpush.bf16.xpose.msra.mxu0 0
    %1225 = vmatpush.bf16.xpose.msra.mxu0 0
    %1226 = vmatpush.bf16.xpose.msra.mxu0 0
    %1227 = vmatpush.bf16.xpose.msra.mxu0 %v1221
    %1228 = vmatpush.bf16.xpose.msra.mxu0 %v1218
    %1229 = vmatpush.bf16.xpose.msra.mxu0 %v1215
    %1230 = vmatpush.bf16.xpose.msra.mxu0 %v1212
    %1231 = vmatmul.bf16.gmra.mxu0 %v1200
    %v1232 = vpop.f32.mrf.mxu0
    %v1233 = vadd.f32 0.0, %v1232
    %v1234 = vpop.f32.mrf.mxu0
    %v1235 = vadd.f32 0.0, %v1234
    %1236 = vmatmul.bf16.gmra.mxu0 %v1203
    %v1237 = vpop.f32.mrf.mxu0
    %v1238 = vadd.f32 0.0, %v1237
    %v1239 = vpop.f32.mrf.mxu0
    %v1240 = vadd.f32 0.0, %v1239
    %1241 = vmatmul.bf16.gmra.mxu0 %v1206
    %v1242 = vpop.f32.mrf.mxu0
    %v1243 = vadd.f32 0.0, %v1242
    %v1244 = vpop.f32.mrf.mxu0
    %v1245 = vadd.f32 0.0, %v1244
    %1246 = vmatmul.bf16.gmra.mxu0 %v1209
    %v1247 = vpop.f32.mrf.mxu0
    %v1248 = vadd.f32 0.0, %v1247
    %v1249 = vpop.f32.mrf.mxu0
    %v1250 = vadd.f32 0.0, %v1249
    %1251 = vdwg.mxu0
    %1252 = vrot.lane.b32.xlu0 %v1037, 32
    %v1253 = vpop.permute.xlu0 %1252
    %1254 = vrot.lane.b32.xlu0 %v1038, 32
    %v1255 = vpop.permute.xlu0 %1254
    %1256 = vrot.lane.b32.xlu0 %v1039, 32
    %v1257 = vpop.permute.xlu0 %1256
    %1258 = vrot.lane.b32.xlu0 %v1040, 32
    %v1259 = vpop.permute.xlu0 %1258
    %1260 = vrot.lane.b32.xlu0 %v1057, 32
    %v1261 = vpop.permute.xlu0 %1260
    %1262 = vrot.lane.b32.xlu0 %v1058, 32
    %v1263 = vpop.permute.xlu0 %1262
    %1264 = vrot.lane.b32.xlu0 %v1059, 32
    %v1265 = vpop.permute.xlu0 %1264
    %1266 = vrot.lane.b32.xlu0 %v1060, 32
    %v1267 = vpop.permute.xlu0 %1266
    %v1269 = vsel %vm760, %v1253, 0
    %v1272 = vsel %vm760, %v1255, 0
    %v1275 = vsel %vm760, %v1257, 0
    %v1278 = vsel %vm760, %v1259, 0
    %v1281 = vsel %vm760, %v1261, 0
    %v1284 = vsel %vm760, %v1263, 0
    %v1287 = vsel %vm760, %v1265, 0
    %v1290 = vsel %vm760, %v1267, 0
    %1292 = vmatpush.bf16.xpose.msra.mxu0 0
    %1293 = vmatpush.bf16.xpose.msra.mxu0 0
    %1294 = vmatpush.bf16.xpose.msra.mxu0 0
    %1295 = vmatpush.bf16.xpose.msra.mxu0 0
    %1296 = vmatpush.bf16.xpose.msra.mxu0 %v1290
    %1297 = vmatpush.bf16.xpose.msra.mxu0 %v1287
    %1298 = vmatpush.bf16.xpose.msra.mxu0 %v1284
    %1299 = vmatpush.bf16.xpose.msra.mxu0 %v1281
    %1300 = vmatmul.bf16.gmra.mxu0 %v1269
    %v1301 = vpop.f32.mrf.mxu0
    %v1302 = vadd.f32 0.0, %v1301
    %v1303 = vpop.f32.mrf.mxu0
    %v1304 = vadd.f32 0.0, %v1303
    %1305 = vmatmul.bf16.gmra.mxu0 %v1272
    %v1306 = vpop.f32.mrf.mxu0
    %v1307 = vadd.f32 0.0, %v1306
    %v1308 = vpop.f32.mrf.mxu0
    %v1309 = vadd.f32 0.0, %v1308
    %1310 = vmatmul.bf16.gmra.mxu0 %v1275
    %v1311 = vpop.f32.mrf.mxu0
    %v1312 = vadd.f32 0.0, %v1311
    %v1313 = vpop.f32.mrf.mxu0
    %v1314 = vadd.f32 0.0, %v1313
    %1315 = vmatmul.bf16.gmra.mxu0 %v1278
    %v1316 = vpop.f32.mrf.mxu0
    %v1317 = vadd.f32 0.0, %v1316
    %v1318 = vpop.f32.mrf.mxu0
    %v1319 = vadd.f32 0.0, %v1318
    %1320 = vdwg.mxu0
    %vm1321 = vcmask 523264
    %v1322 = vsel %vm1321, %v795, -inf
    %1323 = vmax.xlane.f32.xlu0 %v1322
    %v1324 = vpop.xlane.xlu0 %1323
    %v1325 = vsel %vm1321, %v797, -inf
    %1326 = vmax.xlane.f32.xlu0 %v1325
    %v1327 = vpop.xlane.xlu0 %1326
    %v1328 = vsel %vm1321, %v800, -inf
    %1329 = vmax.xlane.f32.xlu0 %v1328
    %v1330 = vpop.xlane.xlu0 %1329
    %v1331 = vsel %vm1321, %v802, -inf
    %1332 = vmax.xlane.f32.xlu0 %v1331
    %v1333 = vpop.xlane.xlu0 %1332
    %v1334 = vsel %vm1321, %v805, -inf
    %1335 = vmax.xlane.f32.xlu0 %v1334
    %v1336 = vpop.xlane.xlu0 %1335
    %v1337 = vsel %vm1321, %v807, -inf
    %1338 = vmax.xlane.f32.xlu0 %v1337
    %v1339 = vpop.xlane.xlu0 %1338
    %v1340 = vsel %vm1321, %v810, -inf
    %1341 = vmax.xlane.f32.xlu0 %v1340
    %v1342 = vpop.xlane.xlu0 %1341
    %v1343 = vsel %vm1321, %v812, -inf
    %1344 = vmax.xlane.f32.xlu0 %v1343
    %v1345 = vpop.xlane.xlu0 %1344
    %v1346 = vsel %vm1321, %v864, -inf
    %1347 = vmax.xlane.f32.xlu0 %v1346
    %v1348 = vpop.xlane.xlu0 %1347
    %v1349 = vsel %vm1321, %v866, -inf
    %1350 = vmax.xlane.f32.xlu0 %v1349
    %v1351 = vpop.xlane.xlu0 %1350
    %v1352 = vsel %vm1321, %v869, -inf
    %1353 = vmax.xlane.f32.xlu0 %v1352
    %v1354 = vpop.xlane.xlu0 %1353
    %v1355 = vsel %vm1321, %v871, -inf
    %1356 = vmax.xlane.f32.xlu0 %v1355
    %v1357 = vpop.xlane.xlu0 %1356
    %v1358 = vsel %vm1321, %v874, -inf
    %1359 = vmax.xlane.f32.xlu0 %v1358
    %v1360 = vpop.xlane.xlu0 %1359
    %v1361 = vsel %vm1321, %v876, -inf
    %1362 = vmax.xlane.f32.xlu0 %v1361
    %v1363 = vpop.xlane.xlu0 %1362
    %v1364 = vsel %vm1321, %v879, -inf
    %1365 = vmax.xlane.f32.xlu0 %v1364
    %v1366 = vpop.xlane.xlu0 %1365
    %v1367 = vsel %vm1321, %v881, -inf
    %1368 = vmax.xlane.f32.xlu0 %v1367
    %v1369 = vpop.xlane.xlu0 %1368
    %v1370 = vsel %vm1321, %v933, -inf
    %1371 = vmax.xlane.f32.xlu0 %v1370
    %v1372 = vpop.xlane.xlu0 %1371
    %v1373 = vsel %vm1321, %v935, -inf
    %1374 = vmax.xlane.f32.xlu0 %v1373
    %v1375 = vpop.xlane.xlu0 %1374
    %v1376 = vsel %vm1321, %v938, -inf
    %1377 = vmax.xlane.f32.xlu0 %v1376
    %v1378 = vpop.xlane.xlu0 %1377
    %v1379 = vsel %vm1321, %v940, -inf
    %1380 = vmax.xlane.f32.xlu0 %v1379
    %v1381 = vpop.xlane.xlu0 %1380
    %v1382 = vsel %vm1321, %v943, -inf
    %1383 = vmax.xlane.f32.xlu0 %v1382
    %v1384 = vpop.xlane.xlu0 %1383
    %v1385 = vsel %vm1321, %v945, -inf
    %1386 = vmax.xlane.f32.xlu0 %v1385
    %v1387 = vpop.xlane.xlu0 %1386
    %v1388 = vsel %vm1321, %v948, -inf
    %1389 = vmax.xlane.f32.xlu0 %v1388
    %v1390 = vpop.xlane.xlu0 %1389
    %v1391 = vsel %vm1321, %v950, -inf
    %1392 = vmax.xlane.f32.xlu0 %v1391
    %v1393 = vpop.xlane.xlu0 %1392
    %v1394 = vsel %vm1321, %v1002, -inf
    %1395 = vmax.xlane.f32.xlu0 %v1394
    %v1396 = vpop.xlane.xlu0 %1395
    %v1397 = vsel %vm1321, %v1004, -inf
    %1398 = vmax.xlane.f32.xlu0 %v1397
    %v1399 = vpop.xlane.xlu0 %1398
    %v1400 = vsel %vm1321, %v1007, -inf
    %1401 = vmax.xlane.f32.xlu0 %v1400
    %v1402 = vpop.xlane.xlu0 %1401
    %v1403 = vsel %vm1321, %v1009, -inf
    %1404 = vmax.xlane.f32.xlu0 %v1403
    %v1405 = vpop.xlane.xlu0 %1404
    %v1406 = vsel %vm1321, %v1012, -inf
    %1407 = vmax.xlane.f32.xlu0 %v1406
    %v1408 = vpop.xlane.xlu0 %1407
    %v1409 = vsel %vm1321, %v1014, -inf
    %1410 = vmax.xlane.f32.xlu0 %v1409
    %v1411 = vpop.xlane.xlu0 %1410
    %v1412 = vsel %vm1321, %v1017, -inf
    %1413 = vmax.xlane.f32.xlu0 %v1412
    %v1414 = vpop.xlane.xlu0 %1413
    %v1415 = vsel %vm1321, %v1019, -inf
    %1416 = vmax.xlane.f32.xlu0 %v1415
    %v1417 = vpop.xlane.xlu0 %1416
    %v1418 = vsel %vm1321, %v1095, -inf
    %1419 = vmax.xlane.f32.xlu0 %v1418
    %v1420 = vpop.xlane.xlu0 %1419
    %v1421 = vsel %vm1321, %v1097, -inf
    %1422 = vmax.xlane.f32.xlu0 %v1421
    %v1423 = vpop.xlane.xlu0 %1422
    %v1424 = vsel %vm1321, %v1100, -inf
    %1425 = vmax.xlane.f32.xlu0 %v1424
    %v1426 = vpop.xlane.xlu0 %1425
    %v1427 = vsel %vm1321, %v1102, -inf
    %1428 = vmax.xlane.f32.xlu0 %v1427
    %v1429 = vpop.xlane.xlu0 %1428
    %v1430 = vsel %vm1321, %v1105, -inf
    %1431 = vmax.xlane.f32.xlu0 %v1430
    %v1432 = vpop.xlane.xlu0 %1431
    %v1433 = vsel %vm1321, %v1107, -inf
    %1434 = vmax.xlane.f32.xlu0 %v1433
    %v1435 = vpop.xlane.xlu0 %1434
    %v1436 = vsel %vm1321, %v1110, -inf
    %1437 = vmax.xlane.f32.xlu0 %v1436
    %v1438 = vpop.xlane.xlu0 %1437
    %v1439 = vsel %vm1321, %v1112, -inf
    %1440 = vmax.xlane.f32.xlu0 %v1439
    %v1441 = vpop.xlane.xlu0 %1440
    %v1442 = vsel %vm1321, %v1164, -inf
    %1443 = vmax.xlane.f32.xlu0 %v1442
    %v1444 = vpop.xlane.xlu0 %1443
    %v1445 = vsel %vm1321, %v1166, -inf
    %1446 = vmax.xlane.f32.xlu0 %v1445
    %v1447 = vpop.xlane.xlu0 %1446
    %v1448 = vsel %vm1321, %v1169, -inf
    %1449 = vmax.xlane.f32.xlu0 %v1448
    %v1450 = vpop.xlane.xlu0 %1449
    %v1451 = vsel %vm1321, %v1171, -inf
    %1452 = vmax.xlane.f32.xlu0 %v1451
    %v1453 = vpop.xlane.xlu0 %1452
    %v1454 = vsel %vm1321, %v1174, -inf
    %1455 = vmax.xlane.f32.xlu0 %v1454
    %v1456 = vpop.xlane.xlu0 %1455
    %v1457 = vsel %vm1321, %v1176, -inf
    %1458 = vmax.xlane.f32.xlu0 %v1457
    %v1459 = vpop.xlane.xlu0 %1458
    %v1460 = vsel %vm1321, %v1179, -inf
    %1461 = vmax.xlane.f32.xlu0 %v1460
    %v1462 = vpop.xlane.xlu0 %1461
    %v1463 = vsel %vm1321, %v1181, -inf
    %1464 = vmax.xlane.f32.xlu0 %v1463
    %v1465 = vpop.xlane.xlu0 %1464
    %v1466 = vsel %vm1321, %v1233, -inf
    %1467 = vmax.xlane.f32.xlu0 %v1466
    %v1468 = vpop.xlane.xlu0 %1467
    %v1469 = vsel %vm1321, %v1235, -inf
    %1470 = vmax.xlane.f32.xlu0 %v1469
    %v1471 = vpop.xlane.xlu0 %1470
    %v1472 = vsel %vm1321, %v1238, -inf
    %1473 = vmax.xlane.f32.xlu0 %v1472
    %v1474 = vpop.xlane.xlu0 %1473
    %v1475 = vsel %vm1321, %v1240, -inf
    %1476 = vmax.xlane.f32.xlu0 %v1475
    %v1477 = vpop.xlane.xlu0 %1476
    %v1478 = vsel %vm1321, %v1243, -inf
    %1479 = vmax.xlane.f32.xlu0 %v1478
    %v1480 = vpop.xlane.xlu0 %1479
    %v1481 = vsel %vm1321, %v1245, -inf
    %1482 = vmax.xlane.f32.xlu0 %v1481
    %v1483 = vpop.xlane.xlu0 %1482
    %v1484 = vsel %vm1321, %v1248, -inf
    %1485 = vmax.xlane.f32.xlu0 %v1484
    %v1486 = vpop.xlane.xlu0 %1485
    %v1487 = vsel %vm1321, %v1250, -inf
    %1488 = vmax.xlane.f32.xlu0 %v1487
    %v1489 = vpop.xlane.xlu0 %1488
    %v1490 = vsel %vm1321, %v1302, -inf
    %1491 = vmax.xlane.f32.xlu0 %v1490
    %v1492 = vpop.xlane.xlu0 %1491
    %v1493 = vsel %vm1321, %v1304, -inf
    %1494 = vmax.xlane.f32.xlu0 %v1493
    %v1495 = vpop.xlane.xlu0 %1494
    %v1496 = vsel %vm1321, %v1307, -inf
    %1497 = vmax.xlane.f32.xlu0 %v1496
    %v1498 = vpop.xlane.xlu0 %1497
    %v1499 = vsel %vm1321, %v1309, -inf
    %1500 = vmax.xlane.f32.xlu0 %v1499
    %v1501 = vpop.xlane.xlu0 %1500
    %v1502 = vsel %vm1321, %v1312, -inf
    %1503 = vmax.xlane.f32.xlu0 %v1502
    %v1504 = vpop.xlane.xlu0 %1503
    %v1505 = vsel %vm1321, %v1314, -inf
    %1506 = vmax.xlane.f32.xlu0 %v1505
    %v1507 = vpop.xlane.xlu0 %1506
    %v1508 = vsel %vm1321, %v1317, -inf
    %1509 = vmax.xlane.f32.xlu0 %v1508
    %v1510 = vpop.xlane.xlu0 %1509
    %v1511 = vsel %vm1321, %v1319, -inf
    %1512 = vmax.xlane.f32.xlu0 %v1511
    %v1513 = vpop.xlane.xlu0 %1512
    %v1514 = vsub.f32 %v795, %v1324
    %v1515 = vsub.f32 %v797, %v1327
    %v1516 = vsub.f32 %v800, %v1330
    %v1517 = vsub.f32 %v802, %v1333
    %v1518 = vsub.f32 %v805, %v1336
    %v1519 = vsub.f32 %v807, %v1339
    %v1520 = vsub.f32 %v810, %v1342
    %v1521 = vsub.f32 %v812, %v1345
    %v1522 = vsub.f32 %v864, %v1348
    %v1523 = vsub.f32 %v866, %v1351
    %v1524 = vsub.f32 %v869, %v1354
    %v1525 = vsub.f32 %v871, %v1357
    %v1526 = vsub.f32 %v874, %v1360
    %v1527 = vsub.f32 %v876, %v1363
    %v1528 = vsub.f32 %v879, %v1366
    %v1529 = vsub.f32 %v881, %v1369
    %v1530 = vsub.f32 %v933, %v1372
    %v1531 = vsub.f32 %v935, %v1375
    %v1532 = vsub.f32 %v938, %v1378
    %v1533 = vsub.f32 %v940, %v1381
    %v1534 = vsub.f32 %v943, %v1384
    %v1535 = vsub.f32 %v945, %v1387
    %v1536 = vsub.f32 %v948, %v1390
    %v1537 = vsub.f32 %v950, %v1393
    %v1538 = vsub.f32 %v1002, %v1396
    %v1539 = vsub.f32 %v1004, %v1399
    %v1540 = vsub.f32 %v1007, %v1402
    %v1541 = vsub.f32 %v1009, %v1405
    %v1542 = vsub.f32 %v1012, %v1408
    %v1543 = vsub.f32 %v1014, %v1411
    %v1544 = vsub.f32 %v1017, %v1414
    %v1545 = vsub.f32 %v1019, %v1417
    %v1546 = vsub.f32 %v1095, %v1420
    %v1547 = vsub.f32 %v1097, %v1423
    %v1548 = vsub.f32 %v1100, %v1426
    %v1549 = vsub.f32 %v1102, %v1429
    %v1550 = vsub.f32 %v1105, %v1432
    %v1551 = vsub.f32 %v1107, %v1435
    %v1552 = vsub.f32 %v1110, %v1438
    %v1553 = vsub.f32 %v1112, %v1441
    %v1554 = vsub.f32 %v1164, %v1444
    %v1555 = vsub.f32 %v1166, %v1447
    %v1556 = vsub.f32 %v1169, %v1450
    %v1557 = vsub.f32 %v1171, %v1453
    %v1558 = vsub.f32 %v1174, %v1456
    %v1559 = vsub.f32 %v1176, %v1459
    %v1560 = vsub.f32 %v1179, %v1462
    %v1561 = vsub.f32 %v1181, %v1465
    %v1562 = vsub.f32 %v1233, %v1468
    %v1563 = vsub.f32 %v1235, %v1471
    %v1564 = vsub.f32 %v1238, %v1474
    %v1565 = vsub.f32 %v1240, %v1477
    %v1566 = vsub.f32 %v1243, %v1480
    %v1567 = vsub.f32 %v1245, %v1483
    %v1568 = vsub.f32 %v1248, %v1486
    %v1569 = vsub.f32 %v1250, %v1489
    %v1570 = vsub.f32 %v1302, %v1492
    %v1571 = vsub.f32 %v1304, %v1495
    %v1572 = vsub.f32 %v1307, %v1498
    %v1573 = vsub.f32 %v1309, %v1501
    %v1574 = vsub.f32 %v1312, %v1504
    %v1575 = vsub.f32 %v1314, %v1507
    %v1576 = vsub.f32 %v1317, %v1510
    %v1577 = vsub.f32 %v1319, %v1513
    %v1578 = vmul.f32 %v1514, 1.442695
    %v1579 = vpow.pop %v1578
    %v1580 = vmul.f32 %v1515, 1.442695
    %v1581 = vpow.pop %v1580
    %v1582 = vmul.f32 %v1516, 1.442695
    %v1583 = vpow.pop %v1582
    %v1584 = vmul.f32 %v1517, 1.442695
    %v1585 = vpow.pop %v1584
    %v1586 = vmul.f32 %v1518, 1.442695
    %v1587 = vpow.pop %v1586
    %v1588 = vmul.f32 %v1519, 1.442695
    %v1589 = vpow.pop %v1588
    %v1590 = vmul.f32 %v1520, 1.442695
    %v1591 = vpow.pop %v1590
    %v1592 = vmul.f32 %v1521, 1.442695
    %v1593 = vpow.pop %v1592
    %v1594 = vmul.f32 %v1522, 1.442695
    %v1595 = vpow.pop %v1594
    %v1596 = vmul.f32 %v1523, 1.442695
    %v1597 = vpow.pop %v1596
    %v1598 = vmul.f32 %v1524, 1.442695
    %v1599 = vpow.pop %v1598
    %v1600 = vmul.f32 %v1525, 1.442695
    %v1601 = vpow.pop %v1600
    %v1602 = vmul.f32 %v1526, 1.442695
    %v1603 = vpow.pop %v1602
    %v1604 = vmul.f32 %v1527, 1.442695
    %v1605 = vpow.pop %v1604
    %v1606 = vmul.f32 %v1528, 1.442695
    %v1607 = vpow.pop %v1606
    %v1608 = vmul.f32 %v1529, 1.442695
    %v1609 = vpow.pop %v1608
    %v1610 = vmul.f32 %v1530, 1.442695
    %v1611 = vpow.pop %v1610
    %v1612 = vmul.f32 %v1531, 1.442695
    %v1613 = vpow.pop %v1612
    %v1614 = vmul.f32 %v1532, 1.442695
    %v1615 = vpow.pop %v1614
    %v1616 = vmul.f32 %v1533, 1.442695
    %v1617 = vpow.pop %v1616
    %v1618 = vmul.f32 %v1534, 1.442695
    %v1619 = vpow.pop %v1618
    %v1620 = vmul.f32 %v1535, 1.442695
    %v1621 = vpow.pop %v1620
    %v1622 = vmul.f32 %v1536, 1.442695
    %v1623 = vpow.pop %v1622
    %v1624 = vmul.f32 %v1537, 1.442695
    %v1625 = vpow.pop %v1624
    %v1626 = vmul.f32 %v1538, 1.442695
    %v1627 = vpow.pop %v1626
    %v1628 = vmul.f32 %v1539, 1.442695
    %v1629 = vpow.pop %v1628
    %v1630 = vmul.f32 %v1540, 1.442695
    %v1631 = vpow.pop %v1630
    %v1632 = vmul.f32 %v1541, 1.442695
    %v1633 = vpow.pop %v1632
    %v1634 = vmul.f32 %v1542, 1.442695
    %v1635 = vpow.pop %v1634
    %v1636 = vmul.f32 %v1543, 1.442695
    %v1637 = vpow.pop %v1636
    %v1638 = vmul.f32 %v1544, 1.442695
    %v1639 = vpow.pop %v1638
    %v1640 = vmul.f32 %v1545, 1.442695
    %v1641 = vpow.pop %v1640
    %v1642 = vmul.f32 %v1546, 1.442695
    %v1643 = vpow.pop %v1642
    %v1644 = vmul.f32 %v1547, 1.442695
    %v1645 = vpow.pop %v1644
    %v1646 = vmul.f32 %v1548, 1.442695
    %v1647 = vpow.pop %v1646
    %v1648 = vmul.f32 %v1549, 1.442695
    %v1649 = vpow.pop %v1648
    %v1650 = vmul.f32 %v1550, 1.442695
    %v1651 = vpow.pop %v1650
    %v1652 = vmul.f32 %v1551, 1.442695
    %v1653 = vpow.pop %v1652
    %v1654 = vmul.f32 %v1552, 1.442695
    %v1655 = vpow.pop %v1654
    %v1656 = vmul.f32 %v1553, 1.442695
    %v1657 = vpow.pop %v1656
    %v1658 = vmul.f32 %v1554, 1.442695
    %v1659 = vpow.pop %v1658
    %v1660 = vmul.f32 %v1555, 1.442695
    %v1661 = vpow.pop %v1660
    %v1662 = vmul.f32 %v1556, 1.442695
    %v1663 = vpow.pop %v1662
    %v1664 = vmul.f32 %v1557, 1.442695
    %v1665 = vpow.pop %v1664
    %v1666 = vmul.f32 %v1558, 1.442695
    %v1667 = vpow.pop %v1666
    %v1668 = vmul.f32 %v1559, 1.442695
    %v1669 = vpow.pop %v1668
    %v1670 = vmul.f32 %v1560, 1.442695
    %v1671 = vpow.pop %v1670
    %v1672 = vmul.f32 %v1561, 1.442695
    %v1673 = vpow.pop %v1672
    %v1674 = vmul.f32 %v1562, 1.442695
    %v1675 = vpow.pop %v1674
    %v1676 = vmul.f32 %v1563, 1.442695
    %v1677 = vpow.pop %v1676
    %v1678 = vmul.f32 %v1564, 1.442695
    %v1679 = vpow.pop %v1678
    %v1680 = vmul.f32 %v1565, 1.442695
    %v1681 = vpow.pop %v1680
    %v1682 = vmul.f32 %v1566, 1.442695
    %v1683 = vpow.pop %v1682
    %v1684 = vmul.f32 %v1567, 1.442695
    %v1685 = vpow.pop %v1684
    %v1686 = vmul.f32 %v1568, 1.442695
    %v1687 = vpow.pop %v1686
    %v1688 = vmul.f32 %v1569, 1.442695
    %v1689 = vpow.pop %v1688
    %v1690 = vmul.f32 %v1570, 1.442695
    %v1691 = vpow.pop %v1690
    %v1692 = vmul.f32 %v1571, 1.442695
    %v1693 = vpow.pop %v1692
    %v1694 = vmul.f32 %v1572, 1.442695
    %v1695 = vpow.pop %v1694
    %v1696 = vmul.f32 %v1573, 1.442695
    %v1697 = vpow.pop %v1696
    %v1698 = vmul.f32 %v1574, 1.442695
    %v1699 = vpow.pop %v1698
    %v1700 = vmul.f32 %v1575, 1.442695
    %v1701 = vpow.pop %v1700
    %v1702 = vmul.f32 %v1576, 1.442695
    %v1703 = vpow.pop %v1702
    %v1704 = vmul.f32 %v1577, 1.442695
    %v1705 = vpow.pop %v1704
    %v1706 = vsel %vm1321, %v1579, 0.0
    %1707 = vadd.xlane.f32.xlu0 %v1706
    %v1708 = vpop.xlane.xlu0 %1707
    %v1709 = vsel %vm1321, %v1581, 0.0
    %1710 = vadd.xlane.f32.xlu0 %v1709
    %v1711 = vpop.xlane.xlu0 %1710
    %v1712 = vsel %vm1321, %v1583, 0.0
    %1713 = vadd.xlane.f32.xlu0 %v1712
    %v1714 = vpop.xlane.xlu0 %1713
    %v1715 = vsel %vm1321, %v1585, 0.0
    %1716 = vadd.xlane.f32.xlu0 %v1715
    %v1717 = vpop.xlane.xlu0 %1716
    %v1718 = vsel %vm1321, %v1587, 0.0
    %1719 = vadd.xlane.f32.xlu0 %v1718
    %v1720 = vpop.xlane.xlu0 %1719
    %v1721 = vsel %vm1321, %v1589, 0.0
    %1722 = vadd.xlane.f32.xlu0 %v1721
    %v1723 = vpop.xlane.xlu0 %1722
    %v1724 = vsel %vm1321, %v1591, 0.0
    %1725 = vadd.xlane.f32.xlu0 %v1724
    %v1726 = vpop.xlane.xlu0 %1725
    %v1727 = vsel %vm1321, %v1593, 0.0
    %1728 = vadd.xlane.f32.xlu0 %v1727
    %v1729 = vpop.xlane.xlu0 %1728
    %v1730 = vsel %vm1321, %v1595, 0.0
    %1731 = vadd.xlane.f32.xlu0 %v1730
    %v1732 = vpop.xlane.xlu0 %1731
    %v1733 = vsel %vm1321, %v1597, 0.0
    %1734 = vadd.xlane.f32.xlu0 %v1733
    %v1735 = vpop.xlane.xlu0 %1734
    %v1736 = vsel %vm1321, %v1599, 0.0
    %1737 = vadd.xlane.f32.xlu0 %v1736
    %v1738 = vpop.xlane.xlu0 %1737
    %v1739 = vsel %vm1321, %v1601, 0.0
    %1740 = vadd.xlane.f32.xlu0 %v1739
    %v1741 = vpop.xlane.xlu0 %1740
    %v1742 = vsel %vm1321, %v1603, 0.0
    %1743 = vadd.xlane.f32.xlu0 %v1742
    %v1744 = vpop.xlane.xlu0 %1743
    %v1745 = vsel %vm1321, %v1605, 0.0
    %1746 = vadd.xlane.f32.xlu0 %v1745
    %v1747 = vpop.xlane.xlu0 %1746
    %v1748 = vsel %vm1321, %v1607, 0.0
    %1749 = vadd.xlane.f32.xlu0 %v1748
    %v1750 = vpop.xlane.xlu0 %1749
    %v1751 = vsel %vm1321, %v1609, 0.0
    %1752 = vadd.xlane.f32.xlu0 %v1751
    %v1753 = vpop.xlane.xlu0 %1752
    %v1754 = vsel %vm1321, %v1611, 0.0
    %1755 = vadd.xlane.f32.xlu0 %v1754
    %v1756 = vpop.xlane.xlu0 %1755
    %v1757 = vsel %vm1321, %v1613, 0.0
    %1758 = vadd.xlane.f32.xlu0 %v1757
    %v1759 = vpop.xlane.xlu0 %1758
    %v1760 = vsel %vm1321, %v1615, 0.0
    %1761 = vadd.xlane.f32.xlu0 %v1760
    %v1762 = vpop.xlane.xlu0 %1761
    %v1763 = vsel %vm1321, %v1617, 0.0
    %1764 = vadd.xlane.f32.xlu0 %v1763
    %v1765 = vpop.xlane.xlu0 %1764
    %v1766 = vsel %vm1321, %v1619, 0.0
    %1767 = vadd.xlane.f32.xlu0 %v1766
    %v1768 = vpop.xlane.xlu0 %1767
    %v1769 = vsel %vm1321, %v1621, 0.0
    %1770 = vadd.xlane.f32.xlu0 %v1769
    %v1771 = vpop.xlane.xlu0 %1770
    %v1772 = vsel %vm1321, %v1623, 0.0
    %1773 = vadd.xlane.f32.xlu0 %v1772
    %v1774 = vpop.xlane.xlu0 %1773
    %v1775 = vsel %vm1321, %v1625, 0.0
    %1776 = vadd.xlane.f32.xlu0 %v1775
    %v1777 = vpop.xlane.xlu0 %1776
    %v1778 = vsel %vm1321, %v1627, 0.0
    %1779 = vadd.xlane.f32.xlu0 %v1778
    %v1780 = vpop.xlane.xlu0 %1779
    %v1781 = vsel %vm1321, %v1629, 0.0
    %1782 = vadd.xlane.f32.xlu0 %v1781
    %v1783 = vpop.xlane.xlu0 %1782
    %v1784 = vsel %vm1321, %v1631, 0.0
    %1785 = vadd.xlane.f32.xlu0 %v1784
    %v1786 = vpop.xlane.xlu0 %1785
    %v1787 = vsel %vm1321, %v1633, 0.0
    %1788 = vadd.xlane.f32.xlu0 %v1787
    %v1789 = vpop.xlane.xlu0 %1788
    %v1790 = vsel %vm1321, %v1635, 0.0
    %1791 = vadd.xlane.f32.xlu0 %v1790
    %v1792 = vpop.xlane.xlu0 %1791
    %v1793 = vsel %vm1321, %v1637, 0.0
    %1794 = vadd.xlane.f32.xlu0 %v1793
    %v1795 = vpop.xlane.xlu0 %1794
    %v1796 = vsel %vm1321, %v1639, 0.0
    %1797 = vadd.xlane.f32.xlu0 %v1796
    %v1798 = vpop.xlane.xlu0 %1797
    %v1799 = vsel %vm1321, %v1641, 0.0
    %1800 = vadd.xlane.f32.xlu0 %v1799
    %v1801 = vpop.xlane.xlu0 %1800
    %v1802 = vsel %vm1321, %v1643, 0.0
    %1803 = vadd.xlane.f32.xlu0 %v1802
    %v1804 = vpop.xlane.xlu0 %1803
    %v1805 = vsel %vm1321, %v1645, 0.0
    %1806 = vadd.xlane.f32.xlu0 %v1805
    %v1807 = vpop.xlane.xlu0 %1806
    %v1808 = vsel %vm1321, %v1647, 0.0
    %1809 = vadd.xlane.f32.xlu0 %v1808
    %v1810 = vpop.xlane.xlu0 %1809
    %v1811 = vsel %vm1321, %v1649, 0.0
    %1812 = vadd.xlane.f32.xlu0 %v1811
    %v1813 = vpop.xlane.xlu0 %1812
    %v1814 = vsel %vm1321, %v1651, 0.0
    %1815 = vadd.xlane.f32.xlu0 %v1814
    %v1816 = vpop.xlane.xlu0 %1815
    %v1817 = vsel %vm1321, %v1653, 0.0
    %1818 = vadd.xlane.f32.xlu0 %v1817
    %v1819 = vpop.xlane.xlu0 %1818
    %v1820 = vsel %vm1321, %v1655, 0.0
    %1821 = vadd.xlane.f32.xlu0 %v1820
    %v1822 = vpop.xlane.xlu0 %1821
    %v1823 = vsel %vm1321, %v1657, 0.0
    %1824 = vadd.xlane.f32.xlu0 %v1823
    %v1825 = vpop.xlane.xlu0 %1824
    %v1826 = vsel %vm1321, %v1659, 0.0
    %1827 = vadd.xlane.f32.xlu0 %v1826
    %v1828 = vpop.xlane.xlu0 %1827
    %v1829 = vsel %vm1321, %v1661, 0.0
    %1830 = vadd.xlane.f32.xlu0 %v1829
    %v1831 = vpop.xlane.xlu0 %1830
    %v1832 = vsel %vm1321, %v1663, 0.0
    %1833 = vadd.xlane.f32.xlu0 %v1832
    %v1834 = vpop.xlane.xlu0 %1833
    %v1835 = vsel %vm1321, %v1665, 0.0
    %1836 = vadd.xlane.f32.xlu0 %v1835
    %v1837 = vpop.xlane.xlu0 %1836
    %v1838 = vsel %vm1321, %v1667, 0.0
    %1839 = vadd.xlane.f32.xlu0 %v1838
    %v1840 = vpop.xlane.xlu0 %1839
    %v1841 = vsel %vm1321, %v1669, 0.0
    %1842 = vadd.xlane.f32.xlu0 %v1841
    %v1843 = vpop.xlane.xlu0 %1842
    %v1844 = vsel %vm1321, %v1671, 0.0
    %1845 = vadd.xlane.f32.xlu0 %v1844
    %v1846 = vpop.xlane.xlu0 %1845
    %v1847 = vsel %vm1321, %v1673, 0.0
    %1848 = vadd.xlane.f32.xlu0 %v1847
    %v1849 = vpop.xlane.xlu0 %1848
    %v1850 = vsel %vm1321, %v1675, 0.0
    %1851 = vadd.xlane.f32.xlu0 %v1850
    %v1852 = vpop.xlane.xlu0 %1851
    %v1853 = vsel %vm1321, %v1677, 0.0
    %1854 = vadd.xlane.f32.xlu0 %v1853
    %v1855 = vpop.xlane.xlu0 %1854
    %v1856 = vsel %vm1321, %v1679, 0.0
    %1857 = vadd.xlane.f32.xlu0 %v1856
    %v1858 = vpop.xlane.xlu0 %1857
    %v1859 = vsel %vm1321, %v1681, 0.0
    %1860 = vadd.xlane.f32.xlu0 %v1859
    %v1861 = vpop.xlane.xlu0 %1860
    %v1862 = vsel %vm1321, %v1683, 0.0
    %1863 = vadd.xlane.f32.xlu0 %v1862
    %v1864 = vpop.xlane.xlu0 %1863
    %v1865 = vsel %vm1321, %v1685, 0.0
    %1866 = vadd.xlane.f32.xlu0 %v1865
    %v1867 = vpop.xlane.xlu0 %1866
    %v1868 = vsel %vm1321, %v1687, 0.0
    %1869 = vadd.xlane.f32.xlu0 %v1868
    %v1870 = vpop.xlane.xlu0 %1869
    %v1871 = vsel %vm1321, %v1689, 0.0
    %1872 = vadd.xlane.f32.xlu0 %v1871
    %v1873 = vpop.xlane.xlu0 %1872
    %v1874 = vsel %vm1321, %v1691, 0.0
    %1875 = vadd.xlane.f32.xlu0 %v1874
    %v1876 = vpop.xlane.xlu0 %1875
    %v1877 = vsel %vm1321, %v1693, 0.0
    %1878 = vadd.xlane.f32.xlu0 %v1877
    %v1879 = vpop.xlane.xlu0 %1878
    %v1880 = vsel %vm1321, %v1695, 0.0
    %1881 = vadd.xlane.f32.xlu0 %v1880
    %v1882 = vpop.xlane.xlu0 %1881
    %v1883 = vsel %vm1321, %v1697, 0.0
    %1884 = vadd.xlane.f32.xlu0 %v1883
    %v1885 = vpop.xlane.xlu0 %1884
    %v1886 = vsel %vm1321, %v1699, 0.0
    %1887 = vadd.xlane.f32.xlu0 %v1886
    %v1888 = vpop.xlane.xlu0 %1887
    %v1889 = vsel %vm1321, %v1701, 0.0
    %1890 = vadd.xlane.f32.xlu0 %v1889
    %v1891 = vpop.xlane.xlu0 %1890
    %v1892 = vsel %vm1321, %v1703, 0.0
    %1893 = vadd.xlane.f32.xlu0 %v1892
    %v1894 = vpop.xlane.xlu0 %1893
    %v1895 = vsel %vm1321, %v1705, 0.0
    %1896 = vadd.xlane.f32.xlu0 %v1895
    %v1897 = vpop.xlane.xlu0 %1896
    %v1898 = vrcp.pop %v1708
    %v1899 = vrcp.pop %v1711
    %v1900 = vrcp.pop %v1714
    %v1901 = vrcp.pop %v1717
    %v1902 = vrcp.pop %v1720
    %v1903 = vrcp.pop %v1723
    %v1904 = vrcp.pop %v1726
    %v1905 = vrcp.pop %v1729
    %v1906 = vrcp.pop %v1732
    %v1907 = vrcp.pop %v1735
    %v1908 = vrcp.pop %v1738
    %v1909 = vrcp.pop %v1741
    %v1910 = vrcp.pop %v1744
    %v1911 = vrcp.pop %v1747
    %v1912 = vrcp.pop %v1750
    %v1913 = vrcp.pop %v1753
    %v1914 = vrcp.pop %v1756
    %v1915 = vrcp.pop %v1759
    %v1916 = vrcp.pop %v1762
    %v1917 = vrcp.pop %v1765
    %v1918 = vrcp.pop %v1768
    %v1919 = vrcp.pop %v1771
    %v1920 = vrcp.pop %v1774
    %v1921 = vrcp.pop %v1777
    %v1922 = vrcp.pop %v1780
    %v1923 = vrcp.pop %v1783
    %v1924 = vrcp.pop %v1786
    %v1925 = vrcp.pop %v1789
    %v1926 = vrcp.pop %v1792
    %v1927 = vrcp.pop %v1795
    %v1928 = vrcp.pop %v1798
    %v1929 = vrcp.pop %v1801
    %v1930 = vrcp.pop %v1804
    %v1931 = vrcp.pop %v1807
    %v1932 = vrcp.pop %v1810
    %v1933 = vrcp.pop %v1813
    %v1934 = vrcp.pop %v1816
    %v1935 = vrcp.pop %v1819
    %v1936 = vrcp.pop %v1822
    %v1937 = vrcp.pop %v1825
    %v1938 = vrcp.pop %v1828
    %v1939 = vrcp.pop %v1831
    %v1940 = vrcp.pop %v1834
    %v1941 = vrcp.pop %v1837
    %v1942 = vrcp.pop %v1840
    %v1943 = vrcp.pop %v1843
    %v1944 = vrcp.pop %v1846
    %v1945 = vrcp.pop %v1849
    %v1946 = vrcp.pop %v1852
    %v1947 = vrcp.pop %v1855
    %v1948 = vrcp.pop %v1858
    %v1949 = vrcp.pop %v1861
    %v1950 = vrcp.pop %v1864
    %v1951 = vrcp.pop %v1867
    %v1952 = vrcp.pop %v1870
    %v1953 = vrcp.pop %v1873
    %v1954 = vrcp.pop %v1876
    %v1955 = vrcp.pop %v1879
    %v1956 = vrcp.pop %v1882
    %v1957 = vrcp.pop %v1885
    %v1958 = vrcp.pop %v1888
    %v1959 = vrcp.pop %v1891
    %v1960 = vrcp.pop %v1894
    %v1961 = vrcp.pop %v1897
    %v1962 = vmul.f32 %v1579, %v1898
    %v1963 = vmul.f32 %v1581, %v1899
    %v1964 = vmul.f32 %v1583, %v1900
    %v1965 = vmul.f32 %v1585, %v1901
    %v1966 = vmul.f32 %v1587, %v1902
    %v1967 = vmul.f32 %v1589, %v1903
    %v1968 = vmul.f32 %v1591, %v1904
    %v1969 = vmul.f32 %v1593, %v1905
    %v1970 = vmul.f32 %v1595, %v1906
    %v1971 = vmul.f32 %v1597, %v1907
    %v1972 = vmul.f32 %v1599, %v1908
    %v1973 = vmul.f32 %v1601, %v1909
    %v1974 = vmul.f32 %v1603, %v1910
    %v1975 = vmul.f32 %v1605, %v1911
    %v1976 = vmul.f32 %v1607, %v1912
    %v1977 = vmul.f32 %v1609, %v1913
    %v1978 = vmul.f32 %v1611, %v1914
    %v1979 = vmul.f32 %v1613, %v1915
    %v1980 = vmul.f32 %v1615, %v1916
    %v1981 = vmul.f32 %v1617, %v1917
    %v1982 = vmul.f32 %v1619, %v1918
    %v1983 = vmul.f32 %v1621, %v1919
    %v1984 = vmul.f32 %v1623, %v1920
    %v1985 = vmul.f32 %v1625, %v1921
    %v1986 = vmul.f32 %v1627, %v1922
    %v1987 = vmul.f32 %v1629, %v1923
    %v1988 = vmul.f32 %v1631, %v1924
    %v1989 = vmul.f32 %v1633, %v1925
    %v1990 = vmul.f32 %v1635, %v1926
    %v1991 = vmul.f32 %v1637, %v1927
    %v1992 = vmul.f32 %v1639, %v1928
    %v1993 = vmul.f32 %v1641, %v1929
    %v1994 = vmul.f32 %v1643, %v1930
    %v1995 = vmul.f32 %v1645, %v1931
    %v1996 = vmul.f32 %v1647, %v1932
    %v1997 = vmul.f32 %v1649, %v1933
    %v1998 = vmul.f32 %v1651, %v1934
    %v1999 = vmul.f32 %v1653, %v1935
    %v2000 = vmul.f32 %v1655, %v1936
    %v2001 = vmul.f32 %v1657, %v1937
    %v2002 = vmul.f32 %v1659, %v1938
    %v2003 = vmul.f32 %v1661, %v1939
    %v2004 = vmul.f32 %v1663, %v1940
    %v2005 = vmul.f32 %v1665, %v1941
    %v2006 = vmul.f32 %v1667, %v1942
    %v2007 = vmul.f32 %v1669, %v1943
    %v2008 = vmul.f32 %v1671, %v1944
    %v2009 = vmul.f32 %v1673, %v1945
    %v2010 = vmul.f32 %v1675, %v1946
    %v2011 = vmul.f32 %v1677, %v1947
    %v2012 = vmul.f32 %v1679, %v1948
    %v2013 = vmul.f32 %v1681, %v1949
    %v2014 = vmul.f32 %v1683, %v1950
    %v2015 = vmul.f32 %v1685, %v1951
    %v2016 = vmul.f32 %v1687, %v1952
    %v2017 = vmul.f32 %v1689, %v1953
    %v2018 = vmul.f32 %v1691, %v1954
    %v2019 = vmul.f32 %v1693, %v1955
    %v2020 = vmul.f32 %v1695, %v1956
    %v2021 = vmul.f32 %v1697, %v1957
    %v2022 = vmul.f32 %v1699, %v1958
    %v2023 = vmul.f32 %v1701, %v1959
    %v2024 = vmul.f32 %v1703, %v1960
    %v2025 = vmul.f32 %v1705, %v1961
    %v2026 = vpack.c.bf16 %v1962, %v1962
    %v2027 = vpack.c.bf16 %v1963, %v1963
    %v2028 = vpack.c.bf16 %v1964, %v1964
    %v2029 = vpack.c.bf16 %v1965, %v1965
    %v2030 = vpack.c.bf16 %v1966, %v1966
    %v2031 = vpack.c.bf16 %v1967, %v1967
    %v2032 = vpack.c.bf16 %v1968, %v1968
    %v2033 = vpack.c.bf16 %v1969, %v1969
    %v2034 = vpack.c.bf16 %v1970, %v1970
    %v2035 = vpack.c.bf16 %v1971, %v1971
    %v2036 = vpack.c.bf16 %v1972, %v1972
    %v2037 = vpack.c.bf16 %v1973, %v1973
    %v2038 = vpack.c.bf16 %v1974, %v1974
    %v2039 = vpack.c.bf16 %v1975, %v1975
    %v2040 = vpack.c.bf16 %v1976, %v1976
    %v2041 = vpack.c.bf16 %v1977, %v1977
    %v2042 = vpack.c.bf16 %v1978, %v1978
    %v2043 = vpack.c.bf16 %v1979, %v1979
    %v2044 = vpack.c.bf16 %v1980, %v1980
    %v2045 = vpack.c.bf16 %v1981, %v1981
    %v2046 = vpack.c.bf16 %v1982, %v1982
    %v2047 = vpack.c.bf16 %v1983, %v1983
    %v2048 = vpack.c.bf16 %v1984, %v1984
    %v2049 = vpack.c.bf16 %v1985, %v1985
    %v2050 = vpack.c.bf16 %v1986, %v1986
    %v2051 = vpack.c.bf16 %v1987, %v1987
    %v2052 = vpack.c.bf16 %v1988, %v1988
    %v2053 = vpack.c.bf16 %v1989, %v1989
    %v2054 = vpack.c.bf16 %v1990, %v1990
    %v2055 = vpack.c.bf16 %v1991, %v1991
    %v2056 = vpack.c.bf16 %v1992, %v1992
    %v2057 = vpack.c.bf16 %v1993, %v1993
    %v2058 = vpack.c.bf16 %v1994, %v1994
    %v2059 = vpack.c.bf16 %v1995, %v1995
    %v2060 = vpack.c.bf16 %v1996, %v1996
    %v2061 = vpack.c.bf16 %v1997, %v1997
    %v2062 = vpack.c.bf16 %v1998, %v1998
    %v2063 = vpack.c.bf16 %v1999, %v1999
    %v2064 = vpack.c.bf16 %v2000, %v2000
    %v2065 = vpack.c.bf16 %v2001, %v2001
    %v2066 = vpack.c.bf16 %v2002, %v2002
    %v2067 = vpack.c.bf16 %v2003, %v2003
    %v2068 = vpack.c.bf16 %v2004, %v2004
    %v2069 = vpack.c.bf16 %v2005, %v2005
    %v2070 = vpack.c.bf16 %v2006, %v2006
    %v2071 = vpack.c.bf16 %v2007, %v2007
    %v2072 = vpack.c.bf16 %v2008, %v2008
    %v2073 = vpack.c.bf16 %v2009, %v2009
    %v2074 = vpack.c.bf16 %v2010, %v2010
    %v2075 = vpack.c.bf16 %v2011, %v2011
    %v2076 = vpack.c.bf16 %v2012, %v2012
    %v2077 = vpack.c.bf16 %v2013, %v2013
    %v2078 = vpack.c.bf16 %v2014, %v2014
    %v2079 = vpack.c.bf16 %v2015, %v2015
    %v2080 = vpack.c.bf16 %v2016, %v2016
    %v2081 = vpack.c.bf16 %v2017, %v2017
    %v2082 = vpack.c.bf16 %v2018, %v2018
    %v2083 = vpack.c.bf16 %v2019, %v2019
    %v2084 = vpack.c.bf16 %v2020, %v2020
    %v2085 = vpack.c.bf16 %v2021, %v2021
    %v2086 = vpack.c.bf16 %v2022, %v2022
    %v2087 = vpack.c.bf16 %v2023, %v2023
    %v2088 = vpack.c.bf16 %v2024, %v2024
    %v2089 = vpack.c.bf16 %v2025, %v2025
    %v2098 = vunpack.c.l.b16 %v2026
    %v2099 = vunpack.c.l.b16 %v2027
    %v2100 = vunpack.c.l.b16 %v2028
    %v2101 = vunpack.c.l.b16 %v2029
    %v2102 = vunpack.c.l.b16 %v2030
    %v2103 = vunpack.c.l.b16 %v2031
    %v2104 = vunpack.c.l.b16 %v2032
    %v2105 = vunpack.c.l.b16 %v2033
    %v2106 = vpack.c.b16 %v2099, %v2098
    %v2107 = vpack.c.b16 %v2101, %v2100
    %v2108 = vpack.c.b16 %v2103, %v2102
    %v2109 = vpack.c.b16 %v2105, %v2104
    %v2118 = vunpack.c.l.b16 %v704
    %v2119 = vunpack.c.l.b16 %v705
    %v2120 = vunpack.c.l.b16 %v706
    %v2121 = vunpack.c.l.b16 %v707
    %v2122 = vunpack.c.l.b16 %v708
    %v2123 = vunpack.c.l.b16 %v709
    %v2124 = vunpack.c.l.b16 %v710
    %v2125 = vunpack.c.l.b16 %v711
    %v2126 = vpack.c.b16 %v2119, %v2118
    %v2127 = vpack.c.b16 %v2121, %v2120
    %v2128 = vpack.c.b16 %v2123, %v2122
    %v2129 = vpack.c.b16 %v2125, %v2124
    %v2135 = vsel %vm1321, %v2106, 0
    %v2138 = vsel %vm1321, %v2107, 0
    %v2141 = vsel %vm1321, %v2108, 0
    %v2144 = vsel %vm1321, %v2109, 0
    %2146 = vmatpush.bf16.msra.mxu0 0
    %2147 = vmatpush.bf16.msra.mxu0 0
    %2148 = vmatpush.bf16.msra.mxu0 0
    %2149 = vmatpush.bf16.msra.mxu0 0
    %2150 = vmatpush.bf16.msra.mxu0 %v2129
    %2151 = vmatpush.bf16.msra.mxu0 %v2128
    %2152 = vmatpush.bf16.msra.mxu0 %v2127
    %2153 = vmatpush.bf16.msra.mxu0 %v2126
    %2154 = vmatmul.bf16.gmra.mxu0 %v2135
    %v2155 = vpop.f32.mrf.mxu0
    %v2156 = vadd.f32 0.0, %v2155
    %v2157 = vpop.f32.mrf.mxu0
    %v2158 = vadd.f32 0.0, %v2157
    %2159 = vmatmul.bf16.gmra.mxu0 %v2138
    %v2160 = vpop.f32.mrf.mxu0
    %v2161 = vadd.f32 0.0, %v2160
    %v2162 = vpop.f32.mrf.mxu0
    %v2163 = vadd.f32 0.0, %v2162
    %2164 = vmatmul.bf16.gmra.mxu0 %v2141
    %v2165 = vpop.f32.mrf.mxu0
    %v2166 = vadd.f32 0.0, %v2165
    %v2167 = vpop.f32.mrf.mxu0
    %v2168 = vadd.f32 0.0, %v2167
    %2169 = vmatmul.bf16.gmra.mxu0 %v2144
    %v2170 = vpop.f32.mrf.mxu0
    %v2171 = vadd.f32 0.0, %v2170
    %v2172 = vpop.f32.mrf.mxu0
    %v2173 = vadd.f32 0.0, %v2172
    %2174 = vdwg.mxu0
    %v2175 = vpack.c.bf16 %v2158, %v2156
    %v2176 = vpack.c.bf16 %v2163, %v2161
    %v2177 = vpack.c.bf16 %v2168, %v2166
    %v2178 = vpack.c.bf16 %v2173, %v2171
    %v2187 = vunpack.c.l.b16 %v2034
    %v2188 = vunpack.c.l.b16 %v2035
    %v2189 = vunpack.c.l.b16 %v2036
    %v2190 = vunpack.c.l.b16 %v2037
    %v2191 = vunpack.c.l.b16 %v2038
    %v2192 = vunpack.c.l.b16 %v2039
    %v2193 = vunpack.c.l.b16 %v2040
    %v2194 = vunpack.c.l.b16 %v2041
    %v2195 = vpack.c.b16 %v2188, %v2187
    %v2196 = vpack.c.b16 %v2190, %v2189
    %v2197 = vpack.c.b16 %v2192, %v2191
    %v2198 = vpack.c.b16 %v2194, %v2193
    %2199 = vrot.lane.b32.xlu0 %v2126, 96
    %v2200 = vpop.permute.xlu0 %2199
    %2201 = vrot.lane.b32.xlu0 %v2127, 96
    %v2202 = vpop.permute.xlu0 %2201
    %2203 = vrot.lane.b32.xlu0 %v2128, 96
    %v2204 = vpop.permute.xlu0 %2203
    %2205 = vrot.lane.b32.xlu0 %v2129, 96
    %v2206 = vpop.permute.xlu0 %2205
    %v2212 = vsel %vm1321, %v2195, 0
    %v2215 = vsel %vm1321, %v2196, 0
    %v2218 = vsel %vm1321, %v2197, 0
    %v2221 = vsel %vm1321, %v2198, 0
    %2223 = vmatpush.bf16.msra.mxu0 0
    %2224 = vmatpush.bf16.msra.mxu0 0
    %2225 = vmatpush.bf16.msra.mxu0 0
    %2226 = vmatpush.bf16.msra.mxu0 0
    %2227 = vmatpush.bf16.msra.mxu0 %v2206
    %2228 = vmatpush.bf16.msra.mxu0 %v2204
    %2229 = vmatpush.bf16.msra.mxu0 %v2202
    %2230 = vmatpush.bf16.msra.mxu0 %v2200
    %2231 = vmatmul.bf16.gmra.mxu0 %v2212
    %v2232 = vpop.f32.mrf.mxu0
    %v2233 = vadd.f32 0.0, %v2232
    %v2234 = vpop.f32.mrf.mxu0
    %v2235 = vadd.f32 0.0, %v2234
    %2236 = vmatmul.bf16.gmra.mxu0 %v2215
    %v2237 = vpop.f32.mrf.mxu0
    %v2238 = vadd.f32 0.0, %v2237
    %v2239 = vpop.f32.mrf.mxu0
    %v2240 = vadd.f32 0.0, %v2239
    %2241 = vmatmul.bf16.gmra.mxu0 %v2218
    %v2242 = vpop.f32.mrf.mxu0
    %v2243 = vadd.f32 0.0, %v2242
    %v2244 = vpop.f32.mrf.mxu0
    %v2245 = vadd.f32 0.0, %v2244
    %2246 = vmatmul.bf16.gmra.mxu0 %v2221
    %v2247 = vpop.f32.mrf.mxu0
    %v2248 = vadd.f32 0.0, %v2247
    %v2249 = vpop.f32.mrf.mxu0
    %v2250 = vadd.f32 0.0, %v2249
    %2251 = vdwg.mxu0
    %v2252 = vpack.c.bf16 %v2235, %v2233
    %v2253 = vpack.c.bf16 %v2240, %v2238
    %v2254 = vpack.c.bf16 %v2245, %v2243
    %v2255 = vpack.c.bf16 %v2250, %v2248
    %v2260 = vunpack.c.l.b16 %v337
    %v2261 = vunpack.c.l.b16 %v338
    %v2262 = vunpack.c.l.b16 %v339
    %v2263 = vunpack.c.l.b16 %v340
    %v2264 = vpack.c.b16 %v2261, %v2260
    %v2265 = vpack.c.b16 %v2263, %v2262
    %v2269 = vsel %vm760, %v2252, 0
    %v2272 = vsel %vm760, %v2253, 0
    %v2275 = vsel %vm760, %v2254, 0
    %v2278 = vsel %vm760, %v2255, 0
    %2280 = vmatpush.bf16.msra.mxu0 0
    %2281 = vmatpush.bf16.msra.mxu0 0
    %2282 = vmatpush.bf16.msra.mxu0 0
    %2283 = vmatpush.bf16.msra.mxu0 0
    %2284 = vmatpush.bf16.msra.mxu0 0
    %2285 = vmatpush.bf16.msra.mxu0 0
    %2286 = vmatpush.bf16.msra.mxu0 %v2265
    %2287 = vmatpush.bf16.msra.mxu0 %v2264
    %2288 = vmatmul.bf16.gmra.mxu0 %v2269
    %v2289 = vpop.f32.mrf.mxu0
    %v2290 = vadd.f32 0.0, %v2289
    %v2291 = vpop.f32.mrf.mxu0
    %v2292 = vadd.f32 0.0, %v2291
    %2293 = vmatmul.bf16.gmra.mxu0 %v2272
    %v2294 = vpop.f32.mrf.mxu0
    %v2295 = vadd.f32 0.0, %v2294
    %v2296 = vpop.f32.mrf.mxu0
    %v2297 = vadd.f32 0.0, %v2296
    %2298 = vmatmul.bf16.gmra.mxu0 %v2275
    %v2299 = vpop.f32.mrf.mxu0
    %v2300 = vadd.f32 0.0, %v2299
    %v2301 = vpop.f32.mrf.mxu0
    %v2302 = vadd.f32 0.0, %v2301
    %2303 = vmatmul.bf16.gmra.mxu0 %v2278
    %v2304 = vpop.f32.mrf.mxu0
    %v2305 = vadd.f32 0.0, %v2304
    %v2306 = vpop.f32.mrf.mxu0
    %v2307 = vadd.f32 0.0, %v2306
    %2308 = vdwg.mxu0
    %v2313 = vunpack.c.l.b16 %v333
    %v2314 = vunpack.c.l.b16 %v334
    %v2315 = vunpack.c.l.b16 %v335
    %v2316 = vunpack.c.l.b16 %v336
    %v2317 = vpack.c.b16 %v2314, %v2313
    %v2318 = vpack.c.b16 %v2316, %v2315
    %v2322 = vsel %vm760, %v2175, 0
    %v2325 = vsel %vm760, %v2176, 0
    %v2328 = vsel %vm760, %v2177, 0
    %v2331 = vsel %vm760, %v2178, 0
    %2333 = vmatpush.bf16.msra.mxu0 0
    %2334 = vmatpush.bf16.msra.mxu0 0
    %2335 = vmatpush.bf16.msra.mxu0 0
    %2336 = vmatpush.bf16.msra.mxu0 0
    %2337 = vmatpush.bf16.msra.mxu0 0
    %2338 = vmatpush.bf16.msra.mxu0 0
    %2339 = vmatpush.bf16.msra.mxu0 %v2318
    %2340 = vmatpush.bf16.msra.mxu0 %v2317
    %2341 = vmatmul.bf16.gmra.mxu0 %v2322
    %v2342 = vpop.f32.mrf.mxu0
    %v2343 = vadd.f32 %v2290, %v2342
    %v2344 = vpop.f32.mrf.mxu0
    %v2345 = vadd.f32 %v2292, %v2344
    %2346 = vmatmul.bf16.gmra.mxu0 %v2325
    %v2347 = vpop.f32.mrf.mxu0
    %v2348 = vadd.f32 %v2295, %v2347
    %v2349 = vpop.f32.mrf.mxu0
    %v2350 = vadd.f32 %v2297, %v2349
    %2351 = vmatmul.bf16.gmra.mxu0 %v2328
    %v2352 = vpop.f32.mrf.mxu0
    %v2353 = vadd.f32 %v2300, %v2352
    %v2354 = vpop.f32.mrf.mxu0
    %v2355 = vadd.f32 %v2302, %v2354
    %2356 = vmatmul.bf16.gmra.mxu0 %v2331
    %v2357 = vpop.f32.mrf.mxu0
    %v2358 = vadd.f32 %v2305, %v2357
    %v2359 = vpop.f32.mrf.mxu0
    %v2360 = vadd.f32 %v2307, %v2359
    %2361 = vdwg.mxu0
    %v2370 = vunpack.c.l.b16 %v2042
    %v2371 = vunpack.c.l.b16 %v2043
    %v2372 = vunpack.c.l.b16 %v2044
    %v2373 = vunpack.c.l.b16 %v2045
    %v2374 = vunpack.c.l.b16 %v2046
    %v2375 = vunpack.c.l.b16 %v2047
    %v2376 = vunpack.c.l.b16 %v2048
    %v2377 = vunpack.c.l.b16 %v2049
    %v2378 = vpack.c.b16 %v2371, %v2370
    %v2379 = vpack.c.b16 %v2373, %v2372
    %v2380 = vpack.c.b16 %v2375, %v2374
    %v2381 = vpack.c.b16 %v2377, %v2376
    %2382 = vrot.lane.b32.xlu0 %v2126, 64
    %v2383 = vpop.permute.xlu0 %2382
    %2384 = vrot.lane.b32.xlu0 %v2127, 64
    %v2385 = vpop.permute.xlu0 %2384
    %2386 = vrot.lane.b32.xlu0 %v2128, 64
    %v2387 = vpop.permute.xlu0 %2386
    %2388 = vrot.lane.b32.xlu0 %v2129, 64
    %v2389 = vpop.permute.xlu0 %2388
    %v2395 = vsel %vm1321, %v2378, 0
    %v2398 = vsel %vm1321, %v2379, 0
    %v2401 = vsel %vm1321, %v2380, 0
    %v2404 = vsel %vm1321, %v2381, 0
    %2406 = vmatpush.bf16.msra.mxu0 0
    %2407 = vmatpush.bf16.msra.mxu0 0
    %2408 = vmatpush.bf16.msra.mxu0 0
    %2409 = vmatpush.bf16.msra.mxu0 0
    %2410 = vmatpush.bf16.msra.mxu0 %v2389
    %2411 = vmatpush.bf16.msra.mxu0 %v2387
    %2412 = vmatpush.bf16.msra.mxu0 %v2385
    %2413 = vmatpush.bf16.msra.mxu0 %v2383
    %2414 = vmatmul.bf16.gmra.mxu0 %v2395
    %v2415 = vpop.f32.mrf.mxu0
    %v2416 = vadd.f32 0.0, %v2415
    %v2417 = vpop.f32.mrf.mxu0
    %v2418 = vadd.f32 0.0, %v2417
    %2419 = vmatmul.bf16.gmra.mxu0 %v2398
    %v2420 = vpop.f32.mrf.mxu0
    %v2421 = vadd.f32 0.0, %v2420
    %v2422 = vpop.f32.mrf.mxu0
    %v2423 = vadd.f32 0.0, %v2422
    %2424 = vmatmul.bf16.gmra.mxu0 %v2401
    %v2425 = vpop.f32.mrf.mxu0
    %v2426 = vadd.f32 0.0, %v2425
    %v2427 = vpop.f32.mrf.mxu0
    %v2428 = vadd.f32 0.0, %v2427
    %2429 = vmatmul.bf16.gmra.mxu0 %v2404
    %v2430 = vpop.f32.mrf.mxu0
    %v2431 = vadd.f32 0.0, %v2430
    %v2432 = vpop.f32.mrf.mxu0
    %v2433 = vadd.f32 0.0, %v2432
    %2434 = vdwg.mxu0
    %v2435 = vpack.c.bf16 %v2418, %v2416
    %v2436 = vpack.c.bf16 %v2423, %v2421
    %v2437 = vpack.c.bf16 %v2428, %v2426
    %v2438 = vpack.c.bf16 %v2433, %v2431
    %v2443 = vunpack.c.l.b16 %v341
    %v2444 = vunpack.c.l.b16 %v342
    %v2445 = vunpack.c.l.b16 %v343
    %v2446 = vunpack.c.l.b16 %v344
    %v2447 = vpack.c.b16 %v2444, %v2443
    %v2448 = vpack.c.b16 %v2446, %v2445
    %v2452 = vsel %vm760, %v2435, 0
    %v2455 = vsel %vm760, %v2436, 0
    %v2458 = vsel %vm760, %v2437, 0
    %v2461 = vsel %vm760, %v2438, 0
    %2463 = vmatpush.bf16.msra.mxu0 0
    %2464 = vmatpush.bf16.msra.mxu0 0
    %2465 = vmatpush.bf16.msra.mxu0 0
    %2466 = vmatpush.bf16.msra.mxu0 0
    %2467 = vmatpush.bf16.msra.mxu0 0
    %2468 = vmatpush.bf16.msra.mxu0 0
    %2469 = vmatpush.bf16.msra.mxu0 %v2448
    %2470 = vmatpush.bf16.msra.mxu0 %v2447
    %2471 = vmatmul.bf16.gmra.mxu0 %v2452
    %v2472 = vpop.f32.mrf.mxu0
    %v2473 = vadd.f32 0.0, %v2472
    %v2474 = vpop.f32.mrf.mxu0
    %v2475 = vadd.f32 0.0, %v2474
    %2476 = vmatmul.bf16.gmra.mxu0 %v2455
    %v2477 = vpop.f32.mrf.mxu0
    %v2478 = vadd.f32 0.0, %v2477
    %v2479 = vpop.f32.mrf.mxu0
    %v2480 = vadd.f32 0.0, %v2479
    %2481 = vmatmul.bf16.gmra.mxu0 %v2458
    %v2482 = vpop.f32.mrf.mxu0
    %v2483 = vadd.f32 0.0, %v2482
    %v2484 = vpop.f32.mrf.mxu0
    %v2485 = vadd.f32 0.0, %v2484
    %2486 = vmatmul.bf16.gmra.mxu0 %v2461
    %v2487 = vpop.f32.mrf.mxu0
    %v2488 = vadd.f32 0.0, %v2487
    %v2489 = vpop.f32.mrf.mxu0
    %v2490 = vadd.f32 0.0, %v2489
    %2491 = vdwg.mxu0
    %v2492 = vadd.f32 %v2343, %v2473
    %v2493 = vadd.f32 %v2345, %v2475
    %v2494 = vadd.f32 %v2348, %v2478
    %v2495 = vadd.f32 %v2350, %v2480
    %v2496 = vadd.f32 %v2353, %v2483
    %v2497 = vadd.f32 %v2355, %v2485
    %v2498 = vadd.f32 %v2358, %v2488
    %v2499 = vadd.f32 %v2360, %v2490
    %v2508 = vunpack.c.l.b16 %v2050
    %v2509 = vunpack.c.l.b16 %v2051
    %v2510 = vunpack.c.l.b16 %v2052
    %v2511 = vunpack.c.l.b16 %v2053
    %v2512 = vunpack.c.l.b16 %v2054
    %v2513 = vunpack.c.l.b16 %v2055
    %v2514 = vunpack.c.l.b16 %v2056
    %v2515 = vunpack.c.l.b16 %v2057
    %v2516 = vpack.c.b16 %v2509, %v2508
    %v2517 = vpack.c.b16 %v2511, %v2510
    %v2518 = vpack.c.b16 %v2513, %v2512
    %v2519 = vpack.c.b16 %v2515, %v2514
    %2520 = vrot.lane.b32.xlu0 %v2126, 32
    %v2521 = vpop.permute.xlu0 %2520
    %2522 = vrot.lane.b32.xlu0 %v2127, 32
    %v2523 = vpop.permute.xlu0 %2522
    %2524 = vrot.lane.b32.xlu0 %v2128, 32
    %v2525 = vpop.permute.xlu0 %2524
    %2526 = vrot.lane.b32.xlu0 %v2129, 32
    %v2527 = vpop.permute.xlu0 %2526
    %v2533 = vsel %vm1321, %v2516, 0
    %v2536 = vsel %vm1321, %v2517, 0
    %v2539 = vsel %vm1321, %v2518, 0
    %v2542 = vsel %vm1321, %v2519, 0
    %2544 = vmatpush.bf16.msra.mxu0 0
    %2545 = vmatpush.bf16.msra.mxu0 0
    %2546 = vmatpush.bf16.msra.mxu0 0
    %2547 = vmatpush.bf16.msra.mxu0 0
    %2548 = vmatpush.bf16.msra.mxu0 %v2527
    %2549 = vmatpush.bf16.msra.mxu0 %v2525
    %2550 = vmatpush.bf16.msra.mxu0 %v2523
    %2551 = vmatpush.bf16.msra.mxu0 %v2521
    %2552 = vmatmul.bf16.gmra.mxu0 %v2533
    %v2553 = vpop.f32.mrf.mxu0
    %v2554 = vadd.f32 0.0, %v2553
    %v2555 = vpop.f32.mrf.mxu0
    %v2556 = vadd.f32 0.0, %v2555
    %2557 = vmatmul.bf16.gmra.mxu0 %v2536
    %v2558 = vpop.f32.mrf.mxu0
    %v2559 = vadd.f32 0.0, %v2558
    %v2560 = vpop.f32.mrf.mxu0
    %v2561 = vadd.f32 0.0, %v2560
    %2562 = vmatmul.bf16.gmra.mxu0 %v2539
    %v2563 = vpop.f32.mrf.mxu0
    %v2564 = vadd.f32 0.0, %v2563
    %v2565 = vpop.f32.mrf.mxu0
    %v2566 = vadd.f32 0.0, %v2565
    %2567 = vmatmul.bf16.gmra.mxu0 %v2542
    %v2568 = vpop.f32.mrf.mxu0
    %v2569 = vadd.f32 0.0, %v2568
    %v2570 = vpop.f32.mrf.mxu0
    %v2571 = vadd.f32 0.0, %v2570
    %2572 = vdwg.mxu0
    %v2573 = vpack.c.bf16 %v2556, %v2554
    %v2574 = vpack.c.bf16 %v2561, %v2559
    %v2575 = vpack.c.bf16 %v2566, %v2564
    %v2576 = vpack.c.bf16 %v2571, %v2569
    %v2581 = vunpack.c.l.b16 %v345
    %v2582 = vunpack.c.l.b16 %v346
    %v2583 = vunpack.c.l.b16 %v347
    %v2584 = vunpack.c.l.b16 %v348
    %v2585 = vpack.c.b16 %v2582, %v2581
    %v2586 = vpack.c.b16 %v2584, %v2583
    %v2590 = vsel %vm760, %v2573, 0
    %v2593 = vsel %vm760, %v2574, 0
    %v2596 = vsel %vm760, %v2575, 0
    %v2599 = vsel %vm760, %v2576, 0
    %2601 = vmatpush.bf16.msra.mxu0 0
    %2602 = vmatpush.bf16.msra.mxu0 0
    %2603 = vmatpush.bf16.msra.mxu0 0
    %2604 = vmatpush.bf16.msra.mxu0 0
    %2605 = vmatpush.bf16.msra.mxu0 0
    %2606 = vmatpush.bf16.msra.mxu0 0
    %2607 = vmatpush.bf16.msra.mxu0 %v2586
    %2608 = vmatpush.bf16.msra.mxu0 %v2585
    %2609 = vmatmul.bf16.gmra.mxu0 %v2590
    %v2610 = vpop.f32.mrf.mxu0
    %v2611 = vadd.f32 0.0, %v2610
    %v2612 = vpop.f32.mrf.mxu0
    %v2613 = vadd.f32 0.0, %v2612
    %2614 = vmatmul.bf16.gmra.mxu0 %v2593
    %v2615 = vpop.f32.mrf.mxu0
    %v2616 = vadd.f32 0.0, %v2615
    %v2617 = vpop.f32.mrf.mxu0
    %v2618 = vadd.f32 0.0, %v2617
    %2619 = vmatmul.bf16.gmra.mxu0 %v2596
    %v2620 = vpop.f32.mrf.mxu0
    %v2621 = vadd.f32 0.0, %v2620
    %v2622 = vpop.f32.mrf.mxu0
    %v2623 = vadd.f32 0.0, %v2622
    %2624 = vmatmul.bf16.gmra.mxu0 %v2599
    %v2625 = vpop.f32.mrf.mxu0
    %v2626 = vadd.f32 0.0, %v2625
    %v2627 = vpop.f32.mrf.mxu0
    %v2628 = vadd.f32 0.0, %v2627
    %2629 = vdwg.mxu0
    %v2630 = vadd.f32 %v2492, %v2611
    %v2631 = vadd.f32 %v2493, %v2613
    %v2632 = vadd.f32 %v2494, %v2616
    %v2633 = vadd.f32 %v2495, %v2618
    %v2634 = vadd.f32 %v2496, %v2621
    %v2635 = vadd.f32 %v2497, %v2623
    %v2636 = vadd.f32 %v2498, %v2626
    %v2637 = vadd.f32 %v2499, %v2628
    %v2646 = vunpack.c.l.b16 %v2058
    %v2647 = vunpack.c.l.b16 %v2059
    %v2648 = vunpack.c.l.b16 %v2060
    %v2649 = vunpack.c.l.b16 %v2061
    %v2650 = vunpack.c.l.b16 %v2062
    %v2651 = vunpack.c.l.b16 %v2063
    %v2652 = vunpack.c.l.b16 %v2064
    %v2653 = vunpack.c.l.b16 %v2065
    %v2654 = vpack.c.b16 %v2647, %v2646
    %v2655 = vpack.c.b16 %v2649, %v2648
    %v2656 = vpack.c.b16 %v2651, %v2650
    %v2657 = vpack.c.b16 %v2653, %v2652
    %v2666 = vunpack.c.l.b16 %v712
    %v2667 = vunpack.c.l.b16 %v713
    %v2668 = vunpack.c.l.b16 %v714
    %v2669 = vunpack.c.l.b16 %v715
    %v2670 = vunpack.c.l.b16 %v716
    %v2671 = vunpack.c.l.b16 %v717
    %v2672 = vunpack.c.l.b16 %v718
    %v2673 = vunpack.c.l.b16 %v719
    %v2674 = vpack.c.b16 %v2667, %v2666
    %v2675 = vpack.c.b16 %v2669, %v2668
    %v2676 = vpack.c.b16 %v2671, %v2670
    %v2677 = vpack.c.b16 %v2673, %v2672
    %v2683 = vsel %vm1321, %v2654, 0
    %v2686 = vsel %vm1321, %v2655, 0
    %v2689 = vsel %vm1321, %v2656, 0
    %v2692 = vsel %vm1321, %v2657, 0
    %2694 = vmatpush.bf16.msra.mxu0 0
    %2695 = vmatpush.bf16.msra.mxu0 0
    %2696 = vmatpush.bf16.msra.mxu0 0
    %2697 = vmatpush.bf16.msra.mxu0 0
    %2698 = vmatpush.bf16.msra.mxu0 %v2677
    %2699 = vmatpush.bf16.msra.mxu0 %v2676
    %2700 = vmatpush.bf16.msra.mxu0 %v2675
    %2701 = vmatpush.bf16.msra.mxu0 %v2674
    %2702 = vmatmul.bf16.gmra.mxu0 %v2683
    %v2703 = vpop.f32.mrf.mxu0
    %v2704 = vadd.f32 0.0, %v2703
    %v2705 = vpop.f32.mrf.mxu0
    %v2706 = vadd.f32 0.0, %v2705
    %2707 = vmatmul.bf16.gmra.mxu0 %v2686
    %v2708 = vpop.f32.mrf.mxu0
    %v2709 = vadd.f32 0.0, %v2708
    %v2710 = vpop.f32.mrf.mxu0
    %v2711 = vadd.f32 0.0, %v2710
    %2712 = vmatmul.bf16.gmra.mxu0 %v2689
    %v2713 = vpop.f32.mrf.mxu0
    %v2714 = vadd.f32 0.0, %v2713
    %v2715 = vpop.f32.mrf.mxu0
    %v2716 = vadd.f32 0.0, %v2715
    %2717 = vmatmul.bf16.gmra.mxu0 %v2692
    %v2718 = vpop.f32.mrf.mxu0
    %v2719 = vadd.f32 0.0, %v2718
    %v2720 = vpop.f32.mrf.mxu0
    %v2721 = vadd.f32 0.0, %v2720
    %2722 = vdwg.mxu0
    %v2723 = vpack.c.bf16 %v2706, %v2704
    %v2724 = vpack.c.bf16 %v2711, %v2709
    %v2725 = vpack.c.bf16 %v2716, %v2714
    %v2726 = vpack.c.bf16 %v2721, %v2719
    %v2735 = vunpack.c.l.b16 %v2066
    %v2736 = vunpack.c.l.b16 %v2067
    %v2737 = vunpack.c.l.b16 %v2068
    %v2738 = vunpack.c.l.b16 %v2069
    %v2739 = vunpack.c.l.b16 %v2070
    %v2740 = vunpack.c.l.b16 %v2071
    %v2741 = vunpack.c.l.b16 %v2072
    %v2742 = vunpack.c.l.b16 %v2073
    %v2743 = vpack.c.b16 %v2736, %v2735
    %v2744 = vpack.c.b16 %v2738, %v2737
    %v2745 = vpack.c.b16 %v2740, %v2739
    %v2746 = vpack.c.b16 %v2742, %v2741
    %2747 = vrot.lane.b32.xlu0 %v2674, 96
    %v2748 = vpop.permute.xlu0 %2747
    %2749 = vrot.lane.b32.xlu0 %v2675, 96
    %v2750 = vpop.permute.xlu0 %2749
    %2751 = vrot.lane.b32.xlu0 %v2676, 96
    %v2752 = vpop.permute.xlu0 %2751
    %2753 = vrot.lane.b32.xlu0 %v2677, 96
    %v2754 = vpop.permute.xlu0 %2753
    %v2760 = vsel %vm1321, %v2743, 0
    %v2763 = vsel %vm1321, %v2744, 0
    %v2766 = vsel %vm1321, %v2745, 0
    %v2769 = vsel %vm1321, %v2746, 0
    %2771 = vmatpush.bf16.msra.mxu0 0
    %2772 = vmatpush.bf16.msra.mxu0 0
    %2773 = vmatpush.bf16.msra.mxu0 0
    %2774 = vmatpush.bf16.msra.mxu0 0
    %2775 = vmatpush.bf16.msra.mxu0 %v2754
    %2776 = vmatpush.bf16.msra.mxu0 %v2752
    %2777 = vmatpush.bf16.msra.mxu0 %v2750
    %2778 = vmatpush.bf16.msra.mxu0 %v2748
    %2779 = vmatmul.bf16.gmra.mxu0 %v2760
    %v2780 = vpop.f32.mrf.mxu0
    %v2781 = vadd.f32 0.0, %v2780
    %v2782 = vpop.f32.mrf.mxu0
    %v2783 = vadd.f32 0.0, %v2782
    %2784 = vmatmul.bf16.gmra.mxu0 %v2763
    %v2785 = vpop.f32.mrf.mxu0
    %v2786 = vadd.f32 0.0, %v2785
    %v2787 = vpop.f32.mrf.mxu0
    %v2788 = vadd.f32 0.0, %v2787
    %2789 = vmatmul.bf16.gmra.mxu0 %v2766
    %v2790 = vpop.f32.mrf.mxu0
    %v2791 = vadd.f32 0.0, %v2790
    %v2792 = vpop.f32.mrf.mxu0
    %v2793 = vadd.f32 0.0, %v2792
    %2794 = vmatmul.bf16.gmra.mxu0 %v2769
    %v2795 = vpop.f32.mrf.mxu0
    %v2796 = vadd.f32 0.0, %v2795
    %v2797 = vpop.f32.mrf.mxu0
    %v2798 = vadd.f32 0.0, %v2797
    %2799 = vdwg.mxu0
    %v2800 = vpack.c.bf16 %v2783, %v2781
    %v2801 = vpack.c.bf16 %v2788, %v2786
    %v2802 = vpack.c.bf16 %v2793, %v2791
    %v2803 = vpack.c.bf16 %v2798, %v2796
    %v2805 = vsel %vm760, %v2800, 0
    %v2808 = vsel %vm760, %v2801, 0
    %v2811 = vsel %vm760, %v2802, 0
    %v2814 = vsel %vm760, %v2803, 0
    %2816 = vmatpush.bf16.msra.mxu0 0
    %2817 = vmatpush.bf16.msra.mxu0 0
    %2818 = vmatpush.bf16.msra.mxu0 0
    %2819 = vmatpush.bf16.msra.mxu0 0
    %2820 = vmatpush.bf16.msra.mxu0 0
    %2821 = vmatpush.bf16.msra.mxu0 0
    %2822 = vmatpush.bf16.msra.mxu0 %v2265
    %2823 = vmatpush.bf16.msra.mxu0 %v2264
    %2824 = vmatmul.bf16.gmra.mxu0 %v2805
    %v2825 = vpop.f32.mrf.mxu0
    %v2826 = vadd.f32 0.0, %v2825
    %v2827 = vpop.f32.mrf.mxu0
    %v2828 = vadd.f32 0.0, %v2827
    %2829 = vmatmul.bf16.gmra.mxu0 %v2808
    %v2830 = vpop.f32.mrf.mxu0
    %v2831 = vadd.f32 0.0, %v2830
    %v2832 = vpop.f32.mrf.mxu0
    %v2833 = vadd.f32 0.0, %v2832
    %2834 = vmatmul.bf16.gmra.mxu0 %v2811
    %v2835 = vpop.f32.mrf.mxu0
    %v2836 = vadd.f32 0.0, %v2835
    %v2837 = vpop.f32.mrf.mxu0
    %v2838 = vadd.f32 0.0, %v2837
    %2839 = vmatmul.bf16.gmra.mxu0 %v2814
    %v2840 = vpop.f32.mrf.mxu0
    %v2841 = vadd.f32 0.0, %v2840
    %v2842 = vpop.f32.mrf.mxu0
    %v2843 = vadd.f32 0.0, %v2842
    %2844 = vdwg.mxu0
    %v2846 = vsel %vm760, %v2723, 0
    %v2849 = vsel %vm760, %v2724, 0
    %v2852 = vsel %vm760, %v2725, 0
    %v2855 = vsel %vm760, %v2726, 0
    %2857 = vmatpush.bf16.msra.mxu0 0
    %2858 = vmatpush.bf16.msra.mxu0 0
    %2859 = vmatpush.bf16.msra.mxu0 0
    %2860 = vmatpush.bf16.msra.mxu0 0
    %2861 = vmatpush.bf16.msra.mxu0 0
    %2862 = vmatpush.bf16.msra.mxu0 0
    %2863 = vmatpush.bf16.msra.mxu0 %v2318
    %2864 = vmatpush.bf16.msra.mxu0 %v2317
    %2865 = vmatmul.bf16.gmra.mxu0 %v2846
    %v2866 = vpop.f32.mrf.mxu0
    %v2867 = vadd.f32 %v2826, %v2866
    %v2868 = vpop.f32.mrf.mxu0
    %v2869 = vadd.f32 %v2828, %v2868
    %2870 = vmatmul.bf16.gmra.mxu0 %v2849
    %v2871 = vpop.f32.mrf.mxu0
    %v2872 = vadd.f32 %v2831, %v2871
    %v2873 = vpop.f32.mrf.mxu0
    %v2874 = vadd.f32 %v2833, %v2873
    %2875 = vmatmul.bf16.gmra.mxu0 %v2852
    %v2876 = vpop.f32.mrf.mxu0
    %v2877 = vadd.f32 %v2836, %v2876
    %v2878 = vpop.f32.mrf.mxu0
    %v2879 = vadd.f32 %v2838, %v2878
    %2880 = vmatmul.bf16.gmra.mxu0 %v2855
    %v2881 = vpop.f32.mrf.mxu0
    %v2882 = vadd.f32 %v2841, %v2881
    %v2883 = vpop.f32.mrf.mxu0
    %v2884 = vadd.f32 %v2843, %v2883
    %2885 = vdwg.mxu0
    %v2894 = vunpack.c.l.b16 %v2074
    %v2895 = vunpack.c.l.b16 %v2075
    %v2896 = vunpack.c.l.b16 %v2076
    %v2897 = vunpack.c.l.b16 %v2077
    %v2898 = vunpack.c.l.b16 %v2078
    %v2899 = vunpack.c.l.b16 %v2079
    %v2900 = vunpack.c.l.b16 %v2080
    %v2901 = vunpack.c.l.b16 %v2081
    %v2902 = vpack.c.b16 %v2895, %v2894
    %v2903 = vpack.c.b16 %v2897, %v2896
    %v2904 = vpack.c.b16 %v2899, %v2898
    %v2905 = vpack.c.b16 %v2901, %v2900
    %2906 = vrot.lane.b32.xlu0 %v2674, 64
    %v2907 = vpop.permute.xlu0 %2906
    %2908 = vrot.lane.b32.xlu0 %v2675, 64
    %v2909 = vpop.permute.xlu0 %2908
    %2910 = vrot.lane.b32.xlu0 %v2676, 64
    %v2911 = vpop.permute.xlu0 %2910
    %2912 = vrot.lane.b32.xlu0 %v2677, 64
    %v2913 = vpop.permute.xlu0 %2912
    %v2919 = vsel %vm1321, %v2902, 0
    %v2922 = vsel %vm1321, %v2903, 0
    %v2925 = vsel %vm1321, %v2904, 0
    %v2928 = vsel %vm1321, %v2905, 0
    %2930 = vmatpush.bf16.msra.mxu0 0
    %2931 = vmatpush.bf16.msra.mxu0 0
    %2932 = vmatpush.bf16.msra.mxu0 0
    %2933 = vmatpush.bf16.msra.mxu0 0
    %2934 = vmatpush.bf16.msra.mxu0 %v2913
    %2935 = vmatpush.bf16.msra.mxu0 %v2911
    %2936 = vmatpush.bf16.msra.mxu0 %v2909
    %2937 = vmatpush.bf16.msra.mxu0 %v2907
    %2938 = vmatmul.bf16.gmra.mxu0 %v2919
    %v2939 = vpop.f32.mrf.mxu0
    %v2940 = vadd.f32 0.0, %v2939
    %v2941 = vpop.f32.mrf.mxu0
    %v2942 = vadd.f32 0.0, %v2941
    %2943 = vmatmul.bf16.gmra.mxu0 %v2922
    %v2944 = vpop.f32.mrf.mxu0
    %v2945 = vadd.f32 0.0, %v2944
    %v2946 = vpop.f32.mrf.mxu0
    %v2947 = vadd.f32 0.0, %v2946
    %2948 = vmatmul.bf16.gmra.mxu0 %v2925
    %v2949 = vpop.f32.mrf.mxu0
    %v2950 = vadd.f32 0.0, %v2949
    %v2951 = vpop.f32.mrf.mxu0
    %v2952 = vadd.f32 0.0, %v2951
    %2953 = vmatmul.bf16.gmra.mxu0 %v2928
    %v2954 = vpop.f32.mrf.mxu0
    %v2955 = vadd.f32 0.0, %v2954
    %v2956 = vpop.f32.mrf.mxu0
    %v2957 = vadd.f32 0.0, %v2956
    %2958 = vdwg.mxu0
    %v2959 = vpack.c.bf16 %v2942, %v2940
    %v2960 = vpack.c.bf16 %v2947, %v2945
    %v2961 = vpack.c.bf16 %v2952, %v2950
    %v2962 = vpack.c.bf16 %v2957, %v2955
    %v2964 = vsel %vm760, %v2959, 0
    %v2967 = vsel %vm760, %v2960, 0
    %v2970 = vsel %vm760, %v2961, 0
    %v2973 = vsel %vm760, %v2962, 0
    %2975 = vmatpush.bf16.msra.mxu0 0
    %2976 = vmatpush.bf16.msra.mxu0 0
    %2977 = vmatpush.bf16.msra.mxu0 0
    %2978 = vmatpush.bf16.msra.mxu0 0
    %2979 = vmatpush.bf16.msra.mxu0 0
    %2980 = vmatpush.bf16.msra.mxu0 0
    %2981 = vmatpush.bf16.msra.mxu0 %v2448
    %2982 = vmatpush.bf16.msra.mxu0 %v2447
    %2983 = vmatmul.bf16.gmra.mxu0 %v2964
    %v2984 = vpop.f32.mrf.mxu0
    %v2985 = vadd.f32 0.0, %v2984
    %v2986 = vpop.f32.mrf.mxu0
    %v2987 = vadd.f32 0.0, %v2986
    %2988 = vmatmul.bf16.gmra.mxu0 %v2967
    %v2989 = vpop.f32.mrf.mxu0
    %v2990 = vadd.f32 0.0, %v2989
    %v2991 = vpop.f32.mrf.mxu0
    %v2992 = vadd.f32 0.0, %v2991
    %2993 = vmatmul.bf16.gmra.mxu0 %v2970
    %v2994 = vpop.f32.mrf.mxu0
    %v2995 = vadd.f32 0.0, %v2994
    %v2996 = vpop.f32.mrf.mxu0
    %v2997 = vadd.f32 0.0, %v2996
    %2998 = vmatmul.bf16.gmra.mxu0 %v2973
    %v2999 = vpop.f32.mrf.mxu0
    %v3000 = vadd.f32 0.0, %v2999
    %v3001 = vpop.f32.mrf.mxu0
    %v3002 = vadd.f32 0.0, %v3001
    %3003 = vdwg.mxu0
    %v3004 = vadd.f32 %v2867, %v2985
    %v3005 = vadd.f32 %v2869, %v2987
    %v3006 = vadd.f32 %v2872, %v2990
    %v3007 = vadd.f32 %v2874, %v2992
    %v3008 = vadd.f32 %v2877, %v2995
    %v3009 = vadd.f32 %v2879, %v2997
    %v3010 = vadd.f32 %v2882, %v3000
    %v3011 = vadd.f32 %v2884, %v3002
    %v3020 = vunpack.c.l.b16 %v2082
    %v3021 = vunpack.c.l.b16 %v2083
    %v3022 = vunpack.c.l.b16 %v2084
    %v3023 = vunpack.c.l.b16 %v2085
    %v3024 = vunpack.c.l.b16 %v2086
    %v3025 = vunpack.c.l.b16 %v2087
    %v3026 = vunpack.c.l.b16 %v2088
    %v3027 = vunpack.c.l.b16 %v2089
    %v3028 = vpack.c.b16 %v3021, %v3020
    %v3029 = vpack.c.b16 %v3023, %v3022
    %v3030 = vpack.c.b16 %v3025, %v3024
    %v3031 = vpack.c.b16 %v3027, %v3026
    %3032 = vrot.lane.b32.xlu0 %v2674, 32
    %v3033 = vpop.permute.xlu0 %3032
    %3034 = vrot.lane.b32.xlu0 %v2675, 32
    %v3035 = vpop.permute.xlu0 %3034
    %3036 = vrot.lane.b32.xlu0 %v2676, 32
    %v3037 = vpop.permute.xlu0 %3036
    %3038 = vrot.lane.b32.xlu0 %v2677, 32
    %v3039 = vpop.permute.xlu0 %3038
    %v3045 = vsel %vm1321, %v3028, 0
    %v3048 = vsel %vm1321, %v3029, 0
    %v3051 = vsel %vm1321, %v3030, 0
    %v3054 = vsel %vm1321, %v3031, 0
    %3056 = vmatpush.bf16.msra.mxu0 0
    %3057 = vmatpush.bf16.msra.mxu0 0
    %3058 = vmatpush.bf16.msra.mxu0 0
    %3059 = vmatpush.bf16.msra.mxu0 0
    %3060 = vmatpush.bf16.msra.mxu0 %v3039
    %3061 = vmatpush.bf16.msra.mxu0 %v3037
    %3062 = vmatpush.bf16.msra.mxu0 %v3035
    %3063 = vmatpush.bf16.msra.mxu0 %v3033
    %3064 = vmatmul.bf16.gmra.mxu0 %v3045
    %v3065 = vpop.f32.mrf.mxu0
    %v3066 = vadd.f32 0.0, %v3065
    %v3067 = vpop.f32.mrf.mxu0
    %v3068 = vadd.f32 0.0, %v3067
    %3069 = vmatmul.bf16.gmra.mxu0 %v3048
    %v3070 = vpop.f32.mrf.mxu0
    %v3071 = vadd.f32 0.0, %v3070
    %v3072 = vpop.f32.mrf.mxu0
    %v3073 = vadd.f32 0.0, %v3072
    %3074 = vmatmul.bf16.gmra.mxu0 %v3051
    %v3075 = vpop.f32.mrf.mxu0
    %v3076 = vadd.f32 0.0, %v3075
    %v3077 = vpop.f32.mrf.mxu0
    %v3078 = vadd.f32 0.0, %v3077
    %3079 = vmatmul.bf16.gmra.mxu0 %v3054
    %v3080 = vpop.f32.mrf.mxu0
    %v3081 = vadd.f32 0.0, %v3080
    %v3082 = vpop.f32.mrf.mxu0
    %v3083 = vadd.f32 0.0, %v3082
    %3084 = vdwg.mxu0
    %v3085 = vpack.c.bf16 %v3068, %v3066
    %v3086 = vpack.c.bf16 %v3073, %v3071
    %v3087 = vpack.c.bf16 %v3078, %v3076
    %v3088 = vpack.c.bf16 %v3083, %v3081
    %v3090 = vsel %vm760, %v3085, 0
    %v3093 = vsel %vm760, %v3086, 0
    %v3096 = vsel %vm760, %v3087, 0
    %v3099 = vsel %vm760, %v3088, 0
    %3101 = vmatpush.bf16.msra.mxu0 0
    %3102 = vmatpush.bf16.msra.mxu0 0
    %3103 = vmatpush.bf16.msra.mxu0 0
    %3104 = vmatpush.bf16.msra.mxu0 0
    %3105 = vmatpush.bf16.msra.mxu0 0
    %3106 = vmatpush.bf16.msra.mxu0 0
    %3107 = vmatpush.bf16.msra.mxu0 %v2586
    %3108 = vmatpush.bf16.msra.mxu0 %v2585
    %3109 = vmatmul.bf16.gmra.mxu0 %v3090
    %v3110 = vpop.f32.mrf.mxu0
    %v3111 = vadd.f32 0.0, %v3110
    %v3112 = vpop.f32.mrf.mxu0
    %v3113 = vadd.f32 0.0, %v3112
    %3114 = vmatmul.bf16.gmra.mxu0 %v3093
    %v3115 = vpop.f32.mrf.mxu0
    %v3116 = vadd.f32 0.0, %v3115
    %v3117 = vpop.f32.mrf.mxu0
    %v3118 = vadd.f32 0.0, %v3117
    %3119 = vmatmul.bf16.gmra.mxu0 %v3096
    %v3120 = vpop.f32.mrf.mxu0
    %v3121 = vadd.f32 0.0, %v3120
    %v3122 = vpop.f32.mrf.mxu0
    %v3123 = vadd.f32 0.0, %v3122
    %3124 = vmatmul.bf16.gmra.mxu0 %v3099
    %v3125 = vpop.f32.mrf.mxu0
    %v3126 = vadd.f32 0.0, %v3125
    %v3127 = vpop.f32.mrf.mxu0
    %v3128 = vadd.f32 0.0, %v3127
    %3129 = vdwg.mxu0
    %v3130 = vadd.f32 %v3004, %v3111
    %v3131 = vadd.f32 %v3005, %v3113
    %v3132 = vadd.f32 %v3006, %v3116
    %v3133 = vadd.f32 %v3007, %v3118
    %v3134 = vadd.f32 %v3008, %v3121
    %v3135 = vadd.f32 %v3009, %v3123
    %v3136 = vadd.f32 %v3010, %v3126
    %v3137 = vadd.f32 %v3011, %v3128
    %v3139 = vperm.slane %v349, 0
    %v3141 = vadd.f32 %v2630, %v3139
    %v3142 = vadd.f32 %v2631, %v3139
    %v3143 = vadd.f32 %v2632, %v3139
    %v3144 = vadd.f32 %v2633, %v3139
    %v3145 = vadd.f32 %v2634, %v3139
    %v3146 = vadd.f32 %v2635, %v3139
    %v3147 = vadd.f32 %v2636, %v3139
    %v3148 = vadd.f32 %v2637, %v3139
    %v3149 = vadd.f32 %v3130, %v3139
    %v3150 = vadd.f32 %v3131, %v3139
    %v3151 = vadd.f32 %v3132, %v3139
    %v3152 = vadd.f32 %v3133, %v3139
    %v3153 = vadd.f32 %v3134, %v3139
    %v3154 = vadd.f32 %v3135, %v3139
    %v3155 = vadd.f32 %v3136, %v3139
    %v3156 = vadd.f32 %v3137, %v3139
    %v3157 = vadd.f32 %v284, %v3141
    %v3158 = vadd.f32 %v285, %v3142
    %v3159 = vadd.f32 %v286, %v3143
    %v3160 = vadd.f32 %v287, %v3144
    %v3161 = vadd.f32 %v288, %v3145
    %v3162 = vadd.f32 %v289, %v3146
    %v3163 = vadd.f32 %v290, %v3147
    %v3164 = vadd.f32 %v291, %v3148
    %v3165 = vadd.f32 %v292, %v3149
    %v3166 = vadd.f32 %v293, %v3150
    %v3167 = vadd.f32 %v294, %v3151
    %v3168 = vadd.f32 %v295, %v3152
    %v3169 = vadd.f32 %v296, %v3153
    %v3170 = vadd.f32 %v297, %v3154
    %v3171 = vadd.f32 %v298, %v3155
    %v3172 = vadd.f32 %v299, %v3156
    %v3173 = vpack.c.bf16 %v3158, %v3157
    %v3174 = vpack.c.bf16 %v3160, %v3159
    %v3175 = vpack.c.bf16 %v3162, %v3161
    %v3176 = vpack.c.bf16 %v3164, %v3163
    %v3177 = vpack.c.bf16 %v3166, %v3165
    %v3178 = vpack.c.bf16 %v3168, %v3167
    %v3179 = vpack.c.bf16 %v3170, %v3169
    %v3180 = vpack.c.bf16 %v3172, %v3171
    %v3197 = vunpack.c.l.b16 %v350
    %v3198 = vunpack.c.l.b16 %v351
    %v3199 = vunpack.c.l.b16 %v352
    %v3200 = vunpack.c.l.b16 %v353
    %v3201 = vunpack.c.l.b16 %v354
    %v3202 = vunpack.c.l.b16 %v355
    %v3203 = vunpack.c.l.b16 %v356
    %v3204 = vunpack.c.l.b16 %v357
    %v3205 = vunpack.c.l.b16 %v358
    %v3206 = vunpack.c.l.b16 %v359
    %v3207 = vunpack.c.l.b16 %v360
    %v3208 = vunpack.c.l.b16 %v361
    %v3209 = vunpack.c.l.b16 %v362
    %v3210 = vunpack.c.l.b16 %v363
    %v3211 = vunpack.c.l.b16 %v364
    %v3212 = vunpack.c.l.b16 %v365
    %v3213 = vpack.c.b16 %v3198, %v3197
    %v3214 = vpack.c.b16 %v3200, %v3199
    %v3215 = vpack.c.b16 %v3202, %v3201
    %v3216 = vpack.c.b16 %v3204, %v3203
    %v3217 = vpack.c.b16 %v3206, %v3205
    %v3218 = vpack.c.b16 %v3208, %v3207
    %v3219 = vpack.c.b16 %v3210, %v3209
    %v3220 = vpack.c.b16 %v3212, %v3211
    %3229 = vmatpush.bf16.msra.mxu0 %v3220
    %3230 = vmatpush.bf16.msra.mxu0 %v3219
    %3231 = vmatpush.bf16.msra.mxu0 %v3218
    %3232 = vmatpush.bf16.msra.mxu0 %v3217
    %3233 = vmatpush.bf16.msra.mxu0 %v3216
    %3234 = vmatpush.bf16.msra.mxu0 %v3215
    %3235 = vmatpush.bf16.msra.mxu0 %v3214
    %3236 = vmatpush.bf16.msra.mxu0 %v3213
    %3237 = vmatmul.bf16.gmra.mxu0 %v3173
    %v3238 = vpop.f32.mrf.mxu0
    %v3239 = vadd.f32 0.0, %v3238
    %v3240 = vpop.f32.mrf.mxu0
    %v3241 = vadd.f32 0.0, %v3240
    %3242 = vmatmul.bf16.gmra.mxu0 %v3174
    %v3243 = vpop.f32.mrf.mxu0
    %v3244 = vadd.f32 0.0, %v3243
    %v3245 = vpop.f32.mrf.mxu0
    %v3246 = vadd.f32 0.0, %v3245
    %3247 = vmatmul.bf16.gmra.mxu0 %v3175
    %v3248 = vpop.f32.mrf.mxu0
    %v3249 = vadd.f32 0.0, %v3248
    %v3250 = vpop.f32.mrf.mxu0
    %v3251 = vadd.f32 0.0, %v3250
    %3252 = vmatmul.bf16.gmra.mxu0 %v3176
    %v3253 = vpop.f32.mrf.mxu0
    %v3254 = vadd.f32 0.0, %v3253
    %v3255 = vpop.f32.mrf.mxu0
    %v3256 = vadd.f32 0.0, %v3255
    %3257 = vmatmul.bf16.gmra.mxu0 %v3177
    %v3258 = vpop.f32.mrf.mxu0
    %v3259 = vadd.f32 0.0, %v3258
    %v3260 = vpop.f32.mrf.mxu0
    %v3261 = vadd.f32 0.0, %v3260
    %3262 = vmatmul.bf16.gmra.mxu0 %v3178
    %v3263 = vpop.f32.mrf.mxu0
    %v3264 = vadd.f32 0.0, %v3263
    %v3265 = vpop.f32.mrf.mxu0
    %v3266 = vadd.f32 0.0, %v3265
    %3267 = vmatmul.bf16.gmra.mxu0 %v3179
    %v3268 = vpop.f32.mrf.mxu0
    %v3269 = vadd.f32 0.0, %v3268
    %v3270 = vpop.f32.mrf.mxu0
    %v3271 = vadd.f32 0.0, %v3270
    %3272 = vmatmul.bf16.gmra.mxu0 %v3180
    %v3273 = vpop.f32.mrf.mxu0
    %v3274 = vadd.f32 0.0, %v3273
    %v3275 = vpop.f32.mrf.mxu0
    %v3276 = vadd.f32 0.0, %v3275
    %3277 = vdwg.mxu0
    %v3278 = vpack.c.bf16 %v3241, %v3239
    %v3279 = vpack.c.bf16 %v3246, %v3244
    %v3280 = vpack.c.bf16 %v3251, %v3249
    %v3281 = vpack.c.bf16 %v3256, %v3254
    %v3282 = vpack.c.bf16 %v3261, %v3259
    %v3283 = vpack.c.bf16 %v3266, %v3264
    %v3284 = vpack.c.bf16 %v3271, %v3269
    %v3285 = vpack.c.bf16 %v3276, %v3274
    %v3302 = vunpack.c.l.b16 %v366
    %v3303 = vunpack.c.l.b16 %v367
    %v3304 = vunpack.c.l.b16 %v368
    %v3305 = vunpack.c.l.b16 %v369
    %v3306 = vunpack.c.l.b16 %v370
    %v3307 = vunpack.c.l.b16 %v371
    %v3308 = vunpack.c.l.b16 %v372
    %v3309 = vunpack.c.l.b16 %v373
    %v3310 = vunpack.c.l.b16 %v374
    %v3311 = vunpack.c.l.b16 %v375
    %v3312 = vunpack.c.l.b16 %v376
    %v3313 = vunpack.c.l.b16 %v377
    %v3314 = vunpack.c.l.b16 %v378
    %v3315 = vunpack.c.l.b16 %v379
    %v3316 = vunpack.c.l.b16 %v380
    %v3317 = vunpack.c.l.b16 %v381
    %v3318 = vpack.c.b16 %v3303, %v3302
    %v3319 = vpack.c.b16 %v3305, %v3304
    %v3320 = vpack.c.b16 %v3307, %v3306
    %v3321 = vpack.c.b16 %v3309, %v3308
    %v3322 = vpack.c.b16 %v3311, %v3310
    %v3323 = vpack.c.b16 %v3313, %v3312
    %v3324 = vpack.c.b16 %v3315, %v3314
    %v3325 = vpack.c.b16 %v3317, %v3316
    %3334 = vmatpush.bf16.msra.mxu0 %v3325
    %3335 = vmatpush.bf16.msra.mxu0 %v3324
    %3336 = vmatpush.bf16.msra.mxu0 %v3323
    %3337 = vmatpush.bf16.msra.mxu0 %v3322
    %3338 = vmatpush.bf16.msra.mxu0 %v3321
    %3339 = vmatpush.bf16.msra.mxu0 %v3320
    %3340 = vmatpush.bf16.msra.mxu0 %v3319
    %3341 = vmatpush.bf16.msra.mxu0 %v3318
    %3342 = vmatmul.bf16.gmra.mxu0 %v3278
    %v3343 = vpop.f32.mrf.mxu0
    %v3344 = vadd.f32 0.0, %v3343
    %v3345 = vpop.f32.mrf.mxu0
    %v3346 = vadd.f32 0.0, %v3345
    %3347 = vmatmul.bf16.gmra.mxu0 %v3279
    %v3348 = vpop.f32.mrf.mxu0
    %v3349 = vadd.f32 0.0, %v3348
    %v3350 = vpop.f32.mrf.mxu0
    %v3351 = vadd.f32 0.0, %v3350
    %3352 = vmatmul.bf16.gmra.mxu0 %v3280
    %v3353 = vpop.f32.mrf.mxu0
    %v3354 = vadd.f32 0.0, %v3353
    %v3355 = vpop.f32.mrf.mxu0
    %v3356 = vadd.f32 0.0, %v3355
    %3357 = vmatmul.bf16.gmra.mxu0 %v3281
    %v3358 = vpop.f32.mrf.mxu0
    %v3359 = vadd.f32 0.0, %v3358
    %v3360 = vpop.f32.mrf.mxu0
    %v3361 = vadd.f32 0.0, %v3360
    %3362 = vmatmul.bf16.gmra.mxu0 %v3282
    %v3363 = vpop.f32.mrf.mxu0
    %v3364 = vadd.f32 0.0, %v3363
    %v3365 = vpop.f32.mrf.mxu0
    %v3366 = vadd.f32 0.0, %v3365
    %3367 = vmatmul.bf16.gmra.mxu0 %v3283
    %v3368 = vpop.f32.mrf.mxu0
    %v3369 = vadd.f32 0.0, %v3368
    %v3370 = vpop.f32.mrf.mxu0
    %v3371 = vadd.f32 0.0, %v3370
    %3372 = vmatmul.bf16.gmra.mxu0 %v3284
    %v3373 = vpop.f32.mrf.mxu0
    %v3374 = vadd.f32 0.0, %v3373
    %v3375 = vpop.f32.mrf.mxu0
    %v3376 = vadd.f32 0.0, %v3375
    %3377 = vmatmul.bf16.gmra.mxu0 %v3285
    %v3378 = vpop.f32.mrf.mxu0
    %v3379 = vadd.f32 0.0, %v3378
    %v3380 = vpop.f32.mrf.mxu0
    %v3381 = vadd.f32 0.0, %v3380
    %3382 = vdwg.mxu0
    %v3383 = vadd.f32 %v3157, %v3344
    %v3384 = vadd.f32 %v3158, %v3346
    %v3385 = vadd.f32 %v3159, %v3349
    %v3386 = vadd.f32 %v3160, %v3351
    %v3387 = vadd.f32 %v3161, %v3354
    %v3388 = vadd.f32 %v3162, %v3356
    %v3389 = vadd.f32 %v3163, %v3359
    %v3390 = vadd.f32 %v3164, %v3361
    %v3391 = vadd.f32 %v3165, %v3364
    %v3392 = vadd.f32 %v3166, %v3366
    %v3393 = vadd.f32 %v3167, %v3369
    %v3394 = vadd.f32 %v3168, %v3371
    %v3395 = vadd.f32 %v3169, %v3374
    %v3396 = vadd.f32 %v3170, %v3376
    %v3397 = vadd.f32 %v3171, %v3379
    %v3398 = vadd.f32 %v3172, %v3381
    %s3399 = scalar_lea.vmem [#allocation7], 192
    %v3400 = vld [vmem:[%s3399] sm:$0xff]
    %v3401 = vld [vmem:[%s3399 + $0x8] sm:$0xf]
    %v3402 = vld [vmem:[%s3399 + $0xc] sm:$0xff]
    %v3403 = vld [vmem:[%s3399 + $0x14] sm:$0xf]
    %v3404 = vld [vmem:[%s3399 + $0x18] sm:$0xff]
    %v3405 = vld [vmem:[%s3399 + $0x20] sm:$0xf]
    %v3406 = vld [vmem:[%s3399 + $0x24] sm:$0xff]
    %v3407 = vld [vmem:[%s3399 + $0x2c] sm:$0xf]
    %v3408 = vld [vmem:[%s3399 + $0x30] sm:$0xff]
    %v3409 = vld [vmem:[%s3399 + $0x38] sm:$0xf]
    %v3410 = vld [vmem:[%s3399 + $0x3c] sm:$0xff]
    %v3411 = vld [vmem:[%s3399 + $0x44] sm:$0xf]
    %v3412 = vld [vmem:[%s3399 + $0x48] sm:$0xff]
    %v3413 = vld [vmem:[%s3399 + $0x50] sm:$0xf]
    %v3414 = vld [vmem:[%s3399 + $0x54] sm:$0xff]
    %v3415 = vld [vmem:[%s3399 + $0x5c] sm:$0xf]
    %v3416 = vld [vmem:[%s3399 + $0x60] sm:$0xff]
    %v3417 = vld [vmem:[%s3399 + $0x68] sm:$0xf]
    %v3418 = vld [vmem:[%s3399 + $0x6c] sm:$0xff]
    %v3419 = vld [vmem:[%s3399 + $0x74] sm:$0xf]
    %v3420 = vld [vmem:[%s3399 + $0x78] sm:$0xff]
    %v3421 = vld [vmem:[%s3399 + $0x80] sm:$0xf]
    %v3422 = vld [vmem:[%s3399 + $0x84] sm:$0xff]
    %v3423 = vld [vmem:[%s3399 + $0x8c] sm:$0xf]
    %v3424 = vld [vmem:[%s3399 + $0x90] sm:$0xff]
    %v3425 = vld [vmem:[%s3399 + $0x98] sm:$0xf]
    %v3426 = vld [vmem:[%s3399 + $0x9c] sm:$0xff]
    %v3427 = vld [vmem:[%s3399 + $0xa4] sm:$0xf]
    %v3428 = vld [vmem:[%s3399 + $0xa8] sm:$0xff]
    %v3429 = vld [vmem:[%s3399 + $0xb0] sm:$0xf]
    %v3430 = vld [vmem:[%s3399 + $0xb4] sm:$0xff]
    %v3431 = vld [vmem:[%s3399 + $0xbc] sm:$0xf]
    %s3432 = scalar_lea.vmem [#allocation8], 3
    %v3433 = vld [vmem:[%s3432] sm:$0x7]
    %s3434 = scalar_lea.vmem [#allocation10], 64
    %v3435 = vld [vmem:[%s3434] sm:$0xf]
    %v3436 = vld [vmem:[%s3434 + $0x4] sm:$0xf]
    %v3437 = vld [vmem:[%s3434 + $0x8] sm:$0xf]
    %v3438 = vld [vmem:[%s3434 + $0xc] sm:$0xf]
    %v3439 = vld [vmem:[%s3434 + $0x10] sm:$0xf]
    %v3440 = vld [vmem:[%s3434 + $0x14] sm:$0xf]
    %v3441 = vld [vmem:[%s3434 + $0x18] sm:$0xf]
    %v3442 = vld [vmem:[%s3434 + $0x1c] sm:$0xf]
    %v3443 = vld [vmem:[%s3434 + $0x20] sm:$0xf]
    %v3444 = vld [vmem:[%s3434 + $0x24] sm:$0xf]
    %v3445 = vld [vmem:[%s3434 + $0x28] sm:$0xf]
    %v3446 = vld [vmem:[%s3434 + $0x2c] sm:$0xf]
    %v3447 = vld [vmem:[%s3434 + $0x30] sm:$0xf]
    %v3448 = vld [vmem:[%s3434 + $0x34] sm:$0xf]
    %v3449 = vld [vmem:[%s3434 + $0x38] sm:$0xf]
    %v3450 = vld [vmem:[%s3434 + $0x3c] sm:$0xf]
    %s3451 = scalar_lea.vmem %s6, 1
    %v3452 = vld [vmem:[%s3451] sm:$0x1]
    %s3453 = scalar_lea.vmem [#allocation11], 64
    %v3454 = vld [vmem:[%s3453] sm:$0xf]
    %v3455 = vld [vmem:[%s3453 + $0x4] sm:$0xf]
    %v3456 = vld [vmem:[%s3453 + $0x8] sm:$0xf]
    %v3457 = vld [vmem:[%s3453 + $0xc] sm:$0xf]
    %v3458 = vld [vmem:[%s3453 + $0x10] sm:$0xf]
    %v3459 = vld [vmem:[%s3453 + $0x14] sm:$0xf]
    %v3460 = vld [vmem:[%s3453 + $0x18] sm:$0xf]
    %v3461 = vld [vmem:[%s3453 + $0x1c] sm:$0xf]
    %v3462 = vld [vmem:[%s3453 + $0x20] sm:$0xf]
    %v3463 = vld [vmem:[%s3453 + $0x24] sm:$0xf]
    %v3464 = vld [vmem:[%s3453 + $0x28] sm:$0xf]
    %v3465 = vld [vmem:[%s3453 + $0x2c] sm:$0xf]
    %v3466 = vld [vmem:[%s3453 + $0x30] sm:$0xf]
    %v3467 = vld [vmem:[%s3453 + $0x34] sm:$0xf]
    %v3468 = vld [vmem:[%s3453 + $0x38] sm:$0xf]
    %v3469 = vld [vmem:[%s3453 + $0x3c] sm:$0xf]
    %s3470 = scalar_lea.vmem [#allocation13], 64
    %v3471 = vld [vmem:[%s3470] sm:$0xf]
    %v3472 = vld [vmem:[%s3470 + $0x4] sm:$0xf]
    %v3473 = vld [vmem:[%s3470 + $0x8] sm:$0xf]
    %v3474 = vld [vmem:[%s3470 + $0xc] sm:$0xf]
    %v3475 = vld [vmem:[%s3470 + $0x10] sm:$0xf]
    %v3476 = vld [vmem:[%s3470 + $0x14] sm:$0xf]
    %v3477 = vld [vmem:[%s3470 + $0x18] sm:$0xf]
    %v3478 = vld [vmem:[%s3470 + $0x1c] sm:$0xf]
    %v3479 = vld [vmem:[%s3470 + $0x20] sm:$0xf]
    %v3480 = vld [vmem:[%s3470 + $0x24] sm:$0xf]
    %v3481 = vld [vmem:[%s3470 + $0x28] sm:$0xf]
    %v3482 = vld [vmem:[%s3470 + $0x2c] sm:$0xf]
    %v3483 = vld [vmem:[%s3470 + $0x30] sm:$0xf]
    %v3484 = vld [vmem:[%s3470 + $0x34] sm:$0xf]
    %v3485 = vld [vmem:[%s3470 + $0x38] sm:$0xf]
    %v3486 = vld [vmem:[%s3470 + $0x3c] sm:$0xf]
    %v3487 = vpack.c.bf16 %v3384, %v3383
    %v3488 = vpack.c.bf16 %v3386, %v3385
    %v3489 = vpack.c.bf16 %v3388, %v3387
    %v3490 = vpack.c.bf16 %v3390, %v3389
    %v3491 = vpack.c.bf16 %v3392, %v3391
    %v3492 = vpack.c.bf16 %v3394, %v3393
    %v3493 = vpack.c.bf16 %v3396, %v3395
    %v3494 = vpack.c.bf16 %v3398, %v3397
    %v3496 = vperm.slane %v3433, 0
    %v3497 = vperm.slane %v3433, 1
    %v3498 = vperm.slane %v3433, 2
    %v3534 = vunpack.c.l.b16 %v3400
    %v3535 = vunpack.c.h.b16 %v3400
    %v3536 = vunpack.c.l.b16 %v3401
    %v3537 = vunpack.c.l.b16 %v3402
    %v3538 = vunpack.c.h.b16 %v3402
    %v3539 = vunpack.c.l.b16 %v3403
    %v3540 = vunpack.c.l.b16 %v3404
    %v3541 = vunpack.c.h.b16 %v3404
    %v3542 = vunpack.c.l.b16 %v3405
    %v3543 = vunpack.c.l.b16 %v3406
    %v3544 = vunpack.c.h.b16 %v3406
    %v3545 = vunpack.c.l.b16 %v3407
    %v3546 = vunpack.c.l.b16 %v3408
    %v3547 = vunpack.c.h.b16 %v3408
    %v3548 = vunpack.c.l.b16 %v3409
    %v3549 = vunpack.c.l.b16 %v3410
    %v3550 = vunpack.c.h.b16 %v3410
    %v3551 = vunpack.c.l.b16 %v3411
    %v3552 = vunpack.c.l.b16 %v3412
    %v3553 = vunpack.c.h.b16 %v3412
    %v3554 = vunpack.c.l.b16 %v3413
    %v3555 = vunpack.c.l.b16 %v3414
    %v3556 = vunpack.c.h.b16 %v3414
    %v3557 = vunpack.c.l.b16 %v3415
    %v3558 = vunpack.c.l.b16 %v3416
    %v3559 = vunpack.c.h.b16 %v3416
    %v3560 = vunpack.c.l.b16 %v3417
    %v3561 = vunpack.c.l.b16 %v3418
    %v3562 = vunpack.c.h.b16 %v3418
    %v3563 = vunpack.c.l.b16 %v3419
    %v3564 = vunpack.c.l.b16 %v3420
    %v3565 = vunpack.c.h.b16 %v3420
    %v3566 = vunpack.c.l.b16 %v3421
    %v3567 = vunpack.c.l.b16 %v3422
    %v3568 = vunpack.c.h.b16 %v3422
    %v3569 = vunpack.c.l.b16 %v3423
    %v3570 = vunpack.c.l.b16 %v3424
    %v3571 = vunpack.c.h.b16 %v3424
    %v3572 = vunpack.c.l.b16 %v3425
    %v3573 = vunpack.c.l.b16 %v3426
    %v3574 = vunpack.c.h.b16 %v3426
    %v3575 = vunpack.c.l.b16 %v3427
    %v3576 = vunpack.c.l.b16 %v3428
    %v3577 = vunpack.c.h.b16 %v3428
    %v3578 = vunpack.c.l.b16 %v3429
    %v3579 = vunpack.c.l.b16 %v3430
    %v3580 = vunpack.c.h.b16 %v3430
    %v3581 = vunpack.c.l.b16 %v3431
    %v3582 = vpack.c.b16 %v3537, %v3534
    %v3583 = vpack.c.b16 %v3538, %v3535
    %v3584 = vpack.c.b16 %v3539, %v3536
    %v3585 = vpack.c.b16 %v3543, %v3540
    %v3586 = vpack.c.b16 %v3544, %v3541
    %v3587 = vpack.c.b16 %v3545, %v3542
    %v3588 = vpack.c.b16 %v3549, %v3546
    %v3589 = vpack.c.b16 %v3550, %v3547
    %v3590 = vpack.c.b16 %v3551, %v3548
    %v3591 = vpack.c.b16 %v3555, %v3552
    %v3592 = vpack.c.b16 %v3556, %v3553
    %v3593 = vpack.c.b16 %v3557, %v3554
    %v3594 = vpack.c.b16 %v3561, %v3558
    %v3595 = vpack.c.b16 %v3562, %v3559
    %v3596 = vpack.c.b16 %v3563, %v3560
    %v3597 = vpack.c.b16 %v3567, %v3564
    %v3598 = vpack.c.b16 %v3568, %v3565
    %v3599 = vpack.c.b16 %v3569, %v3566
    %v3600 = vpack.c.b16 %v3573, %v3570
    %v3601 = vpack.c.b16 %v3574, %v3571
    %v3602 = vpack.c.b16 %v3575, %v3572
    %v3603 = vpack.c.b16 %v3579, %v3576
    %v3604 = vpack.c.b16 %v3580, %v3577
    %v3605 = vpack.c.b16 %v3581, %v3578
    %3630 = vmatpush.bf16.msra.mxu0 %v3603
    %3631 = vmatpush.bf16.msra.mxu0 %v3600
    %3632 = vmatpush.bf16.msra.mxu0 %v3597
    %3633 = vmatpush.bf16.msra.mxu0 %v3594
    %3634 = vmatpush.bf16.msra.mxu0 %v3591
    %3635 = vmatpush.bf16.msra.mxu0 %v3588
    %3636 = vmatpush.bf16.msra.mxu0 %v3585
    %3637 = vmatpush.bf16.msra.mxu0 %v3582
    %3638 = vmatmul.bf16.gmra.mxu0 %v3487
    %v3639 = vpop.f32.mrf.mxu0
    %v3640 = vadd.f32 %v3496, %v3639
    %v3641 = vpop.f32.mrf.mxu0
    %v3642 = vadd.f32 %v3496, %v3641
    %3643 = vmatmul.bf16.gmra.mxu0 %v3488
    %v3644 = vpop.f32.mrf.mxu0
    %v3645 = vadd.f32 %v3496, %v3644
    %v3646 = vpop.f32.mrf.mxu0
    %v3647 = vadd.f32 %v3496, %v3646
    %3648 = vmatmul.bf16.gmra.mxu0 %v3489
    %v3649 = vpop.f32.mrf.mxu0
    %v3650 = vadd.f32 %v3496, %v3649
    %v3651 = vpop.f32.mrf.mxu0
    %v3652 = vadd.f32 %v3496, %v3651
    %3653 = vmatmul.bf16.gmra.mxu0 %v3490
    %v3654 = vpop.f32.mrf.mxu0
    %v3655 = vadd.f32 %v3496, %v3654
    %v3656 = vpop.f32.mrf.mxu0
    %v3657 = vadd.f32 %v3496, %v3656
    %3658 = vmatmul.bf16.gmra.mxu0 %v3491
    %v3659 = vpop.f32.mrf.mxu0
    %v3660 = vadd.f32 %v3496, %v3659
    %v3661 = vpop.f32.mrf.mxu0
    %v3662 = vadd.f32 %v3496, %v3661
    %3663 = vmatmul.bf16.gmra.mxu0 %v3492
    %v3664 = vpop.f32.mrf.mxu0
    %v3665 = vadd.f32 %v3496, %v3664
    %v3666 = vpop.f32.mrf.mxu0
    %v3667 = vadd.f32 %v3496, %v3666
    %3668 = vmatmul.bf16.gmra.mxu0 %v3493
    %v3669 = vpop.f32.mrf.mxu0
    %v3670 = vadd.f32 %v3496, %v3669
    %v3671 = vpop.f32.mrf.mxu0
    %v3672 = vadd.f32 %v3496, %v3671
    %3673 = vmatmul.bf16.gmra.mxu0 %v3494
    %v3674 = vpop.f32.mrf.mxu0
    %v3675 = vadd.f32 %v3496, %v3674
    %v3676 = vpop.f32.mrf.mxu0
    %v3677 = vadd.f32 %v3496, %v3676
    %3678 = vdwg.mxu0
    %3679 = vmatpush.bf16.msra.mxu0 %v3604
    %3680 = vmatpush.bf16.msra.mxu0 %v3601
    %3681 = vmatpush.bf16.msra.mxu0 %v3598
    %3682 = vmatpush.bf16.msra.mxu0 %v3595
    %3683 = vmatpush.bf16.msra.mxu0 %v3592
    %3684 = vmatpush.bf16.msra.mxu0 %v3589
    %3685 = vmatpush.bf16.msra.mxu0 %v3586
    %3686 = vmatpush.bf16.msra.mxu0 %v3583
    %3687 = vmatmul.bf16.gmra.mxu0 %v3487
    %v3688 = vpop.f32.mrf.mxu0
    %v3689 = vadd.f32 %v3497, %v3688
    %v3690 = vpop.f32.mrf.mxu0
    %v3691 = vadd.f32 %v3497, %v3690
    %3692 = vmatmul.bf16.gmra.mxu0 %v3488
    %v3693 = vpop.f32.mrf.mxu0
    %v3694 = vadd.f32 %v3497, %v3693
    %v3695 = vpop.f32.mrf.mxu0
    %v3696 = vadd.f32 %v3497, %v3695
    %3697 = vmatmul.bf16.gmra.mxu0 %v3489
    %v3698 = vpop.f32.mrf.mxu0
    %v3699 = vadd.f32 %v3497, %v3698
    %v3700 = vpop.f32.mrf.mxu0
    %v3701 = vadd.f32 %v3497, %v3700
    %3702 = vmatmul.bf16.gmra.mxu0 %v3490
    %v3703 = vpop.f32.mrf.mxu0
    %v3704 = vadd.f32 %v3497, %v3703
    %v3705 = vpop.f32.mrf.mxu0
    %v3706 = vadd.f32 %v3497, %v3705
    %3707 = vmatmul.bf16.gmra.mxu0 %v3491
    %v3708 = vpop.f32.mrf.mxu0
    %v3709 = vadd.f32 %v3497, %v3708
    %v3710 = vpop.f32.mrf.mxu0
    %v3711 = vadd.f32 %v3497, %v3710
    %3712 = vmatmul.bf16.gmra.mxu0 %v3492
    %v3713 = vpop.f32.mrf.mxu0
    %v3714 = vadd.f32 %v3497, %v3713
    %v3715 = vpop.f32.mrf.mxu0
    %v3716 = vadd.f32 %v3497, %v3715
    %3717 = vmatmul.bf16.gmra.mxu0 %v3493
    %v3718 = vpop.f32.mrf.mxu0
    %v3719 = vadd.f32 %v3497, %v3718
    %v3720 = vpop.f32.mrf.mxu0
    %v3721 = vadd.f32 %v3497, %v3720
    %3722 = vmatmul.bf16.gmra.mxu0 %v3494
    %v3723 = vpop.f32.mrf.mxu0
    %v3724 = vadd.f32 %v3497, %v3723
    %v3725 = vpop.f32.mrf.mxu0
    %v3726 = vadd.f32 %v3497, %v3725
    %3727 = vdwg.mxu0
    %3728 = vmatpush.bf16.msra.mxu0 %v3605
    %3729 = vmatpush.bf16.msra.mxu0 %v3602
    %3730 = vmatpush.bf16.msra.mxu0 %v3599
    %3731 = vmatpush.bf16.msra.mxu0 %v3596
    %3732 = vmatpush.bf16.msra.mxu0 %v3593
    %3733 = vmatpush.bf16.msra.mxu0 %v3590
    %3734 = vmatpush.bf16.msra.mxu0 %v3587
    %3735 = vmatpush.bf16.msra.mxu0 %v3584
    %3736 = vmatmul.bf16.gmra.mxu0 %v3487
    %v3737 = vpop.f32.mrf.mxu0
    %v3738 = vadd.f32 %v3498, %v3737
    %v3739 = vpop.f32.mrf.mxu0
    %v3740 = vadd.f32 %v3498, %v3739
    %3741 = vmatmul.bf16.gmra.mxu0 %v3488
    %v3742 = vpop.f32.mrf.mxu0
    %v3743 = vadd.f32 %v3498, %v3742
    %v3744 = vpop.f32.mrf.mxu0
    %v3745 = vadd.f32 %v3498, %v3744
    %3746 = vmatmul.bf16.gmra.mxu0 %v3489
    %v3747 = vpop.f32.mrf.mxu0
    %v3748 = vadd.f32 %v3498, %v3747
    %v3749 = vpop.f32.mrf.mxu0
    %v3750 = vadd.f32 %v3498, %v3749
    %3751 = vmatmul.bf16.gmra.mxu0 %v3490
    %v3752 = vpop.f32.mrf.mxu0
    %v3753 = vadd.f32 %v3498, %v3752
    %v3754 = vpop.f32.mrf.mxu0
    %v3755 = vadd.f32 %v3498, %v3754
    %3756 = vmatmul.bf16.gmra.mxu0 %v3491
    %v3757 = vpop.f32.mrf.mxu0
    %v3758 = vadd.f32 %v3498, %v3757
    %v3759 = vpop.f32.mrf.mxu0
    %v3760 = vadd.f32 %v3498, %v3759
    %3761 = vmatmul.bf16.gmra.mxu0 %v3492
    %v3762 = vpop.f32.mrf.mxu0
    %v3763 = vadd.f32 %v3498, %v3762
    %v3764 = vpop.f32.mrf.mxu0
    %v3765 = vadd.f32 %v3498, %v3764
    %3766 = vmatmul.bf16.gmra.mxu0 %v3493
    %v3767 = vpop.f32.mrf.mxu0
    %v3768 = vadd.f32 %v3498, %v3767
    %v3769 = vpop.f32.mrf.mxu0
    %v3770 = vadd.f32 %v3498, %v3769
    %3771 = vmatmul.bf16.gmra.mxu0 %v3494
    %v3772 = vpop.f32.mrf.mxu0
    %v3773 = vadd.f32 %v3498, %v3772
    %v3774 = vpop.f32.mrf.mxu0
    %v3775 = vadd.f32 %v3498, %v3774
    %3776 = vdwg.mxu0
    %v3777 = vpack.c.bf16 %v3640, %v3640
    %v3778 = vpack.c.bf16 %v3642, %v3642
    %v3779 = vpack.c.bf16 %v3645, %v3645
    %v3780 = vpack.c.bf16 %v3647, %v3647
    %v3781 = vpack.c.bf16 %v3650, %v3650
    %v3782 = vpack.c.bf16 %v3652, %v3652
    %v3783 = vpack.c.bf16 %v3655, %v3655
    %v3784 = vpack.c.bf16 %v3657, %v3657
    %v3785 = vpack.c.bf16 %v3660, %v3660
    %v3786 = vpack.c.bf16 %v3662, %v3662
    %v3787 = vpack.c.bf16 %v3665, %v3665
    %v3788 = vpack.c.bf16 %v3667, %v3667
    %v3789 = vpack.c.bf16 %v3670, %v3670
    %v3790 = vpack.c.bf16 %v3672, %v3672
    %v3791 = vpack.c.bf16 %v3675, %v3675
    %v3792 = vpack.c.bf16 %v3677, %v3677
    %v3793 = vpack.c.bf16 %v3689, %v3689
    %v3794 = vpack.c.bf16 %v3691, %v3691
    %v3795 = vpack.c.bf16 %v3694, %v3694
    %v3796 = vpack.c.bf16 %v3696, %v3696
    %v3797 = vpack.c.bf16 %v3699, %v3699
    %v3798 = vpack.c.bf16 %v3701, %v3701
    %v3799 = vpack.c.bf16 %v3704, %v3704
    %v3800 = vpack.c.bf16 %v3706, %v3706
    %v3801 = vpack.c.bf16 %v3709, %v3709
    %v3802 = vpack.c.bf16 %v3711, %v3711
    %v3803 = vpack.c.bf16 %v3714, %v3714
    %v3804 = vpack.c.bf16 %v3716, %v3716
    %v3805 = vpack.c.bf16 %v3719, %v3719
    %v3806 = vpack.c.bf16 %v3721, %v3721
    %v3807 = vpack.c.bf16 %v3724, %v3724
    %v3808 = vpack.c.bf16 %v3726, %v3726
    %v3809 = vpack.c.bf16 %v3738, %v3738
    %v3810 = vpack.c.bf16 %v3740, %v3740
    %v3811 = vpack.c.bf16 %v3743, %v3743
    %v3812 = vpack.c.bf16 %v3745, %v3745
    %v3813 = vpack.c.bf16 %v3748, %v3748
    %v3814 = vpack.c.bf16 %v3750, %v3750
    %v3815 = vpack.c.bf16 %v3753, %v3753
    %v3816 = vpack.c.bf16 %v3755, %v3755
    %v3817 = vpack.c.bf16 %v3758, %v3758
    %v3818 = vpack.c.bf16 %v3760, %v3760
    %v3819 = vpack.c.bf16 %v3763, %v3763
    %v3820 = vpack.c.bf16 %v3765, %v3765
    %v3821 = vpack.c.bf16 %v3768, %v3768
    %v3822 = vpack.c.bf16 %v3770, %v3770
    %v3823 = vpack.c.bf16 %v3773, %v3773
    %v3824 = vpack.c.bf16 %v3775, %v3775
    %v3833 = vunpack.c.l.b16 %v3777
    %v3834 = vunpack.c.l.b16 %v3778
    %v3835 = vunpack.c.l.b16 %v3779
    %v3836 = vunpack.c.l.b16 %v3780
    %v3837 = vunpack.c.l.b16 %v3781
    %v3838 = vunpack.c.l.b16 %v3782
    %v3839 = vunpack.c.l.b16 %v3783
    %v3840 = vunpack.c.l.b16 %v3784
    %v3841 = vpack.c.b16 %v3834, %v3833
    %v3842 = vpack.c.b16 %v3836, %v3835
    %v3843 = vpack.c.b16 %v3838, %v3837
    %v3844 = vpack.c.b16 %v3840, %v3839
    %v3853 = vunpack.c.l.b16 %v3793
    %v3854 = vunpack.c.l.b16 %v3794
    %v3855 = vunpack.c.l.b16 %v3795
    %v3856 = vunpack.c.l.b16 %v3796
    %v3857 = vunpack.c.l.b16 %v3797
    %v3858 = vunpack.c.l.b16 %v3798
    %v3859 = vunpack.c.l.b16 %v3799
    %v3860 = vunpack.c.l.b16 %v3800
    %v3861 = vpack.c.b16 %v3854, %v3853
    %v3862 = vpack.c.b16 %v3856, %v3855
    %v3863 = vpack.c.b16 %v3858, %v3857
    %v3864 = vpack.c.b16 %v3860, %v3859
    %v3866 = vsel %vm760, %v3841, 0
    %v3869 = vsel %vm760, %v3842, 0
    %v3872 = vsel %vm760, %v3843, 0
    %v3875 = vsel %vm760, %v3844, 0
    %v3878 = vsel %vm760, %v3861, 0
    %v3881 = vsel %vm760, %v3862, 0
    %v3884 = vsel %vm760, %v3863, 0
    %v3887 = vsel %vm760, %v3864, 0
    %3889 = vmatpush.bf16.xpose.msra.mxu0 0
    %3890 = vmatpush.bf16.xpose.msra.mxu0 0
    %3891 = vmatpush.bf16.xpose.msra.mxu0 0
    %3892 = vmatpush.bf16.xpose.msra.mxu0 0
    %3893 = vmatpush.bf16.xpose.msra.mxu0 %v3887
    %3894 = vmatpush.bf16.xpose.msra.mxu0 %v3884
    %3895 = vmatpush.bf16.xpose.msra.mxu0 %v3881
    %3896 = vmatpush.bf16.xpose.msra.mxu0 %v3878
    %3897 = vmatmul.bf16.gmra.mxu0 %v3866
    %v3898 = vpop.f32.mrf.mxu0
    %v3899 = vadd.f32 0.0, %v3898
    %v3900 = vpop.f32.mrf.mxu0
    %v3901 = vadd.f32 0.0, %v3900
    %3902 = vmatmul.bf16.gmra.mxu0 %v3869
    %v3903 = vpop.f32.mrf.mxu0
    %v3904 = vadd.f32 0.0, %v3903
    %v3905 = vpop.f32.mrf.mxu0
    %v3906 = vadd.f32 0.0, %v3905
    %3907 = vmatmul.bf16.gmra.mxu0 %v3872
    %v3908 = vpop.f32.mrf.mxu0
    %v3909 = vadd.f32 0.0, %v3908
    %v3910 = vpop.f32.mrf.mxu0
    %v3911 = vadd.f32 0.0, %v3910
    %3912 = vmatmul.bf16.gmra.mxu0 %v3875
    %v3913 = vpop.f32.mrf.mxu0
    %v3914 = vadd.f32 0.0, %v3913
    %v3915 = vpop.f32.mrf.mxu0
    %v3916 = vadd.f32 0.0, %v3915
    %3917 = vdwg.mxu0
    %3918 = vrot.lane.b32.xlu0 %v3841, 96
    %v3919 = vpop.permute.xlu0 %3918
    %3920 = vrot.lane.b32.xlu0 %v3842, 96
    %v3921 = vpop.permute.xlu0 %3920
    %3922 = vrot.lane.b32.xlu0 %v3843, 96
    %v3923 = vpop.permute.xlu0 %3922
    %3924 = vrot.lane.b32.xlu0 %v3844, 96
    %v3925 = vpop.permute.xlu0 %3924
    %3926 = vrot.lane.b32.xlu0 %v3861, 96
    %v3927 = vpop.permute.xlu0 %3926
    %3928 = vrot.lane.b32.xlu0 %v3862, 96
    %v3929 = vpop.permute.xlu0 %3928
    %3930 = vrot.lane.b32.xlu0 %v3863, 96
    %v3931 = vpop.permute.xlu0 %3930
    %3932 = vrot.lane.b32.xlu0 %v3864, 96
    %v3933 = vpop.permute.xlu0 %3932
    %v3935 = vsel %vm760, %v3919, 0
    %v3938 = vsel %vm760, %v3921, 0
    %v3941 = vsel %vm760, %v3923, 0
    %v3944 = vsel %vm760, %v3925, 0
    %v3947 = vsel %vm760, %v3927, 0
    %v3950 = vsel %vm760, %v3929, 0
    %v3953 = vsel %vm760, %v3931, 0
    %v3956 = vsel %vm760, %v3933, 0
    %3958 = vmatpush.bf16.xpose.msra.mxu0 0
    %3959 = vmatpush.bf16.xpose.msra.mxu0 0
    %3960 = vmatpush.bf16.xpose.msra.mxu0 0
    %3961 = vmatpush.bf16.xpose.msra.mxu0 0
    %3962 = vmatpush.bf16.xpose.msra.mxu0 %v3956
    %3963 = vmatpush.bf16.xpose.msra.mxu0 %v3953
    %3964 = vmatpush.bf16.xpose.msra.mxu0 %v3950
    %3965 = vmatpush.bf16.xpose.msra.mxu0 %v3947
    %3966 = vmatmul.bf16.gmra.mxu0 %v3935
    %v3967 = vpop.f32.mrf.mxu0
    %v3968 = vadd.f32 0.0, %v3967
    %v3969 = vpop.f32.mrf.mxu0
    %v3970 = vadd.f32 0.0, %v3969
    %3971 = vmatmul.bf16.gmra.mxu0 %v3938
    %v3972 = vpop.f32.mrf.mxu0
    %v3973 = vadd.f32 0.0, %v3972
    %v3974 = vpop.f32.mrf.mxu0
    %v3975 = vadd.f32 0.0, %v3974
    %3976 = vmatmul.bf16.gmra.mxu0 %v3941
    %v3977 = vpop.f32.mrf.mxu0
    %v3978 = vadd.f32 0.0, %v3977
    %v3979 = vpop.f32.mrf.mxu0
    %v3980 = vadd.f32 0.0, %v3979
    %3981 = vmatmul.bf16.gmra.mxu0 %v3944
    %v3982 = vpop.f32.mrf.mxu0
    %v3983 = vadd.f32 0.0, %v3982
    %v3984 = vpop.f32.mrf.mxu0
    %v3985 = vadd.f32 0.0, %v3984
    %3986 = vdwg.mxu0
    %3987 = vrot.lane.b32.xlu0 %v3841, 64
    %v3988 = vpop.permute.xlu0 %3987
    %3989 = vrot.lane.b32.xlu0 %v3842, 64
    %v3990 = vpop.permute.xlu0 %3989
    %3991 = vrot.lane.b32.xlu0 %v3843, 64
    %v3992 = vpop.permute.xlu0 %3991
    %3993 = vrot.lane.b32.xlu0 %v3844, 64
    %v3994 = vpop.permute.xlu0 %3993
    %3995 = vrot.lane.b32.xlu0 %v3861, 64
    %v3996 = vpop.permute.xlu0 %3995
    %3997 = vrot.lane.b32.xlu0 %v3862, 64
    %v3998 = vpop.permute.xlu0 %3997
    %3999 = vrot.lane.b32.xlu0 %v3863, 64
    %v4000 = vpop.permute.xlu0 %3999
    %4001 = vrot.lane.b32.xlu0 %v3864, 64
    %v4002 = vpop.permute.xlu0 %4001
    %v4004 = vsel %vm760, %v3988, 0
    %v4007 = vsel %vm760, %v3990, 0
    %v4010 = vsel %vm760, %v3992, 0
    %v4013 = vsel %vm760, %v3994, 0
    %v4016 = vsel %vm760, %v3996, 0
    %v4019 = vsel %vm760, %v3998, 0
    %v4022 = vsel %vm760, %v4000, 0
    %v4025 = vsel %vm760, %v4002, 0
    %4027 = vmatpush.bf16.xpose.msra.mxu0 0
    %4028 = vmatpush.bf16.xpose.msra.mxu0 0
    %4029 = vmatpush.bf16.xpose.msra.mxu0 0
    %4030 = vmatpush.bf16.xpose.msra.mxu0 0
    %4031 = vmatpush.bf16.xpose.msra.mxu0 %v4025
    %4032 = vmatpush.bf16.xpose.msra.mxu0 %v4022
    %4033 = vmatpush.bf16.xpose.msra.mxu0 %v4019
    %4034 = vmatpush.bf16.xpose.msra.mxu0 %v4016
    %4035 = vmatmul.bf16.gmra.mxu0 %v4004
    %v4036 = vpop.f32.mrf.mxu0
    %v4037 = vadd.f32 0.0, %v4036
    %v4038 = vpop.f32.mrf.mxu0
    %v4039 = vadd.f32 0.0, %v4038
    %4040 = vmatmul.bf16.gmra.mxu0 %v4007
    %v4041 = vpop.f32.mrf.mxu0
    %v4042 = vadd.f32 0.0, %v4041
    %v4043 = vpop.f32.mrf.mxu0
    %v4044 = vadd.f32 0.0, %v4043
    %4045 = vmatmul.bf16.gmra.mxu0 %v4010
    %v4046 = vpop.f32.mrf.mxu0
    %v4047 = vadd.f32 0.0, %v4046
    %v4048 = vpop.f32.mrf.mxu0
    %v4049 = vadd.f32 0.0, %v4048
    %4050 = vmatmul.bf16.gmra.mxu0 %v4013
    %v4051 = vpop.f32.mrf.mxu0
    %v4052 = vadd.f32 0.0, %v4051
    %v4053 = vpop.f32.mrf.mxu0
    %v4054 = vadd.f32 0.0, %v4053
    %4055 = vdwg.mxu0
    %4056 = vrot.lane.b32.xlu0 %v3841, 32
    %v4057 = vpop.permute.xlu0 %4056
    %4058 = vrot.lane.b32.xlu0 %v3842, 32
    %v4059 = vpop.permute.xlu0 %4058
    %4060 = vrot.lane.b32.xlu0 %v3843, 32
    %v4061 = vpop.permute.xlu0 %4060
    %4062 = vrot.lane.b32.xlu0 %v3844, 32
    %v4063 = vpop.permute.xlu0 %4062
    %4064 = vrot.lane.b32.xlu0 %v3861, 32
    %v4065 = vpop.permute.xlu0 %4064
    %4066 = vrot.lane.b32.xlu0 %v3862, 32
    %v4067 = vpop.permute.xlu0 %4066
    %4068 = vrot.lane.b32.xlu0 %v3863, 32
    %v4069 = vpop.permute.xlu0 %4068
    %4070 = vrot.lane.b32.xlu0 %v3864, 32
    %v4071 = vpop.permute.xlu0 %4070
    %v4073 = vsel %vm760, %v4057, 0
    %v4076 = vsel %vm760, %v4059, 0
    %v4079 = vsel %vm760, %v4061, 0
    %v4082 = vsel %vm760, %v4063, 0
    %v4085 = vsel %vm760, %v4065, 0
    %v4088 = vsel %vm760, %v4067, 0
    %v4091 = vsel %vm760, %v4069, 0
    %v4094 = vsel %vm760, %v4071, 0
    %4096 = vmatpush.bf16.xpose.msra.mxu0 0
    %4097 = vmatpush.bf16.xpose.msra.mxu0 0
    %4098 = vmatpush.bf16.xpose.msra.mxu0 0
    %4099 = vmatpush.bf16.xpose.msra.mxu0 0
    %4100 = vmatpush.bf16.xpose.msra.mxu0 %v4094
    %4101 = vmatpush.bf16.xpose.msra.mxu0 %v4091
    %4102 = vmatpush.bf16.xpose.msra.mxu0 %v4088
    %4103 = vmatpush.bf16.xpose.msra.mxu0 %v4085
    %4104 = vmatmul.bf16.gmra.mxu0 %v4073
    %v4105 = vpop.f32.mrf.mxu0
    %v4106 = vadd.f32 0.0, %v4105
    %v4107 = vpop.f32.mrf.mxu0
    %v4108 = vadd.f32 0.0, %v4107
    %4109 = vmatmul.bf16.gmra.mxu0 %v4076
    %v4110 = vpop.f32.mrf.mxu0
    %v4111 = vadd.f32 0.0, %v4110
    %v4112 = vpop.f32.mrf.mxu0
    %v4113 = vadd.f32 0.0, %v4112
    %4114 = vmatmul.bf16.gmra.mxu0 %v4079
    %v4115 = vpop.f32.mrf.mxu0
    %v4116 = vadd.f32 0.0, %v4115
    %v4117 = vpop.f32.mrf.mxu0
    %v4118 = vadd.f32 0.0, %v4117
    %4119 = vmatmul.bf16.gmra.mxu0 %v4082
    %v4120 = vpop.f32.mrf.mxu0
    %v4121 = vadd.f32 0.0, %v4120
    %v4122 = vpop.f32.mrf.mxu0
    %v4123 = vadd.f32 0.0, %v4122
    %4124 = vdwg.mxu0
    %v4133 = vunpack.c.l.b16 %v3785
    %v4134 = vunpack.c.l.b16 %v3786
    %v4135 = vunpack.c.l.b16 %v3787
    %v4136 = vunpack.c.l.b16 %v3788
    %v4137 = vunpack.c.l.b16 %v3789
    %v4138 = vunpack.c.l.b16 %v3790
    %v4139 = vunpack.c.l.b16 %v3791
    %v4140 = vunpack.c.l.b16 %v3792
    %v4141 = vpack.c.b16 %v4134, %v4133
    %v4142 = vpack.c.b16 %v4136, %v4135
    %v4143 = vpack.c.b16 %v4138, %v4137
    %v4144 = vpack.c.b16 %v4140, %v4139
    %v4153 = vunpack.c.l.b16 %v3801
    %v4154 = vunpack.c.l.b16 %v3802
    %v4155 = vunpack.c.l.b16 %v3803
    %v4156 = vunpack.c.l.b16 %v3804
    %v4157 = vunpack.c.l.b16 %v3805
    %v4158 = vunpack.c.l.b16 %v3806
    %v4159 = vunpack.c.l.b16 %v3807
    %v4160 = vunpack.c.l.b16 %v3808
    %v4161 = vpack.c.b16 %v4154, %v4153
    %v4162 = vpack.c.b16 %v4156, %v4155
    %v4163 = vpack.c.b16 %v4158, %v4157
    %v4164 = vpack.c.b16 %v4160, %v4159
    %v4166 = vsel %vm760, %v4141, 0
    %v4169 = vsel %vm760, %v4142, 0
    %v4172 = vsel %vm760, %v4143, 0
    %v4175 = vsel %vm760, %v4144, 0
    %v4178 = vsel %vm760, %v4161, 0
    %v4181 = vsel %vm760, %v4162, 0
    %v4184 = vsel %vm760, %v4163, 0
    %v4187 = vsel %vm760, %v4164, 0
    %4189 = vmatpush.bf16.xpose.msra.mxu0 0
    %4190 = vmatpush.bf16.xpose.msra.mxu0 0
    %4191 = vmatpush.bf16.xpose.msra.mxu0 0
    %4192 = vmatpush.bf16.xpose.msra.mxu0 0
    %4193 = vmatpush.bf16.xpose.msra.mxu0 %v4187
    %4194 = vmatpush.bf16.xpose.msra.mxu0 %v4184
    %4195 = vmatpush.bf16.xpose.msra.mxu0 %v4181
    %4196 = vmatpush.bf16.xpose.msra.mxu0 %v4178
    %4197 = vmatmul.bf16.gmra.mxu0 %v4166
    %v4198 = vpop.f32.mrf.mxu0
    %v4199 = vadd.f32 0.0, %v4198
    %v4200 = vpop.f32.mrf.mxu0
    %v4201 = vadd.f32 0.0, %v4200
    %4202 = vmatmul.bf16.gmra.mxu0 %v4169
    %v4203 = vpop.f32.mrf.mxu0
    %v4204 = vadd.f32 0.0, %v4203
    %v4205 = vpop.f32.mrf.mxu0
    %v4206 = vadd.f32 0.0, %v4205
    %4207 = vmatmul.bf16.gmra.mxu0 %v4172
    %v4208 = vpop.f32.mrf.mxu0
    %v4209 = vadd.f32 0.0, %v4208
    %v4210 = vpop.f32.mrf.mxu0
    %v4211 = vadd.f32 0.0, %v4210
    %4212 = vmatmul.bf16.gmra.mxu0 %v4175
    %v4213 = vpop.f32.mrf.mxu0
    %v4214 = vadd.f32 0.0, %v4213
    %v4215 = vpop.f32.mrf.mxu0
    %v4216 = vadd.f32 0.0, %v4215
    %4217 = vdwg.mxu0
    %4218 = vrot.lane.b32.xlu0 %v4141, 96
    %v4219 = vpop.permute.xlu0 %4218
    %4220 = vrot.lane.b32.xlu0 %v4142, 96
    %v4221 = vpop.permute.xlu0 %4220
    %4222 = vrot.lane.b32.xlu0 %v4143, 96
    %v4223 = vpop.permute.xlu0 %4222
    %4224 = vrot.lane.b32.xlu0 %v4144, 96
    %v4225 = vpop.permute.xlu0 %4224
    %4226 = vrot.lane.b32.xlu0 %v4161, 96
    %v4227 = vpop.permute.xlu0 %4226
    %4228 = vrot.lane.b32.xlu0 %v4162, 96
    %v4229 = vpop.permute.xlu0 %4228
    %4230 = vrot.lane.b32.xlu0 %v4163, 96
    %v4231 = vpop.permute.xlu0 %4230
    %4232 = vrot.lane.b32.xlu0 %v4164, 96
    %v4233 = vpop.permute.xlu0 %4232
    %v4235 = vsel %vm760, %v4219, 0
    %v4238 = vsel %vm760, %v4221, 0
    %v4241 = vsel %vm760, %v4223, 0
    %v4244 = vsel %vm760, %v4225, 0
    %v4247 = vsel %vm760, %v4227, 0
    %v4250 = vsel %vm760, %v4229, 0
    %v4253 = vsel %vm760, %v4231, 0
    %v4256 = vsel %vm760, %v4233, 0
    %4258 = vmatpush.bf16.xpose.msra.mxu0 0
    %4259 = vmatpush.bf16.xpose.msra.mxu0 0
    %4260 = vmatpush.bf16.xpose.msra.mxu0 0
    %4261 = vmatpush.bf16.xpose.msra.mxu0 0
    %4262 = vmatpush.bf16.xpose.msra.mxu0 %v4256
    %4263 = vmatpush.bf16.xpose.msra.mxu0 %v4253
    %4264 = vmatpush.bf16.xpose.msra.mxu0 %v4250
    %4265 = vmatpush.bf16.xpose.msra.mxu0 %v4247
    %4266 = vmatmul.bf16.gmra.mxu0 %v4235
    %v4267 = vpop.f32.mrf.mxu0
    %v4268 = vadd.f32 0.0, %v4267
    %v4269 = vpop.f32.mrf.mxu0
    %v4270 = vadd.f32 0.0, %v4269
    %4271 = vmatmul.bf16.gmra.mxu0 %v4238
    %v4272 = vpop.f32.mrf.mxu0
    %v4273 = vadd.f32 0.0, %v4272
    %v4274 = vpop.f32.mrf.mxu0
    %v4275 = vadd.f32 0.0, %v4274
    %4276 = vmatmul.bf16.gmra.mxu0 %v4241
    %v4277 = vpop.f32.mrf.mxu0
    %v4278 = vadd.f32 0.0, %v4277
    %v4279 = vpop.f32.mrf.mxu0
    %v4280 = vadd.f32 0.0, %v4279
    %4281 = vmatmul.bf16.gmra.mxu0 %v4244
    %v4282 = vpop.f32.mrf.mxu0
    %v4283 = vadd.f32 0.0, %v4282
    %v4284 = vpop.f32.mrf.mxu0
    %v4285 = vadd.f32 0.0, %v4284
    %4286 = vdwg.mxu0
    %4287 = vrot.lane.b32.xlu0 %v4141, 64
    %v4288 = vpop.permute.xlu0 %4287
    %4289 = vrot.lane.b32.xlu0 %v4142, 64
    %v4290 = vpop.permute.xlu0 %4289
    %4291 = vrot.lane.b32.xlu0 %v4143, 64
    %v4292 = vpop.permute.xlu0 %4291
    %4293 = vrot.lane.b32.xlu0 %v4144, 64
    %v4294 = vpop.permute.xlu0 %4293
    %4295 = vrot.lane.b32.xlu0 %v4161, 64
    %v4296 = vpop.permute.xlu0 %4295
    %4297 = vrot.lane.b32.xlu0 %v4162, 64
    %v4298 = vpop.permute.xlu0 %4297
    %4299 = vrot.lane.b32.xlu0 %v4163, 64
    %v4300 = vpop.permute.xlu0 %4299
    %4301 = vrot.lane.b32.xlu0 %v4164, 64
    %v4302 = vpop.permute.xlu0 %4301
    %v4304 = vsel %vm760, %v4288, 0
    %v4307 = vsel %vm760, %v4290, 0
    %v4310 = vsel %vm760, %v4292, 0
    %v4313 = vsel %vm760, %v4294, 0
    %v4316 = vsel %vm760, %v4296, 0
    %v4319 = vsel %vm760, %v4298, 0
    %v4322 = vsel %vm760, %v4300, 0
    %v4325 = vsel %vm760, %v4302, 0
    %4327 = vmatpush.bf16.xpose.msra.mxu0 0
    %4328 = vmatpush.bf16.xpose.msra.mxu0 0
    %4329 = vmatpush.bf16.xpose.msra.mxu0 0
    %4330 = vmatpush.bf16.xpose.msra.mxu0 0
    %4331 = vmatpush.bf16.xpose.msra.mxu0 %v4325
    %4332 = vmatpush.bf16.xpose.msra.mxu0 %v4322
    %4333 = vmatpush.bf16.xpose.msra.mxu0 %v4319
    %4334 = vmatpush.bf16.xpose.msra.mxu0 %v4316
    %4335 = vmatmul.bf16.gmra.mxu0 %v4304
    %v4336 = vpop.f32.mrf.mxu0
    %v4337 = vadd.f32 0.0, %v4336
    %v4338 = vpop.f32.mrf.mxu0
    %v4339 = vadd.f32 0.0, %v4338
    %4340 = vmatmul.bf16.gmra.mxu0 %v4307
    %v4341 = vpop.f32.mrf.mxu0
    %v4342 = vadd.f32 0.0, %v4341
    %v4343 = vpop.f32.mrf.mxu0
    %v4344 = vadd.f32 0.0, %v4343
    %4345 = vmatmul.bf16.gmra.mxu0 %v4310
    %v4346 = vpop.f32.mrf.mxu0
    %v4347 = vadd.f32 0.0, %v4346
    %v4348 = vpop.f32.mrf.mxu0
    %v4349 = vadd.f32 0.0, %v4348
    %4350 = vmatmul.bf16.gmra.mxu0 %v4313
    %v4351 = vpop.f32.mrf.mxu0
    %v4352 = vadd.f32 0.0, %v4351
    %v4353 = vpop.f32.mrf.mxu0
    %v4354 = vadd.f32 0.0, %v4353
    %4355 = vdwg.mxu0
    %4356 = vrot.lane.b32.xlu0 %v4141, 32
    %v4357 = vpop.permute.xlu0 %4356
    %4358 = vrot.lane.b32.xlu0 %v4142, 32
    %v4359 = vpop.permute.xlu0 %4358
    %4360 = vrot.lane.b32.xlu0 %v4143, 32
    %v4361 = vpop.permute.xlu0 %4360
    %4362 = vrot.lane.b32.xlu0 %v4144, 32
    %v4363 = vpop.permute.xlu0 %4362
    %4364 = vrot.lane.b32.xlu0 %v4161, 32
    %v4365 = vpop.permute.xlu0 %4364
    %4366 = vrot.lane.b32.xlu0 %v4162, 32
    %v4367 = vpop.permute.xlu0 %4366
    %4368 = vrot.lane.b32.xlu0 %v4163, 32
    %v4369 = vpop.permute.xlu0 %4368
    %4370 = vrot.lane.b32.xlu0 %v4164, 32
    %v4371 = vpop.permute.xlu0 %4370
    %v4373 = vsel %vm760, %v4357, 0
    %v4376 = vsel %vm760, %v4359, 0
    %v4379 = vsel %vm760, %v4361, 0
    %v4382 = vsel %vm760, %v4363, 0
    %v4385 = vsel %vm760, %v4365, 0
    %v4388 = vsel %vm760, %v4367, 0
    %v4391 = vsel %vm760, %v4369, 0
    %v4394 = vsel %vm760, %v4371, 0
    %4396 = vmatpush.bf16.xpose.msra.mxu0 0
    %4397 = vmatpush.bf16.xpose.msra.mxu0 0
    %4398 = vmatpush.bf16.xpose.msra.mxu0 0
    %4399 = vmatpush.bf16.xpose.msra.mxu0 0
    %4400 = vmatpush.bf16.xpose.msra.mxu0 %v4394
    %4401 = vmatpush.bf16.xpose.msra.mxu0 %v4391
    %4402 = vmatpush.bf16.xpose.msra.mxu0 %v4388
    %4403 = vmatpush.bf16.xpose.msra.mxu0 %v4385
    %4404 = vmatmul.bf16.gmra.mxu0 %v4373
    %v4405 = vpop.f32.mrf.mxu0
    %v4406 = vadd.f32 0.0, %v4405
    %v4407 = vpop.f32.mrf.mxu0
    %v4408 = vadd.f32 0.0, %v4407
    %4409 = vmatmul.bf16.gmra.mxu0 %v4376
    %v4410 = vpop.f32.mrf.mxu0
    %v4411 = vadd.f32 0.0, %v4410
    %v4412 = vpop.f32.mrf.mxu0
    %v4413 = vadd.f32 0.0, %v4412
    %4414 = vmatmul.bf16.gmra.mxu0 %v4379
    %v4415 = vpop.f32.mrf.mxu0
    %v4416 = vadd.f32 0.0, %v4415
    %v4417 = vpop.f32.mrf.mxu0
    %v4418 = vadd.f32 0.0, %v4417
    %4419 = vmatmul.bf16.gmra.mxu0 %v4382
    %v4420 = vpop.f32.mrf.mxu0
    %v4421 = vadd.f32 0.0, %v4420
    %v4422 = vpop.f32.mrf.mxu0
    %v4423 = vadd.f32 0.0, %v4422
    %4424 = vdwg.mxu0
    %v4425 = vsel %vm1321, %v3899, -inf
    %4426 = vmax.xlane.f32.xlu0 %v4425
    %v4427 = vpop.xlane.xlu0 %4426
    %v4428 = vsel %vm1321, %v3901, -inf
    %4429 = vmax.xlane.f32.xlu0 %v4428
    %v4430 = vpop.xlane.xlu0 %4429
    %v4431 = vsel %vm1321, %v3904, -inf
    %4432 = vmax.xlane.f32.xlu0 %v4431
    %v4433 = vpop.xlane.xlu0 %4432
    %v4434 = vsel %vm1321, %v3906, -inf
    %4435 = vmax.xlane.f32.xlu0 %v4434
    %v4436 = vpop.xlane.xlu0 %4435
    %v4437 = vsel %vm1321, %v3909, -inf
    %4438 = vmax.xlane.f32.xlu0 %v4437
    %v4439 = vpop.xlane.xlu0 %4438
    %v4440 = vsel %vm1321, %v3911, -inf
    %4441 = vmax.xlane.f32.xlu0 %v4440
    %v4442 = vpop.xlane.xlu0 %4441
    %v4443 = vsel %vm1321, %v3914, -inf
    %4444 = vmax.xlane.f32.xlu0 %v4443
    %v4445 = vpop.xlane.xlu0 %4444
    %v4446 = vsel %vm1321, %v3916, -inf
    %4447 = vmax.xlane.f32.xlu0 %v4446
    %v4448 = vpop.xlane.xlu0 %4447
    %v4449 = vsel %vm1321, %v3968, -inf
    %4450 = vmax.xlane.f32.xlu0 %v4449
    %v4451 = vpop.xlane.xlu0 %4450
    %v4452 = vsel %vm1321, %v3970, -inf
    %4453 = vmax.xlane.f32.xlu0 %v4452
    %v4454 = vpop.xlane.xlu0 %4453
    %v4455 = vsel %vm1321, %v3973, -inf
    %4456 = vmax.xlane.f32.xlu0 %v4455
    %v4457 = vpop.xlane.xlu0 %4456
    %v4458 = vsel %vm1321, %v3975, -inf
    %4459 = vmax.xlane.f32.xlu0 %v4458
    %v4460 = vpop.xlane.xlu0 %4459
    %v4461 = vsel %vm1321, %v3978, -inf
    %4462 = vmax.xlane.f32.xlu0 %v4461
    %v4463 = vpop.xlane.xlu0 %4462
    %v4464 = vsel %vm1321, %v3980, -inf
    %4465 = vmax.xlane.f32.xlu0 %v4464
    %v4466 = vpop.xlane.xlu0 %4465
    %v4467 = vsel %vm1321, %v3983, -inf
    %4468 = vmax.xlane.f32.xlu0 %v4467
    %v4469 = vpop.xlane.xlu0 %4468
    %v4470 = vsel %vm1321, %v3985, -inf
    %4471 = vmax.xlane.f32.xlu0 %v4470
    %v4472 = vpop.xlane.xlu0 %4471
    %v4473 = vsel %vm1321, %v4037, -inf
    %4474 = vmax.xlane.f32.xlu0 %v4473
    %v4475 = vpop.xlane.xlu0 %4474
    %v4476 = vsel %vm1321, %v4039, -inf
    %4477 = vmax.xlane.f32.xlu0 %v4476
    %v4478 = vpop.xlane.xlu0 %4477
    %v4479 = vsel %vm1321, %v4042, -inf
    %4480 = vmax.xlane.f32.xlu0 %v4479
    %v4481 = vpop.xlane.xlu0 %4480
    %v4482 = vsel %vm1321, %v4044, -inf
    %4483 = vmax.xlane.f32.xlu0 %v4482
    %v4484 = vpop.xlane.xlu0 %4483
    %v4485 = vsel %vm1321, %v4047, -inf
    %4486 = vmax.xlane.f32.xlu0 %v4485
    %v4487 = vpop.xlane.xlu0 %4486
    %v4488 = vsel %vm1321, %v4049, -inf
    %4489 = vmax.xlane.f32.xlu0 %v4488
    %v4490 = vpop.xlane.xlu0 %4489
    %v4491 = vsel %vm1321, %v4052, -inf
    %4492 = vmax.xlane.f32.xlu0 %v4491
    %v4493 = vpop.xlane.xlu0 %4492
    %v4494 = vsel %vm1321, %v4054, -inf
    %4495 = vmax.xlane.f32.xlu0 %v4494
    %v4496 = vpop.xlane.xlu0 %4495
    %v4497 = vsel %vm1321, %v4106, -inf
    %4498 = vmax.xlane.f32.xlu0 %v4497
    %v4499 = vpop.xlane.xlu0 %4498
    %v4500 = vsel %vm1321, %v4108, -inf
    %4501 = vmax.xlane.f32.xlu0 %v4500
    %v4502 = vpop.xlane.xlu0 %4501
    %v4503 = vsel %vm1321, %v4111, -inf
    %4504 = vmax.xlane.f32.xlu0 %v4503
    %v4505 = vpop.xlane.xlu0 %4504
    %v4506 = vsel %vm1321, %v4113, -inf
    %4507 = vmax.xlane.f32.xlu0 %v4506
    %v4508 = vpop.xlane.xlu0 %4507
    %v4509 = vsel %vm1321, %v4116, -inf
    %4510 = vmax.xlane.f32.xlu0 %v4509
    %v4511 = vpop.xlane.xlu0 %4510
    %v4512 = vsel %vm1321, %v4118, -inf
    %4513 = vmax.xlane.f32.xlu0 %v4512
    %v4514 = vpop.xlane.xlu0 %4513
    %v4515 = vsel %vm1321, %v4121, -inf
    %4516 = vmax.xlane.f32.xlu0 %v4515
    %v4517 = vpop.xlane.xlu0 %4516
    %v4518 = vsel %vm1321, %v4123, -inf
    %4519 = vmax.xlane.f32.xlu0 %v4518
    %v4520 = vpop.xlane.xlu0 %4519
    %v4521 = vsel %vm1321, %v4199, -inf
    %4522 = vmax.xlane.f32.xlu0 %v4521
    %v4523 = vpop.xlane.xlu0 %4522
    %v4524 = vsel %vm1321, %v4201, -inf
    %4525 = vmax.xlane.f32.xlu0 %v4524
    %v4526 = vpop.xlane.xlu0 %4525
    %v4527 = vsel %vm1321, %v4204, -inf
    %4528 = vmax.xlane.f32.xlu0 %v4527
    %v4529 = vpop.xlane.xlu0 %4528
    %v4530 = vsel %vm1321, %v4206, -inf
    %4531 = vmax.xlane.f32.xlu0 %v4530
    %v4532 = vpop.xlane.xlu0 %4531
    %v4533 = vsel %vm1321, %v4209, -inf
    %4534 = vmax.xlane.f32.xlu0 %v4533
    %v4535 = vpop.xlane.xlu0 %4534
    %v4536 = vsel %vm1321, %v4211, -inf
    %4537 = vmax.xlane.f32.xlu0 %v4536
    %v4538 = vpop.xlane.xlu0 %4537
    %v4539 = vsel %vm1321, %v4214, -inf
    %4540 = vmax.xlane.f32.xlu0 %v4539
    %v4541 = vpop.xlane.xlu0 %4540
    %v4542 = vsel %vm1321, %v4216, -inf
    %4543 = vmax.xlane.f32.xlu0 %v4542
    %v4544 = vpop.xlane.xlu0 %4543
    %v4545 = vsel %vm1321, %v4268, -inf
    %4546 = vmax.xlane.f32.xlu0 %v4545
    %v4547 = vpop.xlane.xlu0 %4546
    %v4548 = vsel %vm1321, %v4270, -inf
    %4549 = vmax.xlane.f32.xlu0 %v4548
    %v4550 = vpop.xlane.xlu0 %4549
    %v4551 = vsel %vm1321, %v4273, -inf
    %4552 = vmax.xlane.f32.xlu0 %v4551
    %v4553 = vpop.xlane.xlu0 %4552
    %v4554 = vsel %vm1321, %v4275, -inf
    %4555 = vmax.xlane.f32.xlu0 %v4554
    %v4556 = vpop.xlane.xlu0 %4555
    %v4557 = vsel %vm1321, %v4278, -inf
    %4558 = vmax.xlane.f32.xlu0 %v4557
    %v4559 = vpop.xlane.xlu0 %4558
    %v4560 = vsel %vm1321, %v4280, -inf
    %4561 = vmax.xlane.f32.xlu0 %v4560
    %v4562 = vpop.xlane.xlu0 %4561
    %v4563 = vsel %vm1321, %v4283, -inf
    %4564 = vmax.xlane.f32.xlu0 %v4563
    %v4565 = vpop.xlane.xlu0 %4564
    %v4566 = vsel %vm1321, %v4285, -inf
    %4567 = vmax.xlane.f32.xlu0 %v4566
    %v4568 = vpop.xlane.xlu0 %4567
    %v4569 = vsel %vm1321, %v4337, -inf
    %4570 = vmax.xlane.f32.xlu0 %v4569
    %v4571 = vpop.xlane.xlu0 %4570
    %v4572 = vsel %vm1321, %v4339, -inf
    %4573 = vmax.xlane.f32.xlu0 %v4572
    %v4574 = vpop.xlane.xlu0 %4573
    %v4575 = vsel %vm1321, %v4342, -inf
    %4576 = vmax.xlane.f32.xlu0 %v4575
    %v4577 = vpop.xlane.xlu0 %4576
    %v4578 = vsel %vm1321, %v4344, -inf
    %4579 = vmax.xlane.f32.xlu0 %v4578
    %v4580 = vpop.xlane.xlu0 %4579
    %v4581 = vsel %vm1321, %v4347, -inf
    %4582 = vmax.xlane.f32.xlu0 %v4581
    %v4583 = vpop.xlane.xlu0 %4582
    %v4584 = vsel %vm1321, %v4349, -inf
    %4585 = vmax.xlane.f32.xlu0 %v4584
    %v4586 = vpop.xlane.xlu0 %4585
    %v4587 = vsel %vm1321, %v4352, -inf
    %4588 = vmax.xlane.f32.xlu0 %v4587
    %v4589 = vpop.xlane.xlu0 %4588
    %v4590 = vsel %vm1321, %v4354, -inf
    %4591 = vmax.xlane.f32.xlu0 %v4590
    %v4592 = vpop.xlane.xlu0 %4591
    %v4593 = vsel %vm1321, %v4406, -inf
    %4594 = vmax.xlane.f32.xlu0 %v4593
    %v4595 = vpop.xlane.xlu0 %4594
    %v4596 = vsel %vm1321, %v4408, -inf
    %4597 = vmax.xlane.f32.xlu0 %v4596
    %v4598 = vpop.xlane.xlu0 %4597
    %v4599 = vsel %vm1321, %v4411, -inf
    %4600 = vmax.xlane.f32.xlu0 %v4599
    %v4601 = vpop.xlane.xlu0 %4600
    %v4602 = vsel %vm1321, %v4413, -inf
    %4603 = vmax.xlane.f32.xlu0 %v4602
    %v4604 = vpop.xlane.xlu0 %4603
    %v4605 = vsel %vm1321, %v4416, -inf
    %4606 = vmax.xlane.f32.xlu0 %v4605
    %v4607 = vpop.xlane.xlu0 %4606
    %v4608 = vsel %vm1321, %v4418, -inf
    %4609 = vmax.xlane.f32.xlu0 %v4608
    %v4610 = vpop.xlane.xlu0 %4609
    %v4611 = vsel %vm1321, %v4421, -inf
    %4612 = vmax.xlane.f32.xlu0 %v4611
    %v4613 = vpop.xlane.xlu0 %4612
    %v4614 = vsel %vm1321, %v4423, -inf
    %4615 = vmax.xlane.f32.xlu0 %v4614
    %v4616 = vpop.xlane.xlu0 %4615
    %v4617 = vsub.f32 %v3899, %v4427
    %v4618 = vsub.f32 %v3901, %v4430
    %v4619 = vsub.f32 %v3904, %v4433
    %v4620 = vsub.f32 %v3906, %v4436
    %v4621 = vsub.f32 %v3909, %v4439
    %v4622 = vsub.f32 %v3911, %v4442
    %v4623 = vsub.f32 %v3914, %v4445
    %v4624 = vsub.f32 %v3916, %v4448
    %v4625 = vsub.f32 %v3968, %v4451
    %v4626 = vsub.f32 %v3970, %v4454
    %v4627 = vsub.f32 %v3973, %v4457
    %v4628 = vsub.f32 %v3975, %v4460
    %v4629 = vsub.f32 %v3978, %v4463
    %v4630 = vsub.f32 %v3980, %v4466
    %v4631 = vsub.f32 %v3983, %v4469
    %v4632 = vsub.f32 %v3985, %v4472
    %v4633 = vsub.f32 %v4037, %v4475
    %v4634 = vsub.f32 %v4039, %v4478
    %v4635 = vsub.f32 %v4042, %v4481
    %v4636 = vsub.f32 %v4044, %v4484
    %v4637 = vsub.f32 %v4047, %v4487
    %v4638 = vsub.f32 %v4049, %v4490
    %v4639 = vsub.f32 %v4052, %v4493
    %v4640 = vsub.f32 %v4054, %v4496
    %v4641 = vsub.f32 %v4106, %v4499
    %v4642 = vsub.f32 %v4108, %v4502
    %v4643 = vsub.f32 %v4111, %v4505
    %v4644 = vsub.f32 %v4113, %v4508
    %v4645 = vsub.f32 %v4116, %v4511
    %v4646 = vsub.f32 %v4118, %v4514
    %v4647 = vsub.f32 %v4121, %v4517
    %v4648 = vsub.f32 %v4123, %v4520
    %v4649 = vsub.f32 %v4199, %v4523
    %v4650 = vsub.f32 %v4201, %v4526
    %v4651 = vsub.f32 %v4204, %v4529
    %v4652 = vsub.f32 %v4206, %v4532
    %v4653 = vsub.f32 %v4209, %v4535
    %v4654 = vsub.f32 %v4211, %v4538
    %v4655 = vsub.f32 %v4214, %v4541
    %v4656 = vsub.f32 %v4216, %v4544
    %v4657 = vsub.f32 %v4268, %v4547
    %v4658 = vsub.f32 %v4270, %v4550
    %v4659 = vsub.f32 %v4273, %v4553
    %v4660 = vsub.f32 %v4275, %v4556
    %v4661 = vsub.f32 %v4278, %v4559
    %v4662 = vsub.f32 %v4280, %v4562
    %v4663 = vsub.f32 %v4283, %v4565
    %v4664 = vsub.f32 %v4285, %v4568
    %v4665 = vsub.f32 %v4337, %v4571
    %v4666 = vsub.f32 %v4339, %v4574
    %v4667 = vsub.f32 %v4342, %v4577
    %v4668 = vsub.f32 %v4344, %v4580
    %v4669 = vsub.f32 %v4347, %v4583
    %v4670 = vsub.f32 %v4349, %v4586
    %v4671 = vsub.f32 %v4352, %v4589
    %v4672 = vsub.f32 %v4354, %v4592
    %v4673 = vsub.f32 %v4406, %v4595
    %v4674 = vsub.f32 %v4408, %v4598
    %v4675 = vsub.f32 %v4411, %v4601
    %v4676 = vsub.f32 %v4413, %v4604
    %v4677 = vsub.f32 %v4416, %v4607
    %v4678 = vsub.f32 %v4418, %v4610
    %v4679 = vsub.f32 %v4421, %v4613
    %v4680 = vsub.f32 %v4423, %v4616
    %v4681 = vmul.f32 %v4617, 1.442695
    %v4682 = vpow.pop %v4681
    %v4683 = vmul.f32 %v4618, 1.442695
    %v4684 = vpow.pop %v4683
    %v4685 = vmul.f32 %v4619, 1.442695
    %v4686 = vpow.pop %v4685
    %v4687 = vmul.f32 %v4620, 1.442695
    %v4688 = vpow.pop %v4687
    %v4689 = vmul.f32 %v4621, 1.442695
    %v4690 = vpow.pop %v4689
    %v4691 = vmul.f32 %v4622, 1.442695
    %v4692 = vpow.pop %v4691
    %v4693 = vmul.f32 %v4623, 1.442695
    %v4694 = vpow.pop %v4693
    %v4695 = vmul.f32 %v4624, 1.442695
    %v4696 = vpow.pop %v4695
    %v4697 = vmul.f32 %v4625, 1.442695
    %v4698 = vpow.pop %v4697
    %v4699 = vmul.f32 %v4626, 1.442695
    %v4700 = vpow.pop %v4699
    %v4701 = vmul.f32 %v4627, 1.442695
    %v4702 = vpow.pop %v4701
    %v4703 = vmul.f32 %v4628, 1.442695
    %v4704 = vpow.pop %v4703
    %v4705 = vmul.f32 %v4629, 1.442695
    %v4706 = vpow.pop %v4705
    %v4707 = vmul.f32 %v4630, 1.442695
    %v4708 = vpow.pop %v4707
    %v4709 = vmul.f32 %v4631, 1.442695
    %v4710 = vpow.pop %v4709
    %v4711 = vmul.f32 %v4632, 1.442695
    %v4712 = vpow.pop %v4711
    %v4713 = vmul.f32 %v4633, 1.442695
    %v4714 = vpow.pop %v4713
    %v4715 = vmul.f32 %v4634, 1.442695
    %v4716 = vpow.pop %v4715
    %v4717 = vmul.f32 %v4635, 1.442695
    %v4718 = vpow.pop %v4717
    %v4719 = vmul.f32 %v4636, 1.442695
    %v4720 = vpow.pop %v4719
    %v4721 = vmul.f32 %v4637, 1.442695
    %v4722 = vpow.pop %v4721
    %v4723 = vmul.f32 %v4638, 1.442695
    %v4724 = vpow.pop %v4723
    %v4725 = vmul.f32 %v4639, 1.442695
    %v4726 = vpow.pop %v4725
    %v4727 = vmul.f32 %v4640, 1.442695
    %v4728 = vpow.pop %v4727
    %v4729 = vmul.f32 %v4641, 1.442695
    %v4730 = vpow.pop %v4729
    %v4731 = vmul.f32 %v4642, 1.442695
    %v4732 = vpow.pop %v4731
    %v4733 = vmul.f32 %v4643, 1.442695
    %v4734 = vpow.pop %v4733
    %v4735 = vmul.f32 %v4644, 1.442695
    %v4736 = vpow.pop %v4735
    %v4737 = vmul.f32 %v4645, 1.442695
    %v4738 = vpow.pop %v4737
    %v4739 = vmul.f32 %v4646, 1.442695
    %v4740 = vpow.pop %v4739
    %v4741 = vmul.f32 %v4647, 1.442695
    %v4742 = vpow.pop %v4741
    %v4743 = vmul.f32 %v4648, 1.442695
    %v4744 = vpow.pop %v4743
    %v4745 = vmul.f32 %v4649, 1.442695
    %v4746 = vpow.pop %v4745
    %v4747 = vmul.f32 %v4650, 1.442695
    %v4748 = vpow.pop %v4747
    %v4749 = vmul.f32 %v4651, 1.442695
    %v4750 = vpow.pop %v4749
    %v4751 = vmul.f32 %v4652, 1.442695
    %v4752 = vpow.pop %v4751
    %v4753 = vmul.f32 %v4653, 1.442695
    %v4754 = vpow.pop %v4753
    %v4755 = vmul.f32 %v4654, 1.442695
    %v4756 = vpow.pop %v4755
    %v4757 = vmul.f32 %v4655, 1.442695
    %v4758 = vpow.pop %v4757
    %v4759 = vmul.f32 %v4656, 1.442695
    %v4760 = vpow.pop %v4759
    %v4761 = vmul.f32 %v4657, 1.442695
    %v4762 = vpow.pop %v4761
    %v4763 = vmul.f32 %v4658, 1.442695
    %v4764 = vpow.pop %v4763
    %v4765 = vmul.f32 %v4659, 1.442695
    %v4766 = vpow.pop %v4765
    %v4767 = vmul.f32 %v4660, 1.442695
    %v4768 = vpow.pop %v4767
    %v4769 = vmul.f32 %v4661, 1.442695
    %v4770 = vpow.pop %v4769
    %v4771 = vmul.f32 %v4662, 1.442695
    %v4772 = vpow.pop %v4771
    %v4773 = vmul.f32 %v4663, 1.442695
    %v4774 = vpow.pop %v4773
    %v4775 = vmul.f32 %v4664, 1.442695
    %v4776 = vpow.pop %v4775
    %v4777 = vmul.f32 %v4665, 1.442695
    %v4778 = vpow.pop %v4777
    %v4779 = vmul.f32 %v4666, 1.442695
    %v4780 = vpow.pop %v4779
    %v4781 = vmul.f32 %v4667, 1.442695
    %v4782 = vpow.pop %v4781
    %v4783 = vmul.f32 %v4668, 1.442695
    %v4784 = vpow.pop %v4783
    %v4785 = vmul.f32 %v4669, 1.442695
    %v4786 = vpow.pop %v4785
    %v4787 = vmul.f32 %v4670, 1.442695
    %v4788 = vpow.pop %v4787
    %v4789 = vmul.f32 %v4671, 1.442695
    %v4790 = vpow.pop %v4789
    %v4791 = vmul.f32 %v4672, 1.442695
    %v4792 = vpow.pop %v4791
    %v4793 = vmul.f32 %v4673, 1.442695
    %v4794 = vpow.pop %v4793
    %v4795 = vmul.f32 %v4674, 1.442695
    %v4796 = vpow.pop %v4795
    %v4797 = vmul.f32 %v4675, 1.442695
    %v4798 = vpow.pop %v4797
    %v4799 = vmul.f32 %v4676, 1.442695
    %v4800 = vpow.pop %v4799
    %v4801 = vmul.f32 %v4677, 1.442695
    %v4802 = vpow.pop %v4801
    %v4803 = vmul.f32 %v4678, 1.442695
    %v4804 = vpow.pop %v4803
    %v4805 = vmul.f32 %v4679, 1.442695
    %v4806 = vpow.pop %v4805
    %v4807 = vmul.f32 %v4680, 1.442695
    %v4808 = vpow.pop %v4807
    %v4809 = vsel %vm1321, %v4682, 0.0
    %4810 = vadd.xlane.f32.xlu0 %v4809
    %v4811 = vpop.xlane.xlu0 %4810
    %v4812 = vsel %vm1321, %v4684, 0.0
    %4813 = vadd.xlane.f32.xlu0 %v4812
    %v4814 = vpop.xlane.xlu0 %4813
    %v4815 = vsel %vm1321, %v4686, 0.0
    %4816 = vadd.xlane.f32.xlu0 %v4815
    %v4817 = vpop.xlane.xlu0 %4816
    %v4818 = vsel %vm1321, %v4688, 0.0
    %4819 = vadd.xlane.f32.xlu0 %v4818
    %v4820 = vpop.xlane.xlu0 %4819
    %v4821 = vsel %vm1321, %v4690, 0.0
    %4822 = vadd.xlane.f32.xlu0 %v4821
    %v4823 = vpop.xlane.xlu0 %4822
    %v4824 = vsel %vm1321, %v4692, 0.0
    %4825 = vadd.xlane.f32.xlu0 %v4824
    %v4826 = vpop.xlane.xlu0 %4825
    %v4827 = vsel %vm1321, %v4694, 0.0
    %4828 = vadd.xlane.f32.xlu0 %v4827
    %v4829 = vpop.xlane.xlu0 %4828
    %v4830 = vsel %vm1321, %v4696, 0.0
    %4831 = vadd.xlane.f32.xlu0 %v4830
    %v4832 = vpop.xlane.xlu0 %4831
    %v4833 = vsel %vm1321, %v4698, 0.0
    %4834 = vadd.xlane.f32.xlu0 %v4833
    %v4835 = vpop.xlane.xlu0 %4834
    %v4836 = vsel %vm1321, %v4700, 0.0
    %4837 = vadd.xlane.f32.xlu0 %v4836
    %v4838 = vpop.xlane.xlu0 %4837
    %v4839 = vsel %vm1321, %v4702, 0.0
    %4840 = vadd.xlane.f32.xlu0 %v4839
    %v4841 = vpop.xlane.xlu0 %4840
    %v4842 = vsel %vm1321, %v4704, 0.0
    %4843 = vadd.xlane.f32.xlu0 %v4842
    %v4844 = vpop.xlane.xlu0 %4843
    %v4845 = vsel %vm1321, %v4706, 0.0
    %4846 = vadd.xlane.f32.xlu0 %v4845
    %v4847 = vpop.xlane.xlu0 %4846
    %v4848 = vsel %vm1321, %v4708, 0.0
    %4849 = vadd.xlane.f32.xlu0 %v4848
    %v4850 = vpop.xlane.xlu0 %4849
    %v4851 = vsel %vm1321, %v4710, 0.0
    %4852 = vadd.xlane.f32.xlu0 %v4851
    %v4853 = vpop.xlane.xlu0 %4852
    %v4854 = vsel %vm1321, %v4712, 0.0
    %4855 = vadd.xlane.f32.xlu0 %v4854
    %v4856 = vpop.xlane.xlu0 %4855
    %v4857 = vsel %vm1321, %v4714, 0.0
    %4858 = vadd.xlane.f32.xlu0 %v4857
    %v4859 = vpop.xlane.xlu0 %4858
    %v4860 = vsel %vm1321, %v4716, 0.0
    %4861 = vadd.xlane.f32.xlu0 %v4860
    %v4862 = vpop.xlane.xlu0 %4861
    %v4863 = vsel %vm1321, %v4718, 0.0
    %4864 = vadd.xlane.f32.xlu0 %v4863
    %v4865 = vpop.xlane.xlu0 %4864
    %v4866 = vsel %vm1321, %v4720, 0.0
    %4867 = vadd.xlane.f32.xlu0 %v4866
    %v4868 = vpop.xlane.xlu0 %4867
    %v4869 = vsel %vm1321, %v4722, 0.0
    %4870 = vadd.xlane.f32.xlu0 %v4869
    %v4871 = vpop.xlane.xlu0 %4870
    %v4872 = vsel %vm1321, %v4724, 0.0
    %4873 = vadd.xlane.f32.xlu0 %v4872
    %v4874 = vpop.xlane.xlu0 %4873
    %v4875 = vsel %vm1321, %v4726, 0.0
    %4876 = vadd.xlane.f32.xlu0 %v4875
    %v4877 = vpop.xlane.xlu0 %4876
    %v4878 = vsel %vm1321, %v4728, 0.0
    %4879 = vadd.xlane.f32.xlu0 %v4878
    %v4880 = vpop.xlane.xlu0 %4879
    %v4881 = vsel %vm1321, %v4730, 0.0
    %4882 = vadd.xlane.f32.xlu0 %v4881
    %v4883 = vpop.xlane.xlu0 %4882
    %v4884 = vsel %vm1321, %v4732, 0.0
    %4885 = vadd.xlane.f32.xlu0 %v4884
    %v4886 = vpop.xlane.xlu0 %4885
    %v4887 = vsel %vm1321, %v4734, 0.0
    %4888 = vadd.xlane.f32.xlu0 %v4887
    %v4889 = vpop.xlane.xlu0 %4888
    %v4890 = vsel %vm1321, %v4736, 0.0
    %4891 = vadd.xlane.f32.xlu0 %v4890
    %v4892 = vpop.xlane.xlu0 %4891
    %v4893 = vsel %vm1321, %v4738, 0.0
    %4894 = vadd.xlane.f32.xlu0 %v4893
    %v4895 = vpop.xlane.xlu0 %4894
    %v4896 = vsel %vm1321, %v4740, 0.0
    %4897 = vadd.xlane.f32.xlu0 %v4896
    %v4898 = vpop.xlane.xlu0 %4897
    %v4899 = vsel %vm1321, %v4742, 0.0
    %4900 = vadd.xlane.f32.xlu0 %v4899
    %v4901 = vpop.xlane.xlu0 %4900
    %v4902 = vsel %vm1321, %v4744, 0.0
    %4903 = vadd.xlane.f32.xlu0 %v4902
    %v4904 = vpop.xlane.xlu0 %4903
    %v4905 = vsel %vm1321, %v4746, 0.0
    %4906 = vadd.xlane.f32.xlu0 %v4905
    %v4907 = vpop.xlane.xlu0 %4906
    %v4908 = vsel %vm1321, %v4748, 0.0
    %4909 = vadd.xlane.f32.xlu0 %v4908
    %v4910 = vpop.xlane.xlu0 %4909
    %v4911 = vsel %vm1321, %v4750, 0.0
    %4912 = vadd.xlane.f32.xlu0 %v4911
    %v4913 = vpop.xlane.xlu0 %4912
    %v4914 = vsel %vm1321, %v4752, 0.0
    %4915 = vadd.xlane.f32.xlu0 %v4914
    %v4916 = vpop.xlane.xlu0 %4915
    %v4917 = vsel %vm1321, %v4754, 0.0
    %4918 = vadd.xlane.f32.xlu0 %v4917
    %v4919 = vpop.xlane.xlu0 %4918
    %v4920 = vsel %vm1321, %v4756, 0.0
    %4921 = vadd.xlane.f32.xlu0 %v4920
    %v4922 = vpop.xlane.xlu0 %4921
    %v4923 = vsel %vm1321, %v4758, 0.0
    %4924 = vadd.xlane.f32.xlu0 %v4923
    %v4925 = vpop.xlane.xlu0 %4924
    %v4926 = vsel %vm1321, %v4760, 0.0
    %4927 = vadd.xlane.f32.xlu0 %v4926
    %v4928 = vpop.xlane.xlu0 %4927
    %v4929 = vsel %vm1321, %v4762, 0.0
    %4930 = vadd.xlane.f32.xlu0 %v4929
    %v4931 = vpop.xlane.xlu0 %4930
    %v4932 = vsel %vm1321, %v4764, 0.0
    %4933 = vadd.xlane.f32.xlu0 %v4932
    %v4934 = vpop.xlane.xlu0 %4933
    %v4935 = vsel %vm1321, %v4766, 0.0
    %4936 = vadd.xlane.f32.xlu0 %v4935
    %v4937 = vpop.xlane.xlu0 %4936
    %v4938 = vsel %vm1321, %v4768, 0.0
    %4939 = vadd.xlane.f32.xlu0 %v4938
    %v4940 = vpop.xlane.xlu0 %4939
    %v4941 = vsel %vm1321, %v4770, 0.0
    %4942 = vadd.xlane.f32.xlu0 %v4941
    %v4943 = vpop.xlane.xlu0 %4942
    %v4944 = vsel %vm1321, %v4772, 0.0
    %4945 = vadd.xlane.f32.xlu0 %v4944
    %v4946 = vpop.xlane.xlu0 %4945
    %v4947 = vsel %vm1321, %v4774, 0.0
    %4948 = vadd.xlane.f32.xlu0 %v4947
    %v4949 = vpop.xlane.xlu0 %4948
    %v4950 = vsel %vm1321, %v4776, 0.0
    %4951 = vadd.xlane.f32.xlu0 %v4950
    %v4952 = vpop.xlane.xlu0 %4951
    %v4953 = vsel %vm1321, %v4778, 0.0
    %4954 = vadd.xlane.f32.xlu0 %v4953
    %v4955 = vpop.xlane.xlu0 %4954
    %v4956 = vsel %vm1321, %v4780, 0.0
    %4957 = vadd.xlane.f32.xlu0 %v4956
    %v4958 = vpop.xlane.xlu0 %4957
    %v4959 = vsel %vm1321, %v4782, 0.0
    %4960 = vadd.xlane.f32.xlu0 %v4959
    %v4961 = vpop.xlane.xlu0 %4960
    %v4962 = vsel %vm1321, %v4784, 0.0
    %4963 = vadd.xlane.f32.xlu0 %v4962
    %v4964 = vpop.xlane.xlu0 %4963
    %v4965 = vsel %vm1321, %v4786, 0.0
    %4966 = vadd.xlane.f32.xlu0 %v4965
    %v4967 = vpop.xlane.xlu0 %4966
    %v4968 = vsel %vm1321, %v4788, 0.0
    %4969 = vadd.xlane.f32.xlu0 %v4968
    %v4970 = vpop.xlane.xlu0 %4969
    %v4971 = vsel %vm1321, %v4790, 0.0
    %4972 = vadd.xlane.f32.xlu0 %v4971
    %v4973 = vpop.xlane.xlu0 %4972
    %v4974 = vsel %vm1321, %v4792, 0.0
    %4975 = vadd.xlane.f32.xlu0 %v4974
    %v4976 = vpop.xlane.xlu0 %4975
    %v4977 = vsel %vm1321, %v4794, 0.0
    %4978 = vadd.xlane.f32.xlu0 %v4977
    %v4979 = vpop.xlane.xlu0 %4978
    %v4980 = vsel %vm1321, %v4796, 0.0
    %4981 = vadd.xlane.f32.xlu0 %v4980
    %v4982 = vpop.xlane.xlu0 %4981
    %v4983 = vsel %vm1321, %v4798, 0.0
    %4984 = vadd.xlane.f32.xlu0 %v4983
    %v4985 = vpop.xlane.xlu0 %4984
    %v4986 = vsel %vm1321, %v4800, 0.0
    %4987 = vadd.xlane.f32.xlu0 %v4986
    %v4988 = vpop.xlane.xlu0 %4987
    %v4989 = vsel %vm1321, %v4802, 0.0
    %4990 = vadd.xlane.f32.xlu0 %v4989
    %v4991 = vpop.xlane.xlu0 %4990
    %v4992 = vsel %vm1321, %v4804, 0.0
    %4993 = vadd.xlane.f32.xlu0 %v4992
    %v4994 = vpop.xlane.xlu0 %4993
    %v4995 = vsel %vm1321, %v4806, 0.0
    %4996 = vadd.xlane.f32.xlu0 %v4995
    %v4997 = vpop.xlane.xlu0 %4996
    %v4998 = vsel %vm1321, %v4808, 0.0
    %4999 = vadd.xlane.f32.xlu0 %v4998
    %v5000 = vpop.xlane.xlu0 %4999
    %v5001 = vrcp.pop %v4811
    %v5002 = vrcp.pop %v4814
    %v5003 = vrcp.pop %v4817
    %v5004 = vrcp.pop %v4820
    %v5005 = vrcp.pop %v4823
    %v5006 = vrcp.pop %v4826
    %v5007 = vrcp.pop %v4829
    %v5008 = vrcp.pop %v4832
    %v5009 = vrcp.pop %v4835
    %v5010 = vrcp.pop %v4838
    %v5011 = vrcp.pop %v4841
    %v5012 = vrcp.pop %v4844
    %v5013 = vrcp.pop %v4847
    %v5014 = vrcp.pop %v4850
    %v5015 = vrcp.pop %v4853
    %v5016 = vrcp.pop %v4856
    %v5017 = vrcp.pop %v4859
    %v5018 = vrcp.pop %v4862
    %v5019 = vrcp.pop %v4865
    %v5020 = vrcp.pop %v4868
    %v5021 = vrcp.pop %v4871
    %v5022 = vrcp.pop %v4874
    %v5023 = vrcp.pop %v4877
    %v5024 = vrcp.pop %v4880
    %v5025 = vrcp.pop %v4883
    %v5026 = vrcp.pop %v4886
    %v5027 = vrcp.pop %v4889
    %v5028 = vrcp.pop %v4892
    %v5029 = vrcp.pop %v4895
    %v5030 = vrcp.pop %v4898
    %v5031 = vrcp.pop %v4901
    %v5032 = vrcp.pop %v4904
    %v5033 = vrcp.pop %v4907
    %v5034 = vrcp.pop %v4910
    %v5035 = vrcp.pop %v4913
    %v5036 = vrcp.pop %v4916
    %v5037 = vrcp.pop %v4919
    %v5038 = vrcp.pop %v4922
    %v5039 = vrcp.pop %v4925
    %v5040 = vrcp.pop %v4928
    %v5041 = vrcp.pop %v4931
    %v5042 = vrcp.pop %v4934
    %v5043 = vrcp.pop %v4937
    %v5044 = vrcp.pop %v4940
    %v5045 = vrcp.pop %v4943
    %v5046 = vrcp.pop %v4946
    %v5047 = vrcp.pop %v4949
    %v5048 = vrcp.pop %v4952
    %v5049 = vrcp.pop %v4955
    %v5050 = vrcp.pop %v4958
    %v5051 = vrcp.pop %v4961
    %v5052 = vrcp.pop %v4964
    %v5053 = vrcp.pop %v4967
    %v5054 = vrcp.pop %v4970
    %v5055 = vrcp.pop %v4973
    %v5056 = vrcp.pop %v4976
    %v5057 = vrcp.pop %v4979
    %v5058 = vrcp.pop %v4982
    %v5059 = vrcp.pop %v4985
    %v5060 = vrcp.pop %v4988
    %v5061 = vrcp.pop %v4991
    %v5062 = vrcp.pop %v4994
    %v5063 = vrcp.pop %v4997
    %v5064 = vrcp.pop %v5000
    %v5065 = vmul.f32 %v4682, %v5001
    %v5066 = vmul.f32 %v4684, %v5002
    %v5067 = vmul.f32 %v4686, %v5003
    %v5068 = vmul.f32 %v4688, %v5004
    %v5069 = vmul.f32 %v4690, %v5005
    %v5070 = vmul.f32 %v4692, %v5006
    %v5071 = vmul.f32 %v4694, %v5007
    %v5072 = vmul.f32 %v4696, %v5008
    %v5073 = vmul.f32 %v4698, %v5009
    %v5074 = vmul.f32 %v4700, %v5010
    %v5075 = vmul.f32 %v4702, %v5011
    %v5076 = vmul.f32 %v4704, %v5012
    %v5077 = vmul.f32 %v4706, %v5013
    %v5078 = vmul.f32 %v4708, %v5014
    %v5079 = vmul.f32 %v4710, %v5015
    %v5080 = vmul.f32 %v4712, %v5016
    %v5081 = vmul.f32 %v4714, %v5017
    %v5082 = vmul.f32 %v4716, %v5018
    %v5083 = vmul.f32 %v4718, %v5019
    %v5084 = vmul.f32 %v4720, %v5020
    %v5085 = vmul.f32 %v4722, %v5021
    %v5086 = vmul.f32 %v4724, %v5022
    %v5087 = vmul.f32 %v4726, %v5023
    %v5088 = vmul.f32 %v4728, %v5024
    %v5089 = vmul.f32 %v4730, %v5025
    %v5090 = vmul.f32 %v4732, %v5026
    %v5091 = vmul.f32 %v4734, %v5027
    %v5092 = vmul.f32 %v4736, %v5028
    %v5093 = vmul.f32 %v4738, %v5029
    %v5094 = vmul.f32 %v4740, %v5030
    %v5095 = vmul.f32 %v4742, %v5031
    %v5096 = vmul.f32 %v4744, %v5032
    %v5097 = vmul.f32 %v4746, %v5033
    %v5098 = vmul.f32 %v4748, %v5034
    %v5099 = vmul.f32 %v4750, %v5035
    %v5100 = vmul.f32 %v4752, %v5036
    %v5101 = vmul.f32 %v4754, %v5037
    %v5102 = vmul.f32 %v4756, %v5038
    %v5103 = vmul.f32 %v4758, %v5039
    %v5104 = vmul.f32 %v4760, %v5040
    %v5105 = vmul.f32 %v4762, %v5041
    %v5106 = vmul.f32 %v4764, %v5042
    %v5107 = vmul.f32 %v4766, %v5043
    %v5108 = vmul.f32 %v4768, %v5044
    %v5109 = vmul.f32 %v4770, %v5045
    %v5110 = vmul.f32 %v4772, %v5046
    %v5111 = vmul.f32 %v4774, %v5047
    %v5112 = vmul.f32 %v4776, %v5048
    %v5113 = vmul.f32 %v4778, %v5049
    %v5114 = vmul.f32 %v4780, %v5050
    %v5115 = vmul.f32 %v4782, %v5051
    %v5116 = vmul.f32 %v4784, %v5052
    %v5117 = vmul.f32 %v4786, %v5053
    %v5118 = vmul.f32 %v4788, %v5054
    %v5119 = vmul.f32 %v4790, %v5055
    %v5120 = vmul.f32 %v4792, %v5056
    %v5121 = vmul.f32 %v4794, %v5057
    %v5122 = vmul.f32 %v4796, %v5058
    %v5123 = vmul.f32 %v4798, %v5059
    %v5124 = vmul.f32 %v4800, %v5060
    %v5125 = vmul.f32 %v4802, %v5061
    %v5126 = vmul.f32 %v4804, %v5062
    %v5127 = vmul.f32 %v4806, %v5063
    %v5128 = vmul.f32 %v4808, %v5064
    %v5129 = vpack.c.bf16 %v5065, %v5065
    %v5130 = vpack.c.bf16 %v5066, %v5066
    %v5131 = vpack.c.bf16 %v5067, %v5067
    %v5132 = vpack.c.bf16 %v5068, %v5068
    %v5133 = vpack.c.bf16 %v5069, %v5069
    %v5134 = vpack.c.bf16 %v5070, %v5070
    %v5135 = vpack.c.bf16 %v5071, %v5071
    %v5136 = vpack.c.bf16 %v5072, %v5072
    %v5137 = vpack.c.bf16 %v5073, %v5073
    %v5138 = vpack.c.bf16 %v5074, %v5074
    %v5139 = vpack.c.bf16 %v5075, %v5075
    %v5140 = vpack.c.bf16 %v5076, %v5076
    %v5141 = vpack.c.bf16 %v5077, %v5077
    %v5142 = vpack.c.bf16 %v5078, %v5078
    %v5143 = vpack.c.bf16 %v5079, %v5079
    %v5144 = vpack.c.bf16 %v5080, %v5080
    %v5145 = vpack.c.bf16 %v5081, %v5081
    %v5146 = vpack.c.bf16 %v5082, %v5082
    %v5147 = vpack.c.bf16 %v5083, %v5083
    %v5148 = vpack.c.bf16 %v5084, %v5084
    %v5149 = vpack.c.bf16 %v5085, %v5085
    %v5150 = vpack.c.bf16 %v5086, %v5086
    %v5151 = vpack.c.bf16 %v5087, %v5087
    %v5152 = vpack.c.bf16 %v5088, %v5088
    %v5153 = vpack.c.bf16 %v5089, %v5089
    %v5154 = vpack.c.bf16 %v5090, %v5090
    %v5155 = vpack.c.bf16 %v5091, %v5091
    %v5156 = vpack.c.bf16 %v5092, %v5092
    %v5157 = vpack.c.bf16 %v5093, %v5093
    %v5158 = vpack.c.bf16 %v5094, %v5094
    %v5159 = vpack.c.bf16 %v5095, %v5095
    %v5160 = vpack.c.bf16 %v5096, %v5096
    %v5161 = vpack.c.bf16 %v5097, %v5097
    %v5162 = vpack.c.bf16 %v5098, %v5098
    %v5163 = vpack.c.bf16 %v5099, %v5099
    %v5164 = vpack.c.bf16 %v5100, %v5100
    %v5165 = vpack.c.bf16 %v5101, %v5101
    %v5166 = vpack.c.bf16 %v5102, %v5102
    %v5167 = vpack.c.bf16 %v5103, %v5103
    %v5168 = vpack.c.bf16 %v5104, %v5104
    %v5169 = vpack.c.bf16 %v5105, %v5105
    %v5170 = vpack.c.bf16 %v5106, %v5106
    %v5171 = vpack.c.bf16 %v5107, %v5107
    %v5172 = vpack.c.bf16 %v5108, %v5108
    %v5173 = vpack.c.bf16 %v5109, %v5109
    %v5174 = vpack.c.bf16 %v5110, %v5110
    %v5175 = vpack.c.bf16 %v5111, %v5111
    %v5176 = vpack.c.bf16 %v5112, %v5112
    %v5177 = vpack.c.bf16 %v5113, %v5113
    %v5178 = vpack.c.bf16 %v5114, %v5114
    %v5179 = vpack.c.bf16 %v5115, %v5115
    %v5180 = vpack.c.bf16 %v5116, %v5116
    %v5181 = vpack.c.bf16 %v5117, %v5117
    %v5182 = vpack.c.bf16 %v5118, %v5118
    %v5183 = vpack.c.bf16 %v5119, %v5119
    %v5184 = vpack.c.bf16 %v5120, %v5120
    %v5185 = vpack.c.bf16 %v5121, %v5121
    %v5186 = vpack.c.bf16 %v5122, %v5122
    %v5187 = vpack.c.bf16 %v5123, %v5123
    %v5188 = vpack.c.bf16 %v5124, %v5124
    %v5189 = vpack.c.bf16 %v5125, %v5125
    %v5190 = vpack.c.bf16 %v5126, %v5126
    %v5191 = vpack.c.bf16 %v5127, %v5127
    %v5192 = vpack.c.bf16 %v5128, %v5128
    %v5201 = vunpack.c.l.b16 %v5129
    %v5202 = vunpack.c.l.b16 %v5130
    %v5203 = vunpack.c.l.b16 %v5131
    %v5204 = vunpack.c.l.b16 %v5132
    %v5205 = vunpack.c.l.b16 %v5133
    %v5206 = vunpack.c.l.b16 %v5134
    %v5207 = vunpack.c.l.b16 %v5135
    %v5208 = vunpack.c.l.b16 %v5136
    %v5209 = vpack.c.b16 %v5202, %v5201
    %v5210 = vpack.c.b16 %v5204, %v5203
    %v5211 = vpack.c.b16 %v5206, %v5205
    %v5212 = vpack.c.b16 %v5208, %v5207
    %v5221 = vunpack.c.l.b16 %v3809
    %v5222 = vunpack.c.l.b16 %v3810
    %v5223 = vunpack.c.l.b16 %v3811
    %v5224 = vunpack.c.l.b16 %v3812
    %v5225 = vunpack.c.l.b16 %v3813
    %v5226 = vunpack.c.l.b16 %v3814
    %v5227 = vunpack.c.l.b16 %v3815
    %v5228 = vunpack.c.l.b16 %v3816
    %v5229 = vpack.c.b16 %v5222, %v5221
    %v5230 = vpack.c.b16 %v5224, %v5223
    %v5231 = vpack.c.b16 %v5226, %v5225
    %v5232 = vpack.c.b16 %v5228, %v5227
    %v5238 = vsel %vm1321, %v5209, 0
    %v5241 = vsel %vm1321, %v5210, 0
    %v5244 = vsel %vm1321, %v5211, 0
    %v5247 = vsel %vm1321, %v5212, 0
    %5249 = vmatpush.bf16.msra.mxu0 0
    %5250 = vmatpush.bf16.msra.mxu0 0
    %5251 = vmatpush.bf16.msra.mxu0 0
    %5252 = vmatpush.bf16.msra.mxu0 0
    %5253 = vmatpush.bf16.msra.mxu0 %v5232
    %5254 = vmatpush.bf16.msra.mxu0 %v5231
    %5255 = vmatpush.bf16.msra.mxu0 %v5230
    %5256 = vmatpush.bf16.msra.mxu0 %v5229
    %5257 = vmatmul.bf16.gmra.mxu0 %v5238
    %v5258 = vpop.f32.mrf.mxu0
    %v5259 = vadd.f32 0.0, %v5258
    %v5260 = vpop.f32.mrf.mxu0
    %v5261 = vadd.f32 0.0, %v5260
    %5262 = vmatmul.bf16.gmra.mxu0 %v5241
    %v5263 = vpop.f32.mrf.mxu0
    %v5264 = vadd.f32 0.0, %v5263
    %v5265 = vpop.f32.mrf.mxu0
    %v5266 = vadd.f32 0.0, %v5265
    %5267 = vmatmul.bf16.gmra.mxu0 %v5244
    %v5268 = vpop.f32.mrf.mxu0
    %v5269 = vadd.f32 0.0, %v5268
    %v5270 = vpop.f32.mrf.mxu0
    %v5271 = vadd.f32 0.0, %v5270
    %5272 = vmatmul.bf16.gmra.mxu0 %v5247
    %v5273 = vpop.f32.mrf.mxu0
    %v5274 = vadd.f32 0.0, %v5273
    %v5275 = vpop.f32.mrf.mxu0
    %v5276 = vadd.f32 0.0, %v5275
    %5277 = vdwg.mxu0
    %v5278 = vpack.c.bf16 %v5261, %v5259
    %v5279 = vpack.c.bf16 %v5266, %v5264
    %v5280 = vpack.c.bf16 %v5271, %v5269
    %v5281 = vpack.c.bf16 %v5276, %v5274
    %v5290 = vunpack.c.l.b16 %v5137
    %v5291 = vunpack.c.l.b16 %v5138
    %v5292 = vunpack.c.l.b16 %v5139
    %v5293 = vunpack.c.l.b16 %v5140
    %v5294 = vunpack.c.l.b16 %v5141
    %v5295 = vunpack.c.l.b16 %v5142
    %v5296 = vunpack.c.l.b16 %v5143
    %v5297 = vunpack.c.l.b16 %v5144
    %v5298 = vpack.c.b16 %v5291, %v5290
    %v5299 = vpack.c.b16 %v5293, %v5292
    %v5300 = vpack.c.b16 %v5295, %v5294
    %v5301 = vpack.c.b16 %v5297, %v5296
    %5302 = vrot.lane.b32.xlu0 %v5229, 96
    %v5303 = vpop.permute.xlu0 %5302
    %5304 = vrot.lane.b32.xlu0 %v5230, 96
    %v5305 = vpop.permute.xlu0 %5304
    %5306 = vrot.lane.b32.xlu0 %v5231, 96
    %v5307 = vpop.permute.xlu0 %5306
    %5308 = vrot.lane.b32.xlu0 %v5232, 96
    %v5309 = vpop.permute.xlu0 %5308
    %v5315 = vsel %vm1321, %v5298, 0
    %v5318 = vsel %vm1321, %v5299, 0
    %v5321 = vsel %vm1321, %v5300, 0
    %v5324 = vsel %vm1321, %v5301, 0
    %5326 = vmatpush.bf16.msra.mxu0 0
    %5327 = vmatpush.bf16.msra.mxu0 0
    %5328 = vmatpush.bf16.msra.mxu0 0
    %5329 = vmatpush.bf16.msra.mxu0 0
    %5330 = vmatpush.bf16.msra.mxu0 %v5309
    %5331 = vmatpush.bf16.msra.mxu0 %v5307
    %5332 = vmatpush.bf16.msra.mxu0 %v5305
    %5333 = vmatpush.bf16.msra.mxu0 %v5303
    %5334 = vmatmul.bf16.gmra.mxu0 %v5315
    %v5335 = vpop.f32.mrf.mxu0
    %v5336 = vadd.f32 0.0, %v5335
    %v5337 = vpop.f32.mrf.mxu0
    %v5338 = vadd.f32 0.0, %v5337
    %5339 = vmatmul.bf16.gmra.mxu0 %v5318
    %v5340 = vpop.f32.mrf.mxu0
    %v5341 = vadd.f32 0.0, %v5340
    %v5342 = vpop.f32.mrf.mxu0
    %v5343 = vadd.f32 0.0, %v5342
    %5344 = vmatmul.bf16.gmra.mxu0 %v5321
    %v5345 = vpop.f32.mrf.mxu0
    %v5346 = vadd.f32 0.0, %v5345
    %v5347 = vpop.f32.mrf.mxu0
    %v5348 = vadd.f32 0.0, %v5347
    %5349 = vmatmul.bf16.gmra.mxu0 %v5324
    %v5350 = vpop.f32.mrf.mxu0
    %v5351 = vadd.f32 0.0, %v5350
    %v5352 = vpop.f32.mrf.mxu0
    %v5353 = vadd.f32 0.0, %v5352
    %5354 = vdwg.mxu0
    %v5355 = vpack.c.bf16 %v5338, %v5336
    %v5356 = vpack.c.bf16 %v5343, %v5341
    %v5357 = vpack.c.bf16 %v5348, %v5346
    %v5358 = vpack.c.bf16 %v5353, %v5351
    %v5363 = vunpack.c.l.b16 %v3439
    %v5364 = vunpack.c.l.b16 %v3440
    %v5365 = vunpack.c.l.b16 %v3441
    %v5366 = vunpack.c.l.b16 %v3442
    %v5367 = vpack.c.b16 %v5364, %v5363
    %v5368 = vpack.c.b16 %v5366, %v5365
    %v5372 = vsel %vm760, %v5355, 0
    %v5375 = vsel %vm760, %v5356, 0
    %v5378 = vsel %vm760, %v5357, 0
    %v5381 = vsel %vm760, %v5358, 0
    %5383 = vmatpush.bf16.msra.mxu0 0
    %5384 = vmatpush.bf16.msra.mxu0 0
    %5385 = vmatpush.bf16.msra.mxu0 0
    %5386 = vmatpush.bf16.msra.mxu0 0
    %5387 = vmatpush.bf16.msra.mxu0 0
    %5388 = vmatpush.bf16.msra.mxu0 0
    %5389 = vmatpush.bf16.msra.mxu0 %v5368
    %5390 = vmatpush.bf16.msra.mxu0 %v5367
    %5391 = vmatmul.bf16.gmra.mxu0 %v5372
    %v5392 = vpop.f32.mrf.mxu0
    %v5393 = vadd.f32 0.0, %v5392
    %v5394 = vpop.f32.mrf.mxu0
    %v5395 = vadd.f32 0.0, %v5394
    %5396 = vmatmul.bf16.gmra.mxu0 %v5375
    %v5397 = vpop.f32.mrf.mxu0
    %v5398 = vadd.f32 0.0, %v5397
    %v5399 = vpop.f32.mrf.mxu0
    %v5400 = vadd.f32 0.0, %v5399
    %5401 = vmatmul.bf16.gmra.mxu0 %v5378
    %v5402 = vpop.f32.mrf.mxu0
    %v5403 = vadd.f32 0.0, %v5402
    %v5404 = vpop.f32.mrf.mxu0
    %v5405 = vadd.f32 0.0, %v5404
    %5406 = vmatmul.bf16.gmra.mxu0 %v5381
    %v5407 = vpop.f32.mrf.mxu0
    %v5408 = vadd.f32 0.0, %v5407
    %v5409 = vpop.f32.mrf.mxu0
    %v5410 = vadd.f32 0.0, %v5409
    %5411 = vdwg.mxu0
    %v5416 = vunpack.c.l.b16 %v3435
    %v5417 = vunpack.c.l.b16 %v3436
    %v5418 = vunpack.c.l.b16 %v3437
    %v5419 = vunpack.c.l.b16 %v3438
    %v5420 = vpack.c.b16 %v5417, %v5416
    %v5421 = vpack.c.b16 %v5419, %v5418
    %v5425 = vsel %vm760, %v5278, 0
    %v5428 = vsel %vm760, %v5279, 0
    %v5431 = vsel %vm760, %v5280, 0
    %v5434 = vsel %vm760, %v5281, 0
    %5436 = vmatpush.bf16.msra.mxu0 0
    %5437 = vmatpush.bf16.msra.mxu0 0
    %5438 = vmatpush.bf16.msra.mxu0 0
    %5439 = vmatpush.bf16.msra.mxu0 0
    %5440 = vmatpush.bf16.msra.mxu0 0
    %5441 = vmatpush.bf16.msra.mxu0 0
    %5442 = vmatpush.bf16.msra.mxu0 %v5421
    %5443 = vmatpush.bf16.msra.mxu0 %v5420
    %5444 = vmatmul.bf16.gmra.mxu0 %v5425
    %v5445 = vpop.f32.mrf.mxu0
    %v5446 = vadd.f32 %v5393, %v5445
    %v5447 = vpop.f32.mrf.mxu0
    %v5448 = vadd.f32 %v5395, %v5447
    %5449 = vmatmul.bf16.gmra.mxu0 %v5428
    %v5450 = vpop.f32.mrf.mxu0
    %v5451 = vadd.f32 %v5398, %v5450
    %v5452 = vpop.f32.mrf.mxu0
    %v5453 = vadd.f32 %v5400, %v5452
    %5454 = vmatmul.bf16.gmra.mxu0 %v5431
    %v5455 = vpop.f32.mrf.mxu0
    %v5456 = vadd.f32 %v5403, %v5455
    %v5457 = vpop.f32.mrf.mxu0
    %v5458 = vadd.f32 %v5405, %v5457
    %5459 = vmatmul.bf16.gmra.mxu0 %v5434
    %v5460 = vpop.f32.mrf.mxu0
    %v5461 = vadd.f32 %v5408, %v5460
    %v5462 = vpop.f32.mrf.mxu0
    %v5463 = vadd.f32 %v5410, %v5462
    %5464 = vdwg.mxu0
    %v5473 = vunpack.c.l.b16 %v5145
    %v5474 = vunpack.c.l.b16 %v5146
    %v5475 = vunpack.c.l.b16 %v5147
    %v5476 = vunpack.c.l.b16 %v5148
    %v5477 = vunpack.c.l.b16 %v5149
    %v5478 = vunpack.c.l.b16 %v5150
    %v5479 = vunpack.c.l.b16 %v5151
    %v5480 = vunpack.c.l.b16 %v5152
    %v5481 = vpack.c.b16 %v5474, %v5473
    %v5482 = vpack.c.b16 %v5476, %v5475
    %v5483 = vpack.c.b16 %v5478, %v5477
    %v5484 = vpack.c.b16 %v5480, %v5479
    %5485 = vrot.lane.b32.xlu0 %v5229, 64
    %v5486 = vpop.permute.xlu0 %5485
    %5487 = vrot.lane.b32.xlu0 %v5230, 64
    %v5488 = vpop.permute.xlu0 %5487
    %5489 = vrot.lane.b32.xlu0 %v5231, 64
    %v5490 = vpop.permute.xlu0 %5489
    %5491 = vrot.lane.b32.xlu0 %v5232, 64
    %v5492 = vpop.permute.xlu0 %5491
    %v5498 = vsel %vm1321, %v5481, 0
    %v5501 = vsel %vm1321, %v5482, 0
    %v5504 = vsel %vm1321, %v5483, 0
    %v5507 = vsel %vm1321, %v5484, 0
    %5509 = vmatpush.bf16.msra.mxu0 0
    %5510 = vmatpush.bf16.msra.mxu0 0
    %5511 = vmatpush.bf16.msra.mxu0 0
    %5512 = vmatpush.bf16.msra.mxu0 0
    %5513 = vmatpush.bf16.msra.mxu0 %v5492
    %5514 = vmatpush.bf16.msra.mxu0 %v5490
    %5515 = vmatpush.bf16.msra.mxu0 %v5488
    %5516 = vmatpush.bf16.msra.mxu0 %v5486
    %5517 = vmatmul.bf16.gmra.mxu0 %v5498
    %v5518 = vpop.f32.mrf.mxu0
    %v5519 = vadd.f32 0.0, %v5518
    %v5520 = vpop.f32.mrf.mxu0
    %v5521 = vadd.f32 0.0, %v5520
    %5522 = vmatmul.bf16.gmra.mxu0 %v5501
    %v5523 = vpop.f32.mrf.mxu0
    %v5524 = vadd.f32 0.0, %v5523
    %v5525 = vpop.f32.mrf.mxu0
    %v5526 = vadd.f32 0.0, %v5525
    %5527 = vmatmul.bf16.gmra.mxu0 %v5504
    %v5528 = vpop.f32.mrf.mxu0
    %v5529 = vadd.f32 0.0, %v5528
    %v5530 = vpop.f32.mrf.mxu0
    %v5531 = vadd.f32 0.0, %v5530
    %5532 = vmatmul.bf16.gmra.mxu0 %v5507
    %v5533 = vpop.f32.mrf.mxu0
    %v5534 = vadd.f32 0.0, %v5533
    %v5535 = vpop.f32.mrf.mxu0
    %v5536 = vadd.f32 0.0, %v5535
    %5537 = vdwg.mxu0
    %v5538 = vpack.c.bf16 %v5521, %v5519
    %v5539 = vpack.c.bf16 %v5526, %v5524
    %v5540 = vpack.c.bf16 %v5531, %v5529
    %v5541 = vpack.c.bf16 %v5536, %v5534
    %v5546 = vunpack.c.l.b16 %v3443
    %v5547 = vunpack.c.l.b16 %v3444
    %v5548 = vunpack.c.l.b16 %v3445
    %v5549 = vunpack.c.l.b16 %v3446
    %v5550 = vpack.c.b16 %v5547, %v5546
    %v5551 = vpack.c.b16 %v5549, %v5548
    %v5555 = vsel %vm760, %v5538, 0
    %v5558 = vsel %vm760, %v5539, 0
    %v5561 = vsel %vm760, %v5540, 0
    %v5564 = vsel %vm760, %v5541, 0
    %5566 = vmatpush.bf16.msra.mxu0 0
    %5567 = vmatpush.bf16.msra.mxu0 0
    %5568 = vmatpush.bf16.msra.mxu0 0
    %5569 = vmatpush.bf16.msra.mxu0 0
    %5570 = vmatpush.bf16.msra.mxu0 0
    %5571 = vmatpush.bf16.msra.mxu0 0
    %5572 = vmatpush.bf16.msra.mxu0 %v5551
    %5573 = vmatpush.bf16.msra.mxu0 %v5550
    %5574 = vmatmul.bf16.gmra.mxu0 %v5555
    %v5575 = vpop.f32.mrf.mxu0
    %v5576 = vadd.f32 0.0, %v5575
    %v5577 = vpop.f32.mrf.mxu0
    %v5578 = vadd.f32 0.0, %v5577
    %5579 = vmatmul.bf16.gmra.mxu0 %v5558
    %v5580 = vpop.f32.mrf.mxu0
    %v5581 = vadd.f32 0.0, %v5580
    %v5582 = vpop.f32.mrf.mxu0
    %v5583 = vadd.f32 0.0, %v5582
    %5584 = vmatmul.bf16.gmra.mxu0 %v5561
    %v5585 = vpop.f32.mrf.mxu0
    %v5586 = vadd.f32 0.0, %v5585
    %v5587 = vpop.f32.mrf.mxu0
    %v5588 = vadd.f32 0.0, %v5587
    %5589 = vmatmul.bf16.gmra.mxu0 %v5564
    %v5590 = vpop.f32.mrf.mxu0
    %v5591 = vadd.f32 0.0, %v5590
    %v5592 = vpop.f32.mrf.mxu0
    %v5593 = vadd.f32 0.0, %v5592
    %5594 = vdwg.mxu0
    %v5595 = vadd.f32 %v5446, %v5576
    %v5596 = vadd.f32 %v5448, %v5578
    %v5597 = vadd.f32 %v5451, %v5581
    %v5598 = vadd.f32 %v5453, %v5583
    %v5599 = vadd.f32 %v5456, %v5586
    %v5600 = vadd.f32 %v5458, %v5588
    %v5601 = vadd.f32 %v5461, %v5591
    %v5602 = vadd.f32 %v5463, %v5593
    %v5611 = vunpack.c.l.b16 %v5153
    %v5612 = vunpack.c.l.b16 %v5154
    %v5613 = vunpack.c.l.b16 %v5155
    %v5614 = vunpack.c.l.b16 %v5156
    %v5615 = vunpack.c.l.b16 %v5157
    %v5616 = vunpack.c.l.b16 %v5158
    %v5617 = vunpack.c.l.b16 %v5159
    %v5618 = vunpack.c.l.b16 %v5160
    %v5619 = vpack.c.b16 %v5612, %v5611
    %v5620 = vpack.c.b16 %v5614, %v5613
    %v5621 = vpack.c.b16 %v5616, %v5615
    %v5622 = vpack.c.b16 %v5618, %v5617
    %5623 = vrot.lane.b32.xlu0 %v5229, 32
    %v5624 = vpop.permute.xlu0 %5623
    %5625 = vrot.lane.b32.xlu0 %v5230, 32
    %v5626 = vpop.permute.xlu0 %5625
    %5627 = vrot.lane.b32.xlu0 %v5231, 32
    %v5628 = vpop.permute.xlu0 %5627
    %5629 = vrot.lane.b32.xlu0 %v5232, 32
    %v5630 = vpop.permute.xlu0 %5629
    %v5636 = vsel %vm1321, %v5619, 0
    %v5639 = vsel %vm1321, %v5620, 0
    %v5642 = vsel %vm1321, %v5621, 0
    %v5645 = vsel %vm1321, %v5622, 0
    %5647 = vmatpush.bf16.msra.mxu0 0
    %5648 = vmatpush.bf16.msra.mxu0 0
    %5649 = vmatpush.bf16.msra.mxu0 0
    %5650 = vmatpush.bf16.msra.mxu0 0
    %5651 = vmatpush.bf16.msra.mxu0 %v5630
    %5652 = vmatpush.bf16.msra.mxu0 %v5628
    %5653 = vmatpush.bf16.msra.mxu0 %v5626
    %5654 = vmatpush.bf16.msra.mxu0 %v5624
    %5655 = vmatmul.bf16.gmra.mxu0 %v5636
    %v5656 = vpop.f32.mrf.mxu0
    %v5657 = vadd.f32 0.0, %v5656
    %v5658 = vpop.f32.mrf.mxu0
    %v5659 = vadd.f32 0.0, %v5658
    %5660 = vmatmul.bf16.gmra.mxu0 %v5639
    %v5661 = vpop.f32.mrf.mxu0
    %v5662 = vadd.f32 0.0, %v5661
    %v5663 = vpop.f32.mrf.mxu0
    %v5664 = vadd.f32 0.0, %v5663
    %5665 = vmatmul.bf16.gmra.mxu0 %v5642
    %v5666 = vpop.f32.mrf.mxu0
    %v5667 = vadd.f32 0.0, %v5666
    %v5668 = vpop.f32.mrf.mxu0
    %v5669 = vadd.f32 0.0, %v5668
    %5670 = vmatmul.bf16.gmra.mxu0 %v5645
    %v5671 = vpop.f32.mrf.mxu0
    %v5672 = vadd.f32 0.0, %v5671
    %v5673 = vpop.f32.mrf.mxu0
    %v5674 = vadd.f32 0.0, %v5673
    %5675 = vdwg.mxu0
    %v5676 = vpack.c.bf16 %v5659, %v5657
    %v5677 = vpack.c.bf16 %v5664, %v5662
    %v5678 = vpack.c.bf16 %v5669, %v5667
    %v5679 = vpack.c.bf16 %v5674, %v5672
    %v5684 = vunpack.c.l.b16 %v3447
    %v5685 = vunpack.c.l.b16 %v3448
    %v5686 = vunpack.c.l.b16 %v3449
    %v5687 = vunpack.c.l.b16 %v3450
    %v5688 = vpack.c.b16 %v5685, %v5684
    %v5689 = vpack.c.b16 %v5687, %v5686
    %v5693 = vsel %vm760, %v5676, 0
    %v5696 = vsel %vm760, %v5677, 0
    %v5699 = vsel %vm760, %v5678, 0
    %v5702 = vsel %vm760, %v5679, 0
    %5704 = vmatpush.bf16.msra.mxu0 0
    %5705 = vmatpush.bf16.msra.mxu0 0
    %5706 = vmatpush.bf16.msra.mxu0 0
    %5707 = vmatpush.bf16.msra.mxu0 0
    %5708 = vmatpush.bf16.msra.mxu0 0
    %5709 = vmatpush.bf16.msra.mxu0 0
    %5710 = vmatpush.bf16.msra.mxu0 %v5689
    %5711 = vmatpush.bf16.msra.mxu0 %v5688
    %5712 = vmatmul.bf16.gmra.mxu0 %v5693
    %v5713 = vpop.f32.mrf.mxu0
    %v5714 = vadd.f32 0.0, %v5713
    %v5715 = vpop.f32.mrf.mxu0
    %v5716 = vadd.f32 0.0, %v5715
    %5717 = vmatmul.bf16.gmra.mxu0 %v5696
    %v5718 = vpop.f32.mrf.mxu0
    %v5719 = vadd.f32 0.0, %v5718
    %v5720 = vpop.f32.mrf.mxu0
    %v5721 = vadd.f32 0.0, %v5720
    %5722 = vmatmul.bf16.gmra.mxu0 %v5699
    %v5723 = vpop.f32.mrf.mxu0
    %v5724 = vadd.f32 0.0, %v5723
    %v5725 = vpop.f32.mrf.mxu0
    %v5726 = vadd.f32 0.0, %v5725
    %5727 = vmatmul.bf16.gmra.mxu0 %v5702
    %v5728 = vpop.f32.mrf.mxu0
    %v5729 = vadd.f32 0.0, %v5728
    %v5730 = vpop.f32.mrf.mxu0
    %v5731 = vadd.f32 0.0, %v5730
    %5732 = vdwg.mxu0
    %v5733 = vadd.f32 %v5595, %v5714
    %v5734 = vadd.f32 %v5596, %v5716
    %v5735 = vadd.f32 %v5597, %v5719
    %v5736 = vadd.f32 %v5598, %v5721
    %v5737 = vadd.f32 %v5599, %v5724
    %v5738 = vadd.f32 %v5600, %v5726
    %v5739 = vadd.f32 %v5601, %v5729
    %v5740 = vadd.f32 %v5602, %v5731
    %v5749 = vunpack.c.l.b16 %v5161
    %v5750 = vunpack.c.l.b16 %v5162
    %v5751 = vunpack.c.l.b16 %v5163
    %v5752 = vunpack.c.l.b16 %v5164
    %v5753 = vunpack.c.l.b16 %v5165
    %v5754 = vunpack.c.l.b16 %v5166
    %v5755 = vunpack.c.l.b16 %v5167
    %v5756 = vunpack.c.l.b16 %v5168
    %v5757 = vpack.c.b16 %v5750, %v5749
    %v5758 = vpack.c.b16 %v5752, %v5751
    %v5759 = vpack.c.b16 %v5754, %v5753
    %v5760 = vpack.c.b16 %v5756, %v5755
    %v5769 = vunpack.c.l.b16 %v3817
    %v5770 = vunpack.c.l.b16 %v3818
    %v5771 = vunpack.c.l.b16 %v3819
    %v5772 = vunpack.c.l.b16 %v3820
    %v5773 = vunpack.c.l.b16 %v3821
    %v5774 = vunpack.c.l.b16 %v3822
    %v5775 = vunpack.c.l.b16 %v3823
    %v5776 = vunpack.c.l.b16 %v3824
    %v5777 = vpack.c.b16 %v5770, %v5769
    %v5778 = vpack.c.b16 %v5772, %v5771
    %v5779 = vpack.c.b16 %v5774, %v5773
    %v5780 = vpack.c.b16 %v5776, %v5775
    %v5786 = vsel %vm1321, %v5757, 0
    %v5789 = vsel %vm1321, %v5758, 0
    %v5792 = vsel %vm1321, %v5759, 0
    %v5795 = vsel %vm1321, %v5760, 0
    %5797 = vmatpush.bf16.msra.mxu0 0
    %5798 = vmatpush.bf16.msra.mxu0 0
    %5799 = vmatpush.bf16.msra.mxu0 0
    %5800 = vmatpush.bf16.msra.mxu0 0
    %5801 = vmatpush.bf16.msra.mxu0 %v5780
    %5802 = vmatpush.bf16.msra.mxu0 %v5779
    %5803 = vmatpush.bf16.msra.mxu0 %v5778
    %5804 = vmatpush.bf16.msra.mxu0 %v5777
    %5805 = vmatmul.bf16.gmra.mxu0 %v5786
    %v5806 = vpop.f32.mrf.mxu0
    %v5807 = vadd.f32 0.0, %v5806
    %v5808 = vpop.f32.mrf.mxu0
    %v5809 = vadd.f32 0.0, %v5808
    %5810 = vmatmul.bf16.gmra.mxu0 %v5789
    %v5811 = vpop.f32.mrf.mxu0
    %v5812 = vadd.f32 0.0, %v5811
    %v5813 = vpop.f32.mrf.mxu0
    %v5814 = vadd.f32 0.0, %v5813
    %5815 = vmatmul.bf16.gmra.mxu0 %v5792
    %v5816 = vpop.f32.mrf.mxu0
    %v5817 = vadd.f32 0.0, %v5816
    %v5818 = vpop.f32.mrf.mxu0
    %v5819 = vadd.f32 0.0, %v5818
    %5820 = vmatmul.bf16.gmra.mxu0 %v5795
    %v5821 = vpop.f32.mrf.mxu0
    %v5822 = vadd.f32 0.0, %v5821
    %v5823 = vpop.f32.mrf.mxu0
    %v5824 = vadd.f32 0.0, %v5823
    %5825 = vdwg.mxu0
    %v5826 = vpack.c.bf16 %v5809, %v5807
    %v5827 = vpack.c.bf16 %v5814, %v5812
    %v5828 = vpack.c.bf16 %v5819, %v5817
    %v5829 = vpack.c.bf16 %v5824, %v5822
    %v5838 = vunpack.c.l.b16 %v5169
    %v5839 = vunpack.c.l.b16 %v5170
    %v5840 = vunpack.c.l.b16 %v5171
    %v5841 = vunpack.c.l.b16 %v5172
    %v5842 = vunpack.c.l.b16 %v5173
    %v5843 = vunpack.c.l.b16 %v5174
    %v5844 = vunpack.c.l.b16 %v5175
    %v5845 = vunpack.c.l.b16 %v5176
    %v5846 = vpack.c.b16 %v5839, %v5838
    %v5847 = vpack.c.b16 %v5841, %v5840
    %v5848 = vpack.c.b16 %v5843, %v5842
    %v5849 = vpack.c.b16 %v5845, %v5844
    %5850 = vrot.lane.b32.xlu0 %v5777, 96
    %v5851 = vpop.permute.xlu0 %5850
    %5852 = vrot.lane.b32.xlu0 %v5778, 96
    %v5853 = vpop.permute.xlu0 %5852
    %5854 = vrot.lane.b32.xlu0 %v5779, 96
    %v5855 = vpop.permute.xlu0 %5854
    %5856 = vrot.lane.b32.xlu0 %v5780, 96
    %v5857 = vpop.permute.xlu0 %5856
    %v5863 = vsel %vm1321, %v5846, 0
    %v5866 = vsel %vm1321, %v5847, 0
    %v5869 = vsel %vm1321, %v5848, 0
    %v5872 = vsel %vm1321, %v5849, 0
    %5874 = vmatpush.bf16.msra.mxu0 0
    %5875 = vmatpush.bf16.msra.mxu0 0
    %5876 = vmatpush.bf16.msra.mxu0 0
    %5877 = vmatpush.bf16.msra.mxu0 0
    %5878 = vmatpush.bf16.msra.mxu0 %v5857
    %5879 = vmatpush.bf16.msra.mxu0 %v5855
    %5880 = vmatpush.bf16.msra.mxu0 %v5853
    %5881 = vmatpush.bf16.msra.mxu0 %v5851
    %5882 = vmatmul.bf16.gmra.mxu0 %v5863
    %v5883 = vpop.f32.mrf.mxu0
    %v5884 = vadd.f32 0.0, %v5883
    %v5885 = vpop.f32.mrf.mxu0
    %v5886 = vadd.f32 0.0, %v5885
    %5887 = vmatmul.bf16.gmra.mxu0 %v5866
    %v5888 = vpop.f32.mrf.mxu0
    %v5889 = vadd.f32 0.0, %v5888
    %v5890 = vpop.f32.mrf.mxu0
    %v5891 = vadd.f32 0.0, %v5890
    %5892 = vmatmul.bf16.gmra.mxu0 %v5869
    %v5893 = vpop.f32.mrf.mxu0
    %v5894 = vadd.f32 0.0, %v5893
    %v5895 = vpop.f32.mrf.mxu0
    %v5896 = vadd.f32 0.0, %v5895
    %5897 = vmatmul.bf16.gmra.mxu0 %v5872
    %v5898 = vpop.f32.mrf.mxu0
    %v5899 = vadd.f32 0.0, %v5898
    %v5900 = vpop.f32.mrf.mxu0
    %v5901 = vadd.f32 0.0, %v5900
    %5902 = vdwg.mxu0
    %v5903 = vpack.c.bf16 %v5886, %v5884
    %v5904 = vpack.c.bf16 %v5891, %v5889
    %v5905 = vpack.c.bf16 %v5896, %v5894
    %v5906 = vpack.c.bf16 %v5901, %v5899
    %v5908 = vsel %vm760, %v5903, 0
    %v5911 = vsel %vm760, %v5904, 0
    %v5914 = vsel %vm760, %v5905, 0
    %v5917 = vsel %vm760, %v5906, 0
    %5919 = vmatpush.bf16.msra.mxu0 0
    %5920 = vmatpush.bf16.msra.mxu0 0
    %5921 = vmatpush.bf16.msra.mxu0 0
    %5922 = vmatpush.bf16.msra.mxu0 0
    %5923 = vmatpush.bf16.msra.mxu0 0
    %5924 = vmatpush.bf16.msra.mxu0 0
    %5925 = vmatpush.bf16.msra.mxu0 %v5368
    %5926 = vmatpush.bf16.msra.mxu0 %v5367
    %5927 = vmatmul.bf16.gmra.mxu0 %v5908
    %v5928 = vpop.f32.mrf.mxu0
    %v5929 = vadd.f32 0.0, %v5928
    %v5930 = vpop.f32.mrf.mxu0
    %v5931 = vadd.f32 0.0, %v5930
    %5932 = vmatmul.bf16.gmra.mxu0 %v5911
    %v5933 = vpop.f32.mrf.mxu0
    %v5934 = vadd.f32 0.0, %v5933
    %v5935 = vpop.f32.mrf.mxu0
    %v5936 = vadd.f32 0.0, %v5935
    %5937 = vmatmul.bf16.gmra.mxu0 %v5914
    %v5938 = vpop.f32.mrf.mxu0
    %v5939 = vadd.f32 0.0, %v5938
    %v5940 = vpop.f32.mrf.mxu0
    %v5941 = vadd.f32 0.0, %v5940
    %5942 = vmatmul.bf16.gmra.mxu0 %v5917
    %v5943 = vpop.f32.mrf.mxu0
    %v5944 = vadd.f32 0.0, %v5943
    %v5945 = vpop.f32.mrf.mxu0
    %v5946 = vadd.f32 0.0, %v5945
    %5947 = vdwg.mxu0
    %v5949 = vsel %vm760, %v5826, 0
    %v5952 = vsel %vm760, %v5827, 0
    %v5955 = vsel %vm760, %v5828, 0
    %v5958 = vsel %vm760, %v5829, 0
    %5960 = vmatpush.bf16.msra.mxu0 0
    %5961 = vmatpush.bf16.msra.mxu0 0
    %5962 = vmatpush.bf16.msra.mxu0 0
    %5963 = vmatpush.bf16.msra.mxu0 0
    %5964 = vmatpush.bf16.msra.mxu0 0
    %5965 = vmatpush.bf16.msra.mxu0 0
    %5966 = vmatpush.bf16.msra.mxu0 %v5421
    %5967 = vmatpush.bf16.msra.mxu0 %v5420
    %5968 = vmatmul.bf16.gmra.mxu0 %v5949
    %v5969 = vpop.f32.mrf.mxu0
    %v5970 = vadd.f32 %v5929, %v5969
    %v5971 = vpop.f32.mrf.mxu0
    %v5972 = vadd.f32 %v5931, %v5971
    %5973 = vmatmul.bf16.gmra.mxu0 %v5952
    %v5974 = vpop.f32.mrf.mxu0
    %v5975 = vadd.f32 %v5934, %v5974
    %v5976 = vpop.f32.mrf.mxu0
    %v5977 = vadd.f32 %v5936, %v5976
    %5978 = vmatmul.bf16.gmra.mxu0 %v5955
    %v5979 = vpop.f32.mrf.mxu0
    %v5980 = vadd.f32 %v5939, %v5979
    %v5981 = vpop.f32.mrf.mxu0
    %v5982 = vadd.f32 %v5941, %v5981
    %5983 = vmatmul.bf16.gmra.mxu0 %v5958
    %v5984 = vpop.f32.mrf.mxu0
    %v5985 = vadd.f32 %v5944, %v5984
    %v5986 = vpop.f32.mrf.mxu0
    %v5987 = vadd.f32 %v5946, %v5986
    %5988 = vdwg.mxu0
    %v5997 = vunpack.c.l.b16 %v5177
    %v5998 = vunpack.c.l.b16 %v5178
    %v5999 = vunpack.c.l.b16 %v5179
    %v6000 = vunpack.c.l.b16 %v5180
    %v6001 = vunpack.c.l.b16 %v5181
    %v6002 = vunpack.c.l.b16 %v5182
    %v6003 = vunpack.c.l.b16 %v5183
    %v6004 = vunpack.c.l.b16 %v5184
    %v6005 = vpack.c.b16 %v5998, %v5997
    %v6006 = vpack.c.b16 %v6000, %v5999
    %v6007 = vpack.c.b16 %v6002, %v6001
    %v6008 = vpack.c.b16 %v6004, %v6003
    %6009 = vrot.lane.b32.xlu0 %v5777, 64
    %v6010 = vpop.permute.xlu0 %6009
    %6011 = vrot.lane.b32.xlu0 %v5778, 64
    %v6012 = vpop.permute.xlu0 %6011
    %6013 = vrot.lane.b32.xlu0 %v5779, 64
    %v6014 = vpop.permute.xlu0 %6013
    %6015 = vrot.lane.b32.xlu0 %v5780, 64
    %v6016 = vpop.permute.xlu0 %6015
    %v6022 = vsel %vm1321, %v6005, 0
    %v6025 = vsel %vm1321, %v6006, 0
    %v6028 = vsel %vm1321, %v6007, 0
    %v6031 = vsel %vm1321, %v6008, 0
    %6033 = vmatpush.bf16.msra.mxu0 0
    %6034 = vmatpush.bf16.msra.mxu0 0
    %6035 = vmatpush.bf16.msra.mxu0 0
    %6036 = vmatpush.bf16.msra.mxu0 0
    %6037 = vmatpush.bf16.msra.mxu0 %v6016
    %6038 = vmatpush.bf16.msra.mxu0 %v6014
    %6039 = vmatpush.bf16.msra.mxu0 %v6012
    %6040 = vmatpush.bf16.msra.mxu0 %v6010
    %6041 = vmatmul.bf16.gmra.mxu0 %v6022
    %v6042 = vpop.f32.mrf.mxu0
    %v6043 = vadd.f32 0.0, %v6042
    %v6044 = vpop.f32.mrf.mxu0
    %v6045 = vadd.f32 0.0, %v6044
    %6046 = vmatmul.bf16.gmra.mxu0 %v6025
    %v6047 = vpop.f32.mrf.mxu0
    %v6048 = vadd.f32 0.0, %v6047
    %v6049 = vpop.f32.mrf.mxu0
    %v6050 = vadd.f32 0.0, %v6049
    %6051 = vmatmul.bf16.gmra.mxu0 %v6028
    %v6052 = vpop.f32.mrf.mxu0
    %v6053 = vadd.f32 0.0, %v6052
    %v6054 = vpop.f32.mrf.mxu0
    %v6055 = vadd.f32 0.0, %v6054
    %6056 = vmatmul.bf16.gmra.mxu0 %v6031
    %v6057 = vpop.f32.mrf.mxu0
    %v6058 = vadd.f32 0.0, %v6057
    %v6059 = vpop.f32.mrf.mxu0
    %v6060 = vadd.f32 0.0, %v6059
    %6061 = vdwg.mxu0
    %v6062 = vpack.c.bf16 %v6045, %v6043
    %v6063 = vpack.c.bf16 %v6050, %v6048
    %v6064 = vpack.c.bf16 %v6055, %v6053
    %v6065 = vpack.c.bf16 %v6060, %v6058
    %v6067 = vsel %vm760, %v6062, 0
    %v6070 = vsel %vm760, %v6063, 0
    %v6073 = vsel %vm760, %v6064, 0
    %v6076 = vsel %vm760, %v6065, 0
    %6078 = vmatpush.bf16.msra.mxu0 0
    %6079 = vmatpush.bf16.msra.mxu0 0
    %6080 = vmatpush.bf16.msra.mxu0 0
    %6081 = vmatpush.bf16.msra.mxu0 0
    %6082 = vmatpush.bf16.msra.mxu0 0
    %6083 = vmatpush.bf16.msra.mxu0 0
    %6084 = vmatpush.bf16.msra.mxu0 %v5551
    %6085 = vmatpush.bf16.msra.mxu0 %v5550
    %6086 = vmatmul.bf16.gmra.mxu0 %v6067
    %v6087 = vpop.f32.mrf.mxu0
    %v6088 = vadd.f32 0.0, %v6087
    %v6089 = vpop.f32.mrf.mxu0
    %v6090 = vadd.f32 0.0, %v6089
    %6091 = vmatmul.bf16.gmra.mxu0 %v6070
    %v6092 = vpop.f32.mrf.mxu0
    %v6093 = vadd.f32 0.0, %v6092
    %v6094 = vpop.f32.mrf.mxu0
    %v6095 = vadd.f32 0.0, %v6094
    %6096 = vmatmul.bf16.gmra.mxu0 %v6073
    %v6097 = vpop.f32.mrf.mxu0
    %v6098 = vadd.f32 0.0, %v6097
    %v6099 = vpop.f32.mrf.mxu0
    %v6100 = vadd.f32 0.0, %v6099
    %6101 = vmatmul.bf16.gmra.mxu0 %v6076
    %v6102 = vpop.f32.mrf.mxu0
    %v6103 = vadd.f32 0.0, %v6102
    %v6104 = vpop.f32.mrf.mxu0
    %v6105 = vadd.f32 0.0, %v6104
    %6106 = vdwg.mxu0
    %v6107 = vadd.f32 %v5970, %v6088
    %v6108 = vadd.f32 %v5972, %v6090
    %v6109 = vadd.f32 %v5975, %v6093
    %v6110 = vadd.f32 %v5977, %v6095
    %v6111 = vadd.f32 %v5980, %v6098
    %v6112 = vadd.f32 %v5982, %v6100
    %v6113 = vadd.f32 %v5985, %v6103
    %v6114 = vadd.f32 %v5987, %v6105
    %v6123 = vunpack.c.l.b16 %v5185
    %v6124 = vunpack.c.l.b16 %v5186
    %v6125 = vunpack.c.l.b16 %v5187
    %v6126 = vunpack.c.l.b16 %v5188
    %v6127 = vunpack.c.l.b16 %v5189
    %v6128 = vunpack.c.l.b16 %v5190
    %v6129 = vunpack.c.l.b16 %v5191
    %v6130 = vunpack.c.l.b16 %v5192
    %v6131 = vpack.c.b16 %v6124, %v6123
    %v6132 = vpack.c.b16 %v6126, %v6125
    %v6133 = vpack.c.b16 %v6128, %v6127
    %v6134 = vpack.c.b16 %v6130, %v6129
    %6135 = vrot.lane.b32.xlu0 %v5777, 32
    %v6136 = vpop.permute.xlu0 %6135
    %6137 = vrot.lane.b32.xlu0 %v5778, 32
    %v6138 = vpop.permute.xlu0 %6137
    %6139 = vrot.lane.b32.xlu0 %v5779, 32
    %v6140 = vpop.permute.xlu0 %6139
    %6141 = vrot.lane.b32.xlu0 %v5780, 32
    %v6142 = vpop.permute.xlu0 %6141
    %v6148 = vsel %vm1321, %v6131, 0
    %v6151 = vsel %vm1321, %v6132, 0
    %v6154 = vsel %vm1321, %v6133, 0
    %v6157 = vsel %vm1321, %v6134, 0
    %6159 = vmatpush.bf16.msra.mxu0 0
    %6160 = vmatpush.bf16.msra.mxu0 0
    %6161 = vmatpush.bf16.msra.mxu0 0
    %6162 = vmatpush.bf16.msra.mxu0 0
    %6163 = vmatpush.bf16.msra.mxu0 %v6142
    %6164 = vmatpush.bf16.msra.mxu0 %v6140
    %6165 = vmatpush.bf16.msra.mxu0 %v6138
    %6166 = vmatpush.bf16.msra.mxu0 %v6136
    %6167 = vmatmul.bf16.gmra.mxu0 %v6148
    %v6168 = vpop.f32.mrf.mxu0
    %v6169 = vadd.f32 0.0, %v6168
    %v6170 = vpop.f32.mrf.mxu0
    %v6171 = vadd.f32 0.0, %v6170
    %6172 = vmatmul.bf16.gmra.mxu0 %v6151
    %v6173 = vpop.f32.mrf.mxu0
    %v6174 = vadd.f32 0.0, %v6173
    %v6175 = vpop.f32.mrf.mxu0
    %v6176 = vadd.f32 0.0, %v6175
    %6177 = vmatmul.bf16.gmra.mxu0 %v6154
    %v6178 = vpop.f32.mrf.mxu0
    %v6179 = vadd.f32 0.0, %v6178
    %v6180 = vpop.f32.mrf.mxu0
    %v6181 = vadd.f32 0.0, %v6180
    %6182 = vmatmul.bf16.gmra.mxu0 %v6157
    %v6183 = vpop.f32.mrf.mxu0
    %v6184 = vadd.f32 0.0, %v6183
    %v6185 = vpop.f32.mrf.mxu0
    %v6186 = vadd.f32 0.0, %v6185
    %6187 = vdwg.mxu0
    %v6188 = vpack.c.bf16 %v6171, %v6169
    %v6189 = vpack.c.bf16 %v6176, %v6174
    %v6190 = vpack.c.bf16 %v6181, %v6179
    %v6191 = vpack.c.bf16 %v6186, %v6184
    %v6193 = vsel %vm760, %v6188, 0
    %v6196 = vsel %vm760, %v6189, 0
    %v6199 = vsel %vm760, %v6190, 0
    %v6202 = vsel %vm760, %v6191, 0
    %6204 = vmatpush.bf16.msra.mxu0 0
    %6205 = vmatpush.bf16.msra.mxu0 0
    %6206 = vmatpush.bf16.msra.mxu0 0
    %6207 = vmatpush.bf16.msra.mxu0 0
    %6208 = vmatpush.bf16.msra.mxu0 0
    %6209 = vmatpush.bf16.msra.mxu0 0
    %6210 = vmatpush.bf16.msra.mxu0 %v5689
    %6211 = vmatpush.bf16.msra.mxu0 %v5688
    %6212 = vmatmul.bf16.gmra.mxu0 %v6193
    %v6213 = vpop.f32.mrf.mxu0
    %v6214 = vadd.f32 0.0, %v6213
    %v6215 = vpop.f32.mrf.mxu0
    %v6216 = vadd.f32 0.0, %v6215
    %6217 = vmatmul.bf16.gmra.mxu0 %v6196
    %v6218 = vpop.f32.mrf.mxu0
    %v6219 = vadd.f32 0.0, %v6218
    %v6220 = vpop.f32.mrf.mxu0
    %v6221 = vadd.f32 0.0, %v6220
    %6222 = vmatmul.bf16.gmra.mxu0 %v6199
    %v6223 = vpop.f32.mrf.mxu0
    %v6224 = vadd.f32 0.0, %v6223
    %v6225 = vpop.f32.mrf.mxu0
    %v6226 = vadd.f32 0.0, %v6225
    %6227 = vmatmul.bf16.gmra.mxu0 %v6202
    %v6228 = vpop.f32.mrf.mxu0
    %v6229 = vadd.f32 0.0, %v6228
    %v6230 = vpop.f32.mrf.mxu0
    %v6231 = vadd.f32 0.0, %v6230
    %6232 = vdwg.mxu0
    %v6233 = vadd.f32 %v6107, %v6214
    %v6234 = vadd.f32 %v6108, %v6216
    %v6235 = vadd.f32 %v6109, %v6219
    %v6236 = vadd.f32 %v6110, %v6221
    %v6237 = vadd.f32 %v6111, %v6224
    %v6238 = vadd.f32 %v6112, %v6226
    %v6239 = vadd.f32 %v6113, %v6229
    %v6240 = vadd.f32 %v6114, %v6231
    %v6242 = vperm.slane %v3452, 0
    %v6244 = vadd.f32 %v5733, %v6242
    %v6245 = vadd.f32 %v5734, %v6242
    %v6246 = vadd.f32 %v5735, %v6242
    %v6247 = vadd.f32 %v5736, %v6242
    %v6248 = vadd.f32 %v5737, %v6242
    %v6249 = vadd.f32 %v5738, %v6242
    %v6250 = vadd.f32 %v5739, %v6242
    %v6251 = vadd.f32 %v5740, %v6242
    %v6252 = vadd.f32 %v6233, %v6242
    %v6253 = vadd.f32 %v6234, %v6242
    %v6254 = vadd.f32 %v6235, %v6242
    %v6255 = vadd.f32 %v6236, %v6242
    %v6256 = vadd.f32 %v6237, %v6242
    %v6257 = vadd.f32 %v6238, %v6242
    %v6258 = vadd.f32 %v6239, %v6242
    %v6259 = vadd.f32 %v6240, %v6242
    %v6260 = vadd.f32 %v3383, %v6244
    %v6261 = vadd.f32 %v3384, %v6245
    %v6262 = vadd.f32 %v3385, %v6246
    %v6263 = vadd.f32 %v3386, %v6247
    %v6264 = vadd.f32 %v3387, %v6248
    %v6265 = vadd.f32 %v3388, %v6249
    %v6266 = vadd.f32 %v3389, %v6250
    %v6267 = vadd.f32 %v3390, %v6251
    %v6268 = vadd.f32 %v3391, %v6252
    %v6269 = vadd.f32 %v3392, %v6253
    %v6270 = vadd.f32 %v3393, %v6254
    %v6271 = vadd.f32 %v3394, %v6255
    %v6272 = vadd.f32 %v3395, %v6256
    %v6273 = vadd.f32 %v3396, %v6257
    %v6274 = vadd.f32 %v3397, %v6258
    %v6275 = vadd.f32 %v3398, %v6259
    %v6276 = vpack.c.bf16 %v6261, %v6260
    %v6277 = vpack.c.bf16 %v6263, %v6262
    %v6278 = vpack.c.bf16 %v6265, %v6264
    %v6279 = vpack.c.bf16 %v6267, %v6266
    %v6280 = vpack.c.bf16 %v6269, %v6268
    %v6281 = vpack.c.bf16 %v6271, %v6270
    %v6282 = vpack.c.bf16 %v6273, %v6272
    %v6283 = vpack.c.bf16 %v6275, %v6274
    %v6300 = vunpack.c.l.b16 %v3454
    %v6301 = vunpack.c.l.b16 %v3455
    %v6302 = vunpack.c.l.b16 %v3456
    %v6303 = vunpack.c.l.b16 %v3457
    %v6304 = vunpack.c.l.b16 %v3458
    %v6305 = vunpack.c.l.b16 %v3459
    %v6306 = vunpack.c.l.b16 %v3460
    %v6307 = vunpack.c.l.b16 %v3461
    %v6308 = vunpack.c.l.b16 %v3462
    %v6309 = vunpack.c.l.b16 %v3463
    %v6310 = vunpack.c.l.b16 %v3464
    %v6311 = vunpack.c.l.b16 %v3465
    %v6312 = vunpack.c.l.b16 %v3466
    %v6313 = vunpack.c.l.b16 %v3467
    %v6314 = vunpack.c.l.b16 %v3468
    %v6315 = vunpack.c.l.b16 %v3469
    %v6316 = vpack.c.b16 %v6301, %v6300
    %v6317 = vpack.c.b16 %v6303, %v6302
    %v6318 = vpack.c.b16 %v6305, %v6304
    %v6319 = vpack.c.b16 %v6307, %v6306
    %v6320 = vpack.c.b16 %v6309, %v6308
    %v6321 = vpack.c.b16 %v6311, %v6310
    %v6322 = vpack.c.b16 %v6313, %v6312
    %v6323 = vpack.c.b16 %v6315, %v6314
    %6332 = vmatpush.bf16.msra.mxu0 %v6323
    %6333 = vmatpush.bf16.msra.mxu0 %v6322
    %6334 = vmatpush.bf16.msra.mxu0 %v6321
    %6335 = vmatpush.bf16.msra.mxu0 %v6320
    %6336 = vmatpush.bf16.msra.mxu0 %v6319
    %6337 = vmatpush.bf16.msra.mxu0 %v6318
    %6338 = vmatpush.bf16.msra.mxu0 %v6317
    %6339 = vmatpush.bf16.msra.mxu0 %v6316
    %6340 = vmatmul.bf16.gmra.mxu0 %v6276
    %v6341 = vpop.f32.mrf.mxu0
    %v6342 = vadd.f32 0.0, %v6341
    %v6343 = vpop.f32.mrf.mxu0
    %v6344 = vadd.f32 0.0, %v6343
    %6345 = vmatmul.bf16.gmra.mxu0 %v6277
    %v6346 = vpop.f32.mrf.mxu0
    %v6347 = vadd.f32 0.0, %v6346
    %v6348 = vpop.f32.mrf.mxu0
    %v6349 = vadd.f32 0.0, %v6348
    %6350 = vmatmul.bf16.gmra.mxu0 %v6278
    %v6351 = vpop.f32.mrf.mxu0
    %v6352 = vadd.f32 0.0, %v6351
    %v6353 = vpop.f32.mrf.mxu0
    %v6354 = vadd.f32 0.0, %v6353
    %6355 = vmatmul.bf16.gmra.mxu0 %v6279
    %v6356 = vpop.f32.mrf.mxu0
    %v6357 = vadd.f32 0.0, %v6356
    %v6358 = vpop.f32.mrf.mxu0
    %v6359 = vadd.f32 0.0, %v6358
    %6360 = vmatmul.bf16.gmra.mxu0 %v6280
    %v6361 = vpop.f32.mrf.mxu0
    %v6362 = vadd.f32 0.0, %v6361
    %v6363 = vpop.f32.mrf.mxu0
    %v6364 = vadd.f32 0.0, %v6363
    %6365 = vmatmul.bf16.gmra.mxu0 %v6281
    %v6366 = vpop.f32.mrf.mxu0
    %v6367 = vadd.f32 0.0, %v6366
    %v6368 = vpop.f32.mrf.mxu0
    %v6369 = vadd.f32 0.0, %v6368
    %6370 = vmatmul.bf16.gmra.mxu0 %v6282
    %v6371 = vpop.f32.mrf.mxu0
    %v6372 = vadd.f32 0.0, %v6371
    %v6373 = vpop.f32.mrf.mxu0
    %v6374 = vadd.f32 0.0, %v6373
    %6375 = vmatmul.bf16.gmra.mxu0 %v6283
    %v6376 = vpop.f32.mrf.mxu0
    %v6377 = vadd.f32 0.0, %v6376
    %v6378 = vpop.f32.mrf.mxu0
    %v6379 = vadd.f32 0.0, %v6378
    %6380 = vdwg.mxu0
    %v6381 = vpack.c.bf16 %v6344, %v6342
    %v6382 = vpack.c.bf16 %v6349, %v6347
    %v6383 = vpack.c.bf16 %v6354, %v6352
    %v6384 = vpack.c.bf16 %v6359, %v6357
    %v6385 = vpack.c.bf16 %v6364, %v6362
    %v6386 = vpack.c.bf16 %v6369, %v6367
    %v6387 = vpack.c.bf16 %v6374, %v6372
    %v6388 = vpack.c.bf16 %v6379, %v6377
    %v6405 = vunpack.c.l.b16 %v3471
    %v6406 = vunpack.c.l.b16 %v3472
    %v6407 = vunpack.c.l.b16 %v3473
    %v6408 = vunpack.c.l.b16 %v3474
    %v6409 = vunpack.c.l.b16 %v3475
    %v6410 = vunpack.c.l.b16 %v3476
    %v6411 = vunpack.c.l.b16 %v3477
    %v6412 = vunpack.c.l.b16 %v3478
    %v6413 = vunpack.c.l.b16 %v3479
    %v6414 = vunpack.c.l.b16 %v3480
    %v6415 = vunpack.c.l.b16 %v3481
    %v6416 = vunpack.c.l.b16 %v3482
    %v6417 = vunpack.c.l.b16 %v3483
    %v6418 = vunpack.c.l.b16 %v3484
    %v6419 = vunpack.c.l.b16 %v3485
    %v6420 = vunpack.c.l.b16 %v3486
    %v6421 = vpack.c.b16 %v6406, %v6405
    %v6422 = vpack.c.b16 %v6408, %v6407
    %v6423 = vpack.c.b16 %v6410, %v6409
    %v6424 = vpack.c.b16 %v6412, %v6411
    %v6425 = vpack.c.b16 %v6414, %v6413
    %v6426 = vpack.c.b16 %v6416, %v6415
    %v6427 = vpack.c.b16 %v6418, %v6417
    %v6428 = vpack.c.b16 %v6420, %v6419
    %6437 = vmatpush.bf16.msra.mxu0 %v6428
    %6438 = vmatpush.bf16.msra.mxu0 %v6427
    %6439 = vmatpush.bf16.msra.mxu0 %v6426
    %6440 = vmatpush.bf16.msra.mxu0 %v6425
    %6441 = vmatpush.bf16.msra.mxu0 %v6424
    %6442 = vmatpush.bf16.msra.mxu0 %v6423
    %6443 = vmatpush.bf16.msra.mxu0 %v6422
    %6444 = vmatpush.bf16.msra.mxu0 %v6421
    %6445 = vmatmul.bf16.gmra.mxu0 %v6381
    %v6446 = vpop.f32.mrf.mxu0
    %v6447 = vadd.f32 0.0, %v6446
    %v6448 = vpop.f32.mrf.mxu0
    %v6449 = vadd.f32 0.0, %v6448
    %6450 = vmatmul.bf16.gmra.mxu0 %v6382
    %v6451 = vpop.f32.mrf.mxu0
    %v6452 = vadd.f32 0.0, %v6451
    %v6453 = vpop.f32.mrf.mxu0
    %v6454 = vadd.f32 0.0, %v6453
    %6455 = vmatmul.bf16.gmra.mxu0 %v6383
    %v6456 = vpop.f32.mrf.mxu0
    %v6457 = vadd.f32 0.0, %v6456
    %v6458 = vpop.f32.mrf.mxu0
    %v6459 = vadd.f32 0.0, %v6458
    %6460 = vmatmul.bf16.gmra.mxu0 %v6384
    %v6461 = vpop.f32.mrf.mxu0
    %v6462 = vadd.f32 0.0, %v6461
    %v6463 = vpop.f32.mrf.mxu0
    %v6464 = vadd.f32 0.0, %v6463
    %6465 = vmatmul.bf16.gmra.mxu0 %v6385
    %v6466 = vpop.f32.mrf.mxu0
    %v6467 = vadd.f32 0.0, %v6466
    %v6468 = vpop.f32.mrf.mxu0
    %v6469 = vadd.f32 0.0, %v6468
    %6470 = vmatmul.bf16.gmra.mxu0 %v6386
    %v6471 = vpop.f32.mrf.mxu0
    %v6472 = vadd.f32 0.0, %v6471
    %v6473 = vpop.f32.mrf.mxu0
    %v6474 = vadd.f32 0.0, %v6473
    %6475 = vmatmul.bf16.gmra.mxu0 %v6387
    %v6476 = vpop.f32.mrf.mxu0
    %v6477 = vadd.f32 0.0, %v6476
    %v6478 = vpop.f32.mrf.mxu0
    %v6479 = vadd.f32 0.0, %v6478
    %6480 = vmatmul.bf16.gmra.mxu0 %v6388
    %v6481 = vpop.f32.mrf.mxu0
    %v6482 = vadd.f32 0.0, %v6481
    %v6483 = vpop.f32.mrf.mxu0
    %v6484 = vadd.f32 0.0, %v6483
    %6485 = vdwg.mxu0
    %v6486 = vadd.f32 %v6260, %v6447
    %v6487 = vadd.f32 %v6261, %v6449
    %v6488 = vadd.f32 %v6262, %v6452
    %v6489 = vadd.f32 %v6263, %v6454
    %v6490 = vadd.f32 %v6264, %v6457
    %v6491 = vadd.f32 %v6265, %v6459
    %v6492 = vadd.f32 %v6266, %v6462
    %v6493 = vadd.f32 %v6267, %v6464
    %v6494 = vadd.f32 %v6268, %v6467
    %v6495 = vadd.f32 %v6269, %v6469
    %v6496 = vadd.f32 %v6270, %v6472
    %v6497 = vadd.f32 %v6271, %v6474
    %v6498 = vadd.f32 %v6272, %v6477
    %v6499 = vadd.f32 %v6273, %v6479
    %v6500 = vadd.f32 %v6274, %v6482
    %v6501 = vadd.f32 %v6275, %v6484
    %6502 = vst [vmem:[#allocation14] sm:$0xff] %v6486
    %6503 = vst [vmem:[#allocation14 + $0x8] sm:$0xff] %v6487
    %6504 = vst [vmem:[#allocation14 + $0x10] sm:$0xff] %v6488
    %6505 = vst [vmem:[#allocation14 + $0x18] sm:$0xff] %v6489
    %6506 = vst [vmem:[#allocation14 + $0x20] sm:$0xff] %v6490
    %6507 = vst [vmem:[#allocation14 + $0x28] sm:$0xff] %v6491
    %6508 = vst [vmem:[#allocation14 + $0x30] sm:$0xff] %v6492
    %6509 = vst [vmem:[#allocation14 + $0x38] sm:$0xff] %v6493
    %6510 = vst [vmem:[#allocation14 + $0x40] sm:$0xff] %v6494
    %6511 = vst [vmem:[#allocation14 + $0x48] sm:$0xff] %v6495
    %6512 = vst [vmem:[#allocation14 + $0x50] sm:$0xff] %v6496
    %6513 = vst [vmem:[#allocation14 + $0x58] sm:$0xff] %v6497
    %6514 = vst [vmem:[#allocation14 + $0x60] sm:$0xff] %v6498
    %6515 = vst [vmem:[#allocation14 + $0x68] sm:$0xff] %v6499
    %6516 = vst [vmem:[#allocation14 + $0x70] sm:$0xff] %v6500
    %6517 = vst [vmem:[#allocation14 + $0x78] sm:$0xff] %v6501
    // Predicated region
    $region66: #{transformer_block_forward.1} parent=1 // pred_check
      _
    $region67: #{transformer_block_forward.1} parent=1 // pred_check_branch
      %6519 = sbr.rel (0) target = $region69
    $region68: #{transformer_block_forward.1} parent=1 // pred_region
      %6521 = vsyncadd [#allocation4], 0
      %s6522 = sshll.u32 [#allocation14], 4
      %s6523 = int_to_ptr.vmem [resolvable:$true] %s6522
      %s6524 = sshll.u32 %s9, 4
      %s6525 = int_to_ptr.hbm [resolvable:$true] %s6524
      %6530 = dma.vmem_to_hbm [thread:$0]  %s6523, 2048, %s6525, [#allocation4], 128, 128, 8
    $region69: #{transformer_block_forward.1} parent=1 // pred_fallthru
      _
    // Predicated region
    $region70: #{transformer_block_forward.1} parent=1 // pred_check
      _
    $region71: #{transformer_block_forward.1} parent=1 // pred_check_branch
      %6532 = sbr.rel (0) target = $region73
    $region72: #{transformer_block_forward.1} parent=1 // pred_region
      %6534 = dma.done [#allocation4], 2048
    $region73: #{transformer_block_forward.1} parent=1 // pred_fallthru
      _
    %6535 = vsyncpa [#allocation3], 1
    %6536 = vsyncpa [#allocation6], 1
    %6537 = vsyncpa [#allocation9], 1
    %6538 = vsyncpa [#allocation12], 1
    %6539 = vsyncpa [#allocation4], 1

</llo_original>
